<compile_context>
chip_gen: v7x
topology: tpu7x:2x2x1
jax: 0.10.0
libtpu: 0.0.40
codegen_flags: <defaults>
</compile_context>

<pallas_src>
from functools import partial
from math import sqrt

import jax
import jax.numpy as jnp
from jax.experimental import pallas as pl
from jax.experimental.pallas import tpu as pltpu


# ----------------------------------------------------------------------------
# Pallas kernel: fused transformer encoder layer (+ optional fused mean pool).
# One grid step processes `rows_per_step` flattened (batch*step) sequences of
# T tokens x E features entirely in VMEM.
# ----------------------------------------------------------------------------
def _encoder_layer_kernel(x_ref, mask_ref, mask_t_ref,
                          wqkv_ref, bqkv_ref, wo_ref, bo_ref,
                          w1_ref, b1_ref, w2_ref, b2_ref,
                          g1_ref, be1_ref, g2_ref, be2_ref,
                          out_ref, *, num_heads, pool):
    R, T, E = x_ref.shape
    H = num_heads
    hd = E // H
    M = R * T

    xb = x_ref[...].astype(jnp.bfloat16).reshape(M, E)   # bf16 MXU operand
    x2 = xb.astype(jnp.float32)                          # f32 residual stream

    # --- fused QKV projection: one (M,E)@(E,3E) matmul, full MXU output width.
    #     1/sqrt(hd) is pre-folded into the Q columns of wqkv / bqkv. ---
    qkv = jnp.dot(xb, wqkv_ref[...],
                  preferred_element_type=jnp.float32) + bqkv_ref[...]   # (M, 3E) f32

    # split to head-major (H*R, T, hd) once: static lane slices + leading-axis
    # stack (pure layout, no extra matmuls, no H-fold activation broadcast).
    def split_heads(off):
        parts = [qkv[:, off + h * hd: off + (h + 1) * hd] for h in range(H)]
        return jnp.stack(parts, axis=0).reshape(H * R, T, hd).astype(jnp.bfloat16)

    q = split_heads(0)
    k = split_heads(E)
    v = split_heads(2 * E)

    # --- scores + key-padding mask + softmax (f32 math, batched over H*R) ---
    s = jnp.einsum("bqd,bkd->bqk", q, k,
                   preferred_element_type=jnp.float32)                  # (H*R, T, T)
    bias = jnp.where(mask_ref[...] > 0.0, 0.0, -1e9)                    # (R, 1, T)
    s = (s.reshape(H, R, T, T) + bias[None]).reshape(H * R, T, T)
    s = s - jnp.max(s, axis=-1, keepdims=True)
    p = jnp.exp(s)
    p = p * pl.reciprocal(jnp.sum(p, axis=-1, keepdims=True), approx=True)

    o = jnp.einsum("bqk,bkd->bqd", p.astype(jnp.bfloat16), v,
                   preferred_element_type=jnp.float32)                  # (H*R, T, hd)

    # --- output projection: per-head (M,hd)@(hd,E) accumulated into one (M,E)
    #     f32 buffer (no (H,M,E) f32 intermediate, no post-hoc H-way sum). ---
    o3 = o.reshape(H, M, hd)
    attn = jnp.zeros((M, E), jnp.float32)
    for h in range(H):
        attn = attn + jnp.dot(o3[h].astype(jnp.bfloat16), wo_ref[h],
                              preferred_element_type=jnp.float32)
    attn = attn + bo_ref[...]

    # --- residual + LayerNorm1 (f32 elementwise) ---
    h1 = x2 + attn
    mu = jnp.mean(h1, axis=-1, keepdims=True)
    var = jnp.mean(jnp.square(h1 - mu), axis=-1, keepdims=True)
    h1n = (h1 - mu) * jax.lax.rsqrt(var + 1e-5) * g1_ref[...] + be1_ref[...]

    # --- feed forward: Linear -> GELU(exact erf) -> Linear, tiled over F so the
    #     f32 intermediate is only (M, chunk) instead of (M, F). ---
    F = w1_ref.shape[1]
    chunk = 1024 if (F % 1024 == 0) else F               # lane-dense chunks
    h1b = h1n.astype(jnp.bfloat16)
    f = jnp.zeros((M, E), jnp.float32)
    for c0 in range(0, F, chunk):
        fc = jnp.dot(h1b, w1_ref[:, c0:c0 + chunk],
                     preferred_element_type=jnp.float32) + b1_ref[:, c0:c0 + chunk]
        fc = 0.5 * fc * (1.0 + jax.lax.erf(fc * (1.0 / sqrt(2.0))))
        f = f + jnp.dot(fc.astype(jnp.bfloat16), w2_ref[c0:c0 + chunk, :],
                        preferred_element_type=jnp.float32)
    f = f + b2_ref[...]

    # --- residual + LayerNorm2 ---
    h2 = h1n + f
    mu2 = jnp.mean(h2, axis=-1, keepdims=True)
    var2 = jnp.mean(jnp.square(h2 - mu2), axis=-1, keepdims=True)
    h2n = (h2 - mu2) * jax.lax.rsqrt(var2 + 1e-5) * g2_ref[...] + be2_ref[...]

    if pool:
        # fused masked mean pooling: sum(x*mask,1) / clamp(sum(mask,1), 1e-9).
        # The full (BS,T,E) final activation never goes back to HBM.
        h3 = h2n.reshape(R, T, E)
        mt = mask_t_ref[...]                                       # (R, T, 1)
        tot = jnp.sum(h3 * mt, axis=1, keepdims=True)              # (R, 1, E)
        cnt = jnp.maximum(jnp.sum(mt, axis=1, keepdims=True), 1e-9)
        out_ref[...] = (tot / cnt).astype(out_ref.dtype)           # (R, 1, E) f32
    else:
        out_ref[...] = h2n.reshape(R, T, E).astype(out_ref.dtype)  # bf16 carry


# ----------------------------------------------------------------------------
# Wrappers
# ----------------------------------------------------------------------------
def _vmem_limit_bytes():
    # Raise the scoped VMEM limit per generation (leave headroom below physical;
    # v7x only has 64 MiB per TensorCore).
    try:
        cap = int(pltpu.get_tpu_info().vmem_capacity_bytes)
    except Exception:
        cap = 64 << 20
    return int(max(32 << 20, min(100 << 20, cap - (8 << 20))))


def _weight_spec(arr, single_buffer):
    zeros = (0,) * arr.ndim
    if single_buffer:
        # constant index_map + single buffer: one resident VMEM copy, no 2x
        # double-buffer allocation of the per-layer weights.
        return pl.BlockSpec(arr.shape, lambda b: zeros, pipeline_mode=pl.Buffered(1))
    return pl.BlockSpec(arr.shape, lambda b: zeros)


def encoder_layer(x, mask_row, mask_tok, lp, *, num_heads, rows_per_step, pool,
                  vmem_limit):
    """x: (BS, T, E) bf16; mask_row: (BS, 1, T) f32; mask_tok: (BS, T, 1) f32."""
    BS, T, E = x.shape
    assert BS % rows_per_step == 0
    R = rows_per_step
    weights = (lp["wqkv"], lp["bqkv"], lp["wo"], lp["bo"], lp["w1"], lp["b1"],
               lp["w2"], lp["b2"], lp["g1"], lp["be1"], lp["g2"], lp["be2"])

    if pool:
        out_shape = jax.ShapeDtypeStruct((BS, 1, E), jnp.float32)
        out_spec = pl.BlockSpec((R, 1, E), lambda b: (b, 0, 0))
    else:
        out_shape = jax.ShapeDtypeStruct((BS, T, E), jnp.bfloat16)  # bf16 carry
        out_spec = pl.BlockSpec((R, T, E), lambda b: (b, 0, 0))

    def call(single_buffer_weights):
        in_specs = ([pl.BlockSpec((R, T, E), lambda b: (b, 0, 0)),
                     pl.BlockSpec((R, 1, T), lambda b: (b, 0, 0)),
                     pl.BlockSpec((R, T, 1), lambda b: (b, 0, 0))]
                    + [_weight_spec(w, single_buffer_weights) for w in weights])
        return pl.pallas_call(
            partial(_encoder_layer_kernel, num_heads=num_heads, pool=pool),
            out_shape=out_shape,
            grid=(BS // R,),
            in_specs=in_specs,
            out_specs=out_spec,
            compiler_params=pltpu.CompilerParams(
                dimension_semantics=("parallel",),
                vmem_limit_bytes=vmem_limit),
        )(x, mask_row, mask_tok, *weights)

    try:
        return call(True)
    except Exception:
        # TODO(synk): pl.Buffered(1) single-buffering rejected by this jax/Mosaic
        # version; fall back to default double-buffered weight blocks.
        return call(False)


def _layer_norm(x, g, b, eps=1e-5):
    mu = jnp.mean(x, axis=-1, keepdims=True)
    var = jnp.mean(jnp.square(x - mu), axis=-1, keepdims=True)
    return (x - mu) * jax.lax.rsqrt(var + eps) * g + b


def _embed(ids, params):
    # TODO(synk): pretrained mpnet tokenizer / word+position embeddings replaced by
    #             random stand-ins; the gather stays in plain JAX (cheap, not a kernel).
    T = ids.shape[-1]
    x = jnp.take(params["tok_emb"], ids, axis=0) + params["pos_emb"][None, :T, :]
    return _layer_norm(x, params["emb_g"], params["emb_b"])


def sbert_embedder_forward(input_ids, attention_mask, params, *, rows_per_step=2):
    B, S, T = input_ids.shape
    # Rearrange('batch step token -> (batch step) token')
    ids = input_ids.reshape(B * S, T)
    mask = attention_mask.reshape(B * S, T).astype(jnp.float32)
    mask_row = mask[:, None, :]                     # (BS, 1, T): key-padding bias, T lane-dense
    mask_tok = mask[:, :, None]                     # (BS, T, 1): pooling weights

    x = _embed(ids, params).astype(jnp.bfloat16)    # bf16 inter-layer activations
    vmem_limit = _vmem_limit_bytes()
    layers = params["layers"]
    assert len(layers) >= 1
    for i, lp in enumerate(layers):
        x = encoder_layer(x, mask_row, mask_tok, lp,
                          num_heads=params["num_heads"],
                          rows_per_step=rows_per_step,
                          pool=(i == len(layers) - 1),
                          vmem_limit=vmem_limit)
    pooled = x[:, 0, :].astype(jnp.float32)         # (BS, E)  (last layer emits pooled)
    # rearrange '(batch step) feature -> batch step feature'
    return pooled.reshape(B, S, -1)


# ----------------------------------------------------------------------------
# Pure-JAX reference (same math / same bf16-operand precision decisions)
# ----------------------------------------------------------------------------
def _ref_encoder_layer(x, mask, lp, num_heads, pool):
    BS, T, E = x.shape
    H = num_heads
    hd = E // H
    M = BS * T
    bf16 = jnp.bfloat16

    xb = x.reshape(M, E).astype(bf16)
    x2 = xb.astype(jnp.float32)
    qkv = jnp.dot(xb, lp["wqkv"], preferred_element_type=jnp.float32) + lp["bqkv"]

    def split(off):
        parts = [qkv[:, off + h * hd: off + (h + 1) * hd] for h in range(H)]
        return jnp.stack(parts, axis=0).reshape(H * BS, T, hd).astype(bf16)

    q, k, v = split(0), split(E), split(2 * E)
    s = jnp.einsum("bqd,bkd->bqk", q, k, preferred_element_type=jnp.float32)
    bias = jnp.where(mask > 0.0, 0.0, -1e9)[:, None, :]
    s = (s.reshape(H, BS, T, T) + bias[None]).reshape(H * BS, T, T)
    p = jax.nn.softmax(s, axis=-1)
    o = jnp.einsum("bqk,bkd->bqd", p.astype(bf16), v,
                   preferred_element_type=jnp.float32)
    o3 = o.reshape(H, M, hd)
    attn = jnp.einsum("hmd,hde->me", o3.astype(bf16), lp["wo"],
                      preferred_element_type=jnp.float32) + lp["bo"]

    h1 = _layer_norm(x2 + attn, lp["g1"], lp["be1"])
    f = jnp.dot(h1.astype(bf16), lp["w1"], preferred_element_type=jnp.float32) + lp["b1"]
    f = 0.5 * f * (1.0 + jax.lax.erf(f * (1.0 / sqrt(2.0))))
    f = jnp.dot(f.astype(bf16), lp["w2"], preferred_element_type=jnp.float32) + lp["b2"]
    h2 = _layer_norm(h1 + f, lp["g2"], lp["be2"]).reshape(BS, T, E)

    if pool:
        mt = mask[:, :, None]
        return jnp.sum(h2 * mt, axis=1) / jnp.maximum(jnp.sum(mt, axis=1), 1e-9)
    return h2.astype(bf16)


def ref_forward(input_ids, attention_mask, params):
    B, S, T = input_ids.shape
    ids = input_ids.reshape(B * S, T)
    mask = attention_mask.reshape(B * S, T).astype(jnp.float32)
    x = _embed(ids, params).astype(jnp.bfloat16)
    layers = params["layers"]
    for i, lp in enumerate(layers):
        x = _ref_encoder_layer(x, mask, lp, params["num_heads"],
                               pool=(i == len(layers) - 1))
    return x.reshape(B, S, -1)


# ----------------------------------------------------------------------------
# Deterministic stand-in parameters.  Fused / pre-scaled MXU layouts (wqkv with
# the 1/sqrt(hd) folded into the Q block, per-head wo, bf16 matmul weights) are
# prepared once here — not in the per-call path.
# ----------------------------------------------------------------------------
def make_params(key, *, vocab, max_tokens, feature, ffn_dim, num_heads, num_layers):
    hd = feature // num_heads
    scale = 1.0 / sqrt(hd)
    counter = [0]

    def nrm(shape, std=1.0):
        counter[0] += 1
        return std * jax.random.normal(jax.random.fold_in(key, counter[0]),
                                       shape, jnp.float32)

    def xavier(fan_in, fan_out, shape):
        return nrm(shape, sqrt(2.0 / (fan_in + fan_out)))

    layers = []
    for _ in range(num_layers):
        wq = xavier(feature, feature, (feature, feature)) * scale   # score scale folded in
        wk = xavier(feature, feature, (feature, feature))
        wv = xavier(feature, feature, (feature, feature))
        bq = nrm((feature,), 0.1) * scale
        bk = nrm((feature,), 0.1)
        bv = nrm((feature,), 0.1)
        layers.append({
            "wqkv": jnp.concatenate([wq, wk, wv], axis=1).astype(jnp.bfloat16),  # (E, 3E)
            "bqkv": jnp.concatenate([bq, bk, bv])[None, :],                       # (1, 3E)
            "wo": xavier(feature, feature, (num_heads, hd, feature)).astype(jnp.bfloat16),
            "bo": nrm((1, feature), 0.1),
            "w1": xavier(feature, ffn_dim, (feature, ffn_dim)).astype(jnp.bfloat16),
            "b1": nrm((1, ffn_dim), 0.1),
            "w2": xavier(ffn_dim, feature, (ffn_dim, feature)).astype(jnp.bfloat16),
            "b2": nrm((1, feature), 0.1),
            "g1": 1.0 + nrm((1, feature), 0.1),
            "be1": nrm((1, feature), 0.1),
            "g2": 1.0 + nrm((1, feature), 0.1),
            "be2": nrm((1, feature), 0.1),
        })
    return {
        "tok_emb": nrm((vocab, feature), 0.5),
        "pos_emb": nrm((max_tokens, feature), 0.5),
        "emb_g": jnp.ones((feature,), jnp.float32),
        "emb_b": jnp.zeros((feature,), jnp.float32),
        "num_heads": num_heads,
        "layers": layers,
    }


if __name__ == "__main__":
    B, S, T = 2, 2, 8                       # batch, recipe steps, tokens per step
    FEATURE, FFN_DIM, HEADS, LAYERS = 128, 256, 4, 2   # lane-dense feature dim
    VOCAB = 97
    ROWS_PER_STEP = 2                       # (B*S)=4 rows -> grid of 2 (both v7x TCs busy)

    key = jax.random.PRNGKey(0)
    k_ids, k_p = jax.random.split(key)
    input_ids = jax.random.randint(k_ids, (B, S, T), 0, VOCAB, dtype=jnp.int32)
    lengths = jnp.array([[8, 5], [3, 8]], dtype=jnp.int32)   # ragged token counts
    attention_mask = (jnp.arange(T)[None, None, :] < lengths[:, :, None]).astype(jnp.int32)

    params = make_params(k_p, vocab=VOCAB, max_tokens=T, feature=FEATURE,
                         ffn_dim=FFN_DIM, num_heads=HEADS, num_layers=LAYERS)

    out = sbert_embedder_forward(input_ids, attention_mask, params,
                                 rows_per_step=ROWS_PER_STEP)
    out = jax.block_until_ready(out)

    ref = ref_forward(input_ids, attention_mask, params)
    assert out.shape == (B, S, FEATURE)
    err = float(jnp.max(jnp.abs(out - ref)))
    assert err < 3e-2, f"mismatch vs reference: max abs err = {err}"
    print("KERNEL_OK")
</pallas_src>

<mosaic_0001>
module attributes {stable_mosaic.version = 11 : i64} {
  func.func @_encoder_layer_kernel(%arg0: i32, %arg1: memref<2x8x128xbf16, #tpu.memory_space<vmem>>, %arg2: memref<2x1x8xf32, #tpu.memory_space<vmem>>, %arg3: memref<2x8x1xf32, #tpu.memory_space<vmem>>, %arg4: memref<128x384xbf16, #tpu.memory_space<vmem>>, %arg5: memref<1x384xf32, #tpu.memory_space<vmem>>, %arg6: memref<4x32x128xbf16, #tpu.memory_space<vmem>>, %arg7: memref<1x128xf32, #tpu.memory_space<vmem>>, %arg8: memref<128x256xbf16, #tpu.memory_space<vmem>>, %arg9: memref<1x256xf32, #tpu.memory_space<vmem>>, %arg10: memref<256x128xbf16, #tpu.memory_space<vmem>>, %arg11: memref<1x128xf32, #tpu.memory_space<vmem>>, %arg12: memref<1x128xf32, #tpu.memory_space<vmem>>, %arg13: memref<1x128xf32, #tpu.memory_space<vmem>>, %arg14: memref<1x128xf32, #tpu.memory_space<vmem>>, %arg15: memref<1x128xf32, #tpu.memory_space<vmem>>, %arg16: memref<2x8x128xbf16, #tpu.memory_space<vmem>>) attributes {dimension_semantics = [#tpu.dimension_semantics<parallel>], iteration_bounds = array<i64: 2>, scalar_prefetch = 0 : i64, scratch_operands = 0 : i64, tpu.core_type = #tpu.core_type<tc>, window_params = [{transform_indices = @transform_0, window_bounds = array<i64: 2, 8, 128>}, {transform_indices = @transform_1, window_bounds = array<i64: 2, 1, 8>}, {transform_indices = @transform_2, window_bounds = array<i64: 2, 8, 1>}, {pipeline_mode = #tpu.pipeline_mode<synchronous>, transform_indices = @transform_3, window_bounds = array<i64: 128, 384>}, {pipeline_mode = #tpu.pipeline_mode<synchronous>, transform_indices = @transform_4, window_bounds = array<i64: 1, 384>}, {pipeline_mode = #tpu.pipeline_mode<synchronous>, transform_indices = @transform_5, window_bounds = array<i64: 4, 32, 128>}, {pipeline_mode = #tpu.pipeline_mode<synchronous>, transform_indices = @transform_6, window_bounds = array<i64: 1, 128>}, {pipeline_mode = #tpu.pipeline_mode<synchronous>, transform_indices = @transform_7, window_bounds = array<i64: 128, 256>}, {pipeline_mode = #tpu.pipeline_mode<synchronous>, transform_indices = @transform_8, window_bounds = array<i64: 1, 256>}, {pipeline_mode = #tpu.pipeline_mode<synchronous>, transform_indices = @transform_9, window_bounds = array<i64: 256, 128>}, {pipeline_mode = #tpu.pipeline_mode<synchronous>, transform_indices = @transform_10, window_bounds = array<i64: 1, 128>}, {pipeline_mode = #tpu.pipeline_mode<synchronous>, transform_indices = @transform_11, window_bounds = array<i64: 1, 128>}, {pipeline_mode = #tpu.pipeline_mode<synchronous>, transform_indices = @transform_12, window_bounds = array<i64: 1, 128>}, {pipeline_mode = #tpu.pipeline_mode<synchronous>, transform_indices = @transform_13, window_bounds = array<i64: 1, 128>}, {pipeline_mode = #tpu.pipeline_mode<synchronous>, transform_indices = @transform_14, window_bounds = array<i64: 1, 128>}, {transform_indices = @transform_15, window_bounds = array<i64: 2, 8, 128>}]} {
    %c0 = arith.constant 0 : index
    %c0_0 = arith.constant 0 : index
    %c0_1 = arith.constant 0 : index
    %0 = vector.load %arg1[%c0, %c0_0, %c0_1] : memref<2x8x128xbf16, #tpu.memory_space<vmem>>, vector<2x8x128xbf16>
    %1 = vector.shape_cast %0 : vector<2x8x128xbf16> to vector<16x128xbf16>
    %2 = arith.extf %1 : vector<16x128xbf16> to vector<16x128xf32>
    %c0_2 = arith.constant 0 : index
    %c0_3 = arith.constant 0 : index
    %3 = vector.load %arg4[%c0_2, %c0_3] : memref<128x384xbf16, #tpu.memory_space<vmem>>, vector<128x384xbf16>
    %cst = arith.constant dense<0.000000e+00> : vector<16x384xf32>
    %4 = tpu.matmul %1, %3, %cst {dimension_numbers = #tpu.dot_dimension_numbers<[1], [0], [0], [1], [0, 0, 1, 1], [], []>} : vector<16x128xbf16>, vector<128x384xbf16>, vector<16x384xf32> -> vector<16x384xf32>
    %c0_4 = arith.constant 0 : index
    %c0_5 = arith.constant 0 : index
    %5 = vector.load %arg5[%c0_4, %c0_5] : memref<1x384xf32, #tpu.memory_space<vmem>>, vector<1x384xf32>
    %6 = vector.broadcast %5 : vector<1x384xf32> to vector<16x384xf32>
    %7 = arith.addf %4, %6 : vector<16x384xf32>
    %8 = vector.extract_strided_slice %7 {offsets = [0, 0], sizes = [16, 32], strides = [1, 1]} : vector<16x384xf32> to vector<16x32xf32>
    %9 = vector.extract_strided_slice %7 {offsets = [0, 32], sizes = [16, 32], strides = [1, 1]} : vector<16x384xf32> to vector<16x32xf32>
    %10 = vector.extract_strided_slice %7 {offsets = [0, 64], sizes = [16, 32], strides = [1, 1]} : vector<16x384xf32> to vector<16x32xf32>
    %11 = vector.extract_strided_slice %7 {offsets = [0, 96], sizes = [16, 32], strides = [1, 1]} : vector<16x384xf32> to vector<16x32xf32>
    %12 = vector.shape_cast %8 : vector<16x32xf32> to vector<1x16x32xf32>
    %13 = vector.shape_cast %9 : vector<16x32xf32> to vector<1x16x32xf32>
    %14 = vector.shape_cast %10 : vector<16x32xf32> to vector<1x16x32xf32>
    %15 = vector.shape_cast %11 : vector<16x32xf32> to vector<1x16x32xf32>
    %16 = tpu.concatenate %12, %13, %14, %15 in 0 : vector<1x16x32xf32>, vector<1x16x32xf32>, vector<1x16x32xf32>, vector<1x16x32xf32> -> vector<4x16x32xf32>
    %17 = vector.shape_cast %16 : vector<4x16x32xf32> to vector<8x8x32xf32>
    %18 = arith.truncf %17 : vector<8x8x32xf32> to vector<8x8x32xbf16>
    %19 = vector.extract_strided_slice %7 {offsets = [0, 128], sizes = [16, 32], strides = [1, 1]} : vector<16x384xf32> to vector<16x32xf32>
    %20 = vector.extract_strided_slice %7 {offsets = [0, 160], sizes = [16, 32], strides = [1, 1]} : vector<16x384xf32> to vector<16x32xf32>
    %21 = vector.extract_strided_slice %7 {offsets = [0, 192], sizes = [16, 32], strides = [1, 1]} : vector<16x384xf32> to vector<16x32xf32>
    %22 = vector.extract_strided_slice %7 {offsets = [0, 224], sizes = [16, 32], strides = [1, 1]} : vector<16x384xf32> to vector<16x32xf32>
    %23 = vector.shape_cast %19 : vector<16x32xf32> to vector<1x16x32xf32>
    %24 = vector.shape_cast %20 : vector<16x32xf32> to vector<1x16x32xf32>
    %25 = vector.shape_cast %21 : vector<16x32xf32> to vector<1x16x32xf32>
    %26 = vector.shape_cast %22 : vector<16x32xf32> to vector<1x16x32xf32>
    %27 = tpu.concatenate %23, %24, %25, %26 in 0 : vector<1x16x32xf32>, vector<1x16x32xf32>, vector<1x16x32xf32>, vector<1x16x32xf32> -> vector<4x16x32xf32>
    %28 = vector.shape_cast %27 : vector<4x16x32xf32> to vector<8x8x32xf32>
    %29 = arith.truncf %28 : vector<8x8x32xf32> to vector<8x8x32xbf16>
    %30 = vector.extract_strided_slice %7 {offsets = [0, 256], sizes = [16, 32], strides = [1, 1]} : vector<16x384xf32> to vector<16x32xf32>
    %31 = vector.extract_strided_slice %7 {offsets = [0, 288], sizes = [16, 32], strides = [1, 1]} : vector<16x384xf32> to vector<16x32xf32>
    %32 = vector.extract_strided_slice %7 {offsets = [0, 320], sizes = [16, 32], strides = [1, 1]} : vector<16x384xf32> to vector<16x32xf32>
    %33 = vector.extract_strided_slice %7 {offsets = [0, 352], sizes = [16, 32], strides = [1, 1]} : vector<16x384xf32> to vector<16x32xf32>
    %34 = vector.shape_cast %30 : vector<16x32xf32> to vector<1x16x32xf32>
    %35 = vector.shape_cast %31 : vector<16x32xf32> to vector<1x16x32xf32>
    %36 = vector.shape_cast %32 : vector<16x32xf32> to vector<1x16x32xf32>
    %37 = vector.shape_cast %33 : vector<16x32xf32> to vector<1x16x32xf32>
    %38 = tpu.concatenate %34, %35, %36, %37 in 0 : vector<1x16x32xf32>, vector<1x16x32xf32>, vector<1x16x32xf32>, vector<1x16x32xf32> -> vector<4x16x32xf32>
    %39 = vector.shape_cast %38 : vector<4x16x32xf32> to vector<8x8x32xf32>
    %40 = arith.truncf %39 : vector<8x8x32xf32> to vector<8x8x32xbf16>
    "tpu.trace_start"() <{level = 10 : i32, message = "bqd,bkd->bqk"}> : () -> ()
    %cst_6 = arith.constant dense<0.000000e+00> : vector<8x8x8xf32>
    %41 = tpu.matmul %18, %29, %cst_6 {dimension_numbers = #tpu.dot_dimension_numbers<[2], [2], [1], [1], [0, 0, 0, 1, 1, 1], [0], [0]>} : vector<8x8x32xbf16>, vector<8x8x32xbf16>, vector<8x8x8xf32> -> vector<8x8x8xf32>
    "tpu.trace_stop"() : () -> ()
    %c0_7 = arith.constant 0 : index
    %c0_8 = arith.constant 0 : index
    %c0_9 = arith.constant 0 : index
    %42 = vector.load %arg2[%c0_7, %c0_8, %c0_9] : memref<2x1x8xf32, #tpu.memory_space<vmem>>, vector<2x1x8xf32>
    %cst_10 = arith.constant 0.000000e+00 : f32
    %43 = vector.broadcast %cst_10 : f32 to vector<2x1x8xf32>
    %44 = arith.cmpf ogt, %42, %43 : vector<2x1x8xf32>
    %cst_11 = arith.constant 0.000000e+00 : f32
    %cst_12 = arith.constant -1.000000e+09 : f32
    %45 = vector.broadcast %cst_11 : f32 to vector<2x1x8xf32>
    %46 = vector.broadcast %cst_12 : f32 to vector<2x1x8xf32>
    %47 = arith.select %44, %45, %46 : vector<2x1x8xi1>, vector<2x1x8xf32>
    %48 = vector.shape_cast %41 : vector<8x8x8xf32> to vector<4x2x8x8xf32>
    %49 = vector.shape_cast %47 : vector<2x1x8xf32> to vector<1x2x1x8xf32>
    %50 = vector.broadcast %49 : vector<1x2x1x8xf32> to vector<4x2x8x8xf32>
    %51 = arith.addf %48, %50 : vector<4x2x8x8xf32>
    %52 = vector.shape_cast %51 : vector<4x2x8x8xf32> to vector<8x8x8xf32>
    %cst_13 = arith.constant dense<0xFF800000> : vector<8x8xf32>
    %53 = vector.multi_reduction <maximumf>, %52, %cst_13 [2] : vector<8x8x8xf32> to vector<8x8xf32>
    %54 = vector.shape_cast %53 : vector<8x8xf32> to vector<8x8x1xf32>
    %55 = vector.broadcast %54 : vector<8x8x1xf32> to vector<8x8x8xf32>
    %56 = arith.subf %52, %55 : vector<8x8x8xf32>
    %57 = math.exp %56 : vector<8x8x8xf32>
    %cst_14 = arith.constant dense<0.000000e+00> : vector<8x8xf32>
    %58 = vector.multi_reduction <add>, %57, %cst_14 [2] : vector<8x8x8xf32> to vector<8x8xf32>
    %59 = vector.shape_cast %58 : vector<8x8xf32> to vector<8x8x1xf32>
    %60 = tpu.reciprocal %59 {approx = true} : vector<8x8x1xf32> -> vector<8x8x1xf32>
    %61 = vector.broadcast %60 : vector<8x8x1xf32> to vector<8x8x8xf32>
    %62 = arith.mulf %57, %61 : vector<8x8x8xf32>
    %63 = arith.truncf %62 : vector<8x8x8xf32> to vector<8x8x8xbf16>
    "tpu.trace_start"() <{level = 10 : i32, message = "bqk,bkd->bqd"}> : () -> ()
    %cst_15 = arith.constant dense<0.000000e+00> : vector<8x8x32xf32>
    %64 = tpu.matmul %63, %40, %cst_15 {dimension_numbers = #tpu.dot_dimension_numbers<[2], [1], [1], [2], [0, 0, 0, 1, 1, 2], [0], [0]>} : vector<8x8x8xbf16>, vector<8x8x32xbf16>, vector<8x8x32xf32> -> vector<8x8x32xf32>
    "tpu.trace_stop"() : () -> ()
    %65 = vector.shape_cast %64 : vector<8x8x32xf32> to vector<4x16x32xf32>
    %cst_16 = arith.constant 0.000000e+00 : f32
    %66 = vector.broadcast %cst_16 : f32 to vector<16x128xf32>
    %67 = vector.extract_strided_slice %65 {offsets = [0, 0, 0], sizes = [1, 16, 32], strides = [1, 1, 1]} : vector<4x16x32xf32> to vector<1x16x32xf32>
    %68 = vector.shape_cast %67 : vector<1x16x32xf32> to vector<16x32xf32>
    %69 = arith.truncf %68 : vector<16x32xf32> to vector<16x32xbf16>
    %c0_17 = arith.constant 0 : index
    %c0_18 = arith.constant 0 : index
    %c0_19 = arith.constant 0 : index
    %70 = vector.load %arg6[%c0_17, %c0_18, %c0_19] : memref<4x32x128xbf16, #tpu.memory_space<vmem>>, vector<1x32x128xbf16>
    %71 = vector.shape_cast %70 : vector<1x32x128xbf16> to vector<32x128xbf16>
    %cst_20 = arith.constant dense<0.000000e+00> : vector<16x128xf32>
    %72 = tpu.matmul %69, %71, %cst_20 {dimension_numbers = #tpu.dot_dimension_numbers<[1], [0], [0], [1], [0, 0, 1, 1], [], []>} : vector<16x32xbf16>, vector<32x128xbf16>, vector<16x128xf32> -> vector<16x128xf32>
    %73 = arith.addf %66, %72 : vector<16x128xf32>
    %74 = vector.extract_strided_slice %65 {offsets = [1, 0, 0], sizes = [1, 16, 32], strides = [1, 1, 1]} : vector<4x16x32xf32> to vector<1x16x32xf32>
    %75 = vector.shape_cast %74 : vector<1x16x32xf32> to vector<16x32xf32>
    %76 = arith.truncf %75 : vector<16x32xf32> to vector<16x32xbf16>
    %c1 = arith.constant 1 : index
    %c0_21 = arith.constant 0 : index
    %c0_22 = arith.constant 0 : index
    %77 = vector.load %arg6[%c1, %c0_21, %c0_22] : memref<4x32x128xbf16, #tpu.memory_space<vmem>>, vector<1x32x128xbf16>
    %78 = vector.shape_cast %77 : vector<1x32x128xbf16> to vector<32x128xbf16>
    %cst_23 = arith.constant dense<0.000000e+00> : vector<16x128xf32>
    %79 = tpu.matmul %76, %78, %cst_23 {dimension_numbers = #tpu.dot_dimension_numbers<[1], [0], [0], [1], [0, 0, 1, 1], [], []>} : vector<16x32xbf16>, vector<32x128xbf16>, vector<16x128xf32> -> vector<16x128xf32>
    %80 = arith.addf %73, %79 : vector<16x128xf32>
    %81 = vector.extract_strided_slice %65 {offsets = [2, 0, 0], sizes = [1, 16, 32], strides = [1, 1, 1]} : vector<4x16x32xf32> to vector<1x16x32xf32>
    %82 = vector.shape_cast %81 : vector<1x16x32xf32> to vector<16x32xf32>
    %83 = arith.truncf %82 : vector<16x32xf32> to vector<16x32xbf16>
    %c2 = arith.constant 2 : index
    %c0_24 = arith.constant 0 : index
    %c0_25 = arith.constant 0 : index
    %84 = vector.load %arg6[%c2, %c0_24, %c0_25] : memref<4x32x128xbf16, #tpu.memory_space<vmem>>, vector<1x32x128xbf16>
    %85 = vector.shape_cast %84 : vector<1x32x128xbf16> to vector<32x128xbf16>
    %cst_26 = arith.constant dense<0.000000e+00> : vector<16x128xf32>
    %86 = tpu.matmul %83, %85, %cst_26 {dimension_numbers = #tpu.dot_dimension_numbers<[1], [0], [0], [1], [0, 0, 1, 1], [], []>} : vector<16x32xbf16>, vector<32x128xbf16>, vector<16x128xf32> -> vector<16x128xf32>
    %87 = arith.addf %80, %86 : vector<16x128xf32>
    %88 = vector.extract_strided_slice %65 {offsets = [3, 0, 0], sizes = [1, 16, 32], strides = [1, 1, 1]} : vector<4x16x32xf32> to vector<1x16x32xf32>
    %89 = vector.shape_cast %88 : vector<1x16x32xf32> to vector<16x32xf32>
    %90 = arith.truncf %89 : vector<16x32xf32> to vector<16x32xbf16>
    %c3 = arith.constant 3 : index
    %c0_27 = arith.constant 0 : index
    %c0_28 = arith.constant 0 : index
    %91 = vector.load %arg6[%c3, %c0_27, %c0_28] : memref<4x32x128xbf16, #tpu.memory_space<vmem>>, vector<1x32x128xbf16>
    %92 = vector.shape_cast %91 : vector<1x32x128xbf16> to vector<32x128xbf16>
    %cst_29 = arith.constant dense<0.000000e+00> : vector<16x128xf32>
    %93 = tpu.matmul %90, %92, %cst_29 {dimension_numbers = #tpu.dot_dimension_numbers<[1], [0], [0], [1], [0, 0, 1, 1], [], []>} : vector<16x32xbf16>, vector<32x128xbf16>, vector<16x128xf32> -> vector<16x128xf32>
    %94 = arith.addf %87, %93 : vector<16x128xf32>
    %c0_30 = arith.constant 0 : index
    %c0_31 = arith.constant 0 : index
    %95 = vector.load %arg7[%c0_30, %c0_31] : memref<1x128xf32, #tpu.memory_space<vmem>>, vector<1x128xf32>
    %96 = vector.broadcast %95 : vector<1x128xf32> to vector<16x128xf32>
    %97 = arith.addf %94, %96 : vector<16x128xf32>
    %98 = arith.addf %2, %97 : vector<16x128xf32>
    %cst_32 = arith.constant dense<0.000000e+00> : vector<16xf32>
    %99 = vector.multi_reduction <add>, %98, %cst_32 [1] : vector<16x128xf32> to vector<16xf32>
    %100 = vector.shape_cast %99 : vector<16xf32> to vector<16x1xf32>
    %cst_33 = arith.constant 1.280000e+02 : f32
    %101 = vector.broadcast %cst_33 : f32 to vector<16x1xf32>
    %102 = arith.divf %100, %101 : vector<16x1xf32>
    %103 = vector.broadcast %102 : vector<16x1xf32> to vector<16x128xf32>
    %104 = arith.subf %98, %103 : vector<16x128xf32>
    %105 = arith.mulf %104, %104 : vector<16x128xf32>
    %cst_34 = arith.constant dense<0.000000e+00> : vector<16xf32>
    %106 = vector.multi_reduction <add>, %105, %cst_34 [1] : vector<16x128xf32> to vector<16xf32>
    %107 = vector.shape_cast %106 : vector<16xf32> to vector<16x1xf32>
    %cst_35 = arith.constant 1.280000e+02 : f32
    %108 = vector.broadcast %cst_35 : f32 to vector<16x1xf32>
    %109 = arith.divf %107, %108 : vector<16x1xf32>
    %110 = vector.broadcast %102 : vector<16x1xf32> to vector<16x128xf32>
    %111 = arith.subf %98, %110 : vector<16x128xf32>
    %cst_36 = arith.constant 9.99999974E-6 : f32
    %112 = vector.broadcast %cst_36 : f32 to vector<16x1xf32>
    %113 = arith.addf %109, %112 : vector<16x1xf32>
    %114 = math.rsqrt %113 : vector<16x1xf32>
    %115 = vector.broadcast %114 : vector<16x1xf32> to vector<16x128xf32>
    %116 = arith.mulf %111, %115 : vector<16x128xf32>
    %c0_37 = arith.constant 0 : index
    %c0_38 = arith.constant 0 : index
    %117 = vector.load %arg12[%c0_37, %c0_38] : memref<1x128xf32, #tpu.memory_space<vmem>>, vector<1x128xf32>
    %118 = vector.broadcast %117 : vector<1x128xf32> to vector<16x128xf32>
    %119 = arith.mulf %116, %118 : vector<16x128xf32>
    %c0_39 = arith.constant 0 : index
    %c0_40 = arith.constant 0 : index
    %120 = vector.load %arg13[%c0_39, %c0_40] : memref<1x128xf32, #tpu.memory_space<vmem>>, vector<1x128xf32>
    %121 = vector.broadcast %120 : vector<1x128xf32> to vector<16x128xf32>
    %122 = arith.addf %119, %121 : vector<16x128xf32>
    %123 = arith.truncf %122 : vector<16x128xf32> to vector<16x128xbf16>
    %cst_41 = arith.constant 0.000000e+00 : f32
    %124 = vector.broadcast %cst_41 : f32 to vector<16x128xf32>
    %c0_42 = arith.constant 0 : index
    %c0_43 = arith.constant 0 : index
    %125 = vector.load %arg8[%c0_42, %c0_43] : memref<128x256xbf16, #tpu.memory_space<vmem>>, vector<128x256xbf16>
    %cst_44 = arith.constant dense<0.000000e+00> : vector<16x256xf32>
    %126 = tpu.matmul %123, %125, %cst_44 {dimension_numbers = #tpu.dot_dimension_numbers<[1], [0], [0], [1], [0, 0, 1, 1], [], []>} : vector<16x128xbf16>, vector<128x256xbf16>, vector<16x256xf32> -> vector<16x256xf32>
    %c0_45 = arith.constant 0 : index
    %c0_46 = arith.constant 0 : index
    %127 = vector.load %arg9[%c0_45, %c0_46] : memref<1x256xf32, #tpu.memory_space<vmem>>, vector<1x256xf32>
    %128 = vector.broadcast %127 : vector<1x256xf32> to vector<16x256xf32>
    %129 = arith.addf %126, %128 : vector<16x256xf32>
    %cst_47 = arith.constant 5.000000e-01 : f32
    %130 = vector.broadcast %cst_47 : f32 to vector<16x256xf32>
    %131 = arith.mulf %130, %129 : vector<16x256xf32>
    %cst_48 = arith.constant 0.707106769 : f32
    %132 = vector.broadcast %cst_48 : f32 to vector<16x256xf32>
    %133 = arith.mulf %129, %132 : vector<16x256xf32>
    %134 = math.erf %133 : vector<16x256xf32>
    %cst_49 = arith.constant 1.000000e+00 : f32
    %135 = vector.broadcast %cst_49 : f32 to vector<16x256xf32>
    %136 = arith.addf %135, %134 : vector<16x256xf32>
    %137 = arith.mulf %131, %136 : vector<16x256xf32>
    %138 = arith.truncf %137 : vector<16x256xf32> to vector<16x256xbf16>
    %c0_50 = arith.constant 0 : index
    %c0_51 = arith.constant 0 : index
    %139 = vector.load %arg10[%c0_50, %c0_51] : memref<256x128xbf16, #tpu.memory_space<vmem>>, vector<256x128xbf16>
    %cst_52 = arith.constant dense<0.000000e+00> : vector<16x128xf32>
    %140 = tpu.matmul %138, %139, %cst_52 {dimension_numbers = #tpu.dot_dimension_numbers<[1], [0], [0], [1], [0, 0, 1, 1], [], []>} : vector<16x256xbf16>, vector<256x128xbf16>, vector<16x128xf32> -> vector<16x128xf32>
    %141 = arith.addf %124, %140 : vector<16x128xf32>
    %c0_53 = arith.constant 0 : index
    %c0_54 = arith.constant 0 : index
    %142 = vector.load %arg11[%c0_53, %c0_54] : memref<1x128xf32, #tpu.memory_space<vmem>>, vector<1x128xf32>
    %143 = vector.broadcast %142 : vector<1x128xf32> to vector<16x128xf32>
    %144 = arith.addf %141, %143 : vector<16x128xf32>
    %145 = arith.addf %122, %144 : vector<16x128xf32>
    %cst_55 = arith.constant dense<0.000000e+00> : vector<16xf32>
    %146 = vector.multi_reduction <add>, %145, %cst_55 [1] : vector<16x128xf32> to vector<16xf32>
    %147 = vector.shape_cast %146 : vector<16xf32> to vector<16x1xf32>
    %cst_56 = arith.constant 1.280000e+02 : f32
    %148 = vector.broadcast %cst_56 : f32 to vector<16x1xf32>
    %149 = arith.divf %147, %148 : vector<16x1xf32>
    %150 = vector.broadcast %149 : vector<16x1xf32> to vector<16x128xf32>
    %151 = arith.subf %145, %150 : vector<16x128xf32>
    %152 = arith.mulf %151, %151 : vector<16x128xf32>
    %cst_57 = arith.constant dense<0.000000e+00> : vector<16xf32>
    %153 = vector.multi_reduction <add>, %152, %cst_57 [1] : vector<16x128xf32> to vector<16xf32>
    %154 = vector.shape_cast %153 : vector<16xf32> to vector<16x1xf32>
    %cst_58 = arith.constant 1.280000e+02 : f32
    %155 = vector.broadcast %cst_58 : f32 to vector<16x1xf32>
    %156 = arith.divf %154, %155 : vector<16x1xf32>
    %157 = vector.broadcast %149 : vector<16x1xf32> to vector<16x128xf32>
    %158 = arith.subf %145, %157 : vector<16x128xf32>
    %cst_59 = arith.constant 9.99999974E-6 : f32
    %159 = vector.broadcast %cst_59 : f32 to vector<16x1xf32>
    %160 = arith.addf %156, %159 : vector<16x1xf32>
    %161 = math.rsqrt %160 : vector<16x1xf32>
    %162 = vector.broadcast %161 : vector<16x1xf32> to vector<16x128xf32>
    %163 = arith.mulf %158, %162 : vector<16x128xf32>
    %c0_60 = arith.constant 0 : index
    %c0_61 = arith.constant 0 : index
    %164 = vector.load %arg14[%c0_60, %c0_61] : memref<1x128xf32, #tpu.memory_space<vmem>>, vector<1x128xf32>
    %165 = vector.broadcast %164 : vector<1x128xf32> to vector<16x128xf32>
    %166 = arith.mulf %163, %165 : vector<16x128xf32>
    %c0_62 = arith.constant 0 : index
    %c0_63 = arith.constant 0 : index
    %167 = vector.load %arg15[%c0_62, %c0_63] : memref<1x128xf32, #tpu.memory_space<vmem>>, vector<1x128xf32>
    %168 = vector.broadcast %167 : vector<1x128xf32> to vector<16x128xf32>
    %169 = arith.addf %166, %168 : vector<16x128xf32>
    %170 = vector.shape_cast %169 : vector<16x128xf32> to vector<2x8x128xf32>
    %171 = arith.truncf %170 : vector<2x8x128xf32> to vector<2x8x128xbf16>
    %c0_64 = arith.constant 0 : index
    %c0_65 = arith.constant 0 : index
    %c0_66 = arith.constant 0 : index
    %172 = vector.load %arg16[%c0_64, %c0_65, %c0_66] : memref<2x8x128xbf16, #tpu.memory_space<vmem>>, vector<2x8x128xbf16>
    tpu.vector_store %arg16[%c0_64, %c0_65, %c0_66], %171 {strides = array<i32>} : memref<2x8x128xbf16, #tpu.memory_space<vmem>>, vector<2x8x128xbf16>,
    return
  }
  func.func @transform_0(%arg0: i32) -> (i32, i32, i32) {
    %c0_i32 = arith.constant 0 : i32
    %c0_i32_0 = arith.constant 0 : i32
    %c0_i32_1 = arith.constant 0 : i32
    return %arg0, %c0_i32, %c0_i32_0 : i32, i32, i32
  }
  func.func @transform_1(%arg0: i32) -> (i32, i32, i32) {
    %c0_i32 = arith.constant 0 : i32
    %c0_i32_0 = arith.constant 0 : i32
    %c0_i32_1 = arith.constant 0 : i32
    return %arg0, %c0_i32, %c0_i32_0 : i32, i32, i32
  }
  func.func @transform_2(%arg0: i32) -> (i32, i32, i32) {
    %c0_i32 = arith.constant 0 : i32
    %c0_i32_0 = arith.constant 0 : i32
    %c0_i32_1 = arith.constant 0 : i32
    return %arg0, %c0_i32, %c0_i32_0 : i32, i32, i32
  }
  func.func @transform_3(%arg0: i32) -> (i32, i32) {
    %c0_i32 = arith.constant 0 : i32
    %c0_i32_0 = arith.constant 0 : i32
    %c0_i32_1 = arith.constant 0 : i32
    return %c0_i32, %c0_i32_0 : i32, i32
  }
  func.func @transform_4(%arg0: i32) -> (i32, i32) {
    %c0_i32 = arith.constant 0 : i32
    %c0_i32_0 = arith.constant 0 : i32
    %c0_i32_1 = arith.constant 0 : i32
    return %c0_i32, %c0_i32_0 : i32, i32
  }
  func.func @transform_5(%arg0: i32) -> (i32, i32, i32) {
    %c0_i32 = arith.constant 0 : i32
    %c0_i32_0 = arith.constant 0 : i32
    %c0_i32_1 = arith.constant 0 : i32
    %c0_i32_2 = arith.constant 0 : i32
    return %c0_i32, %c0_i32_0, %c0_i32_1 : i32, i32, i32
  }
  func.func @transform_6(%arg0: i32) -> (i32, i32) {
    %c0_i32 = arith.constant 0 : i32
    %c0_i32_0 = arith.constant 0 : i32
    %c0_i32_1 = arith.constant 0 : i32
    return %c0_i32, %c0_i32_0 : i32, i32
  }
  func.func @transform_7(%arg0: i32) -> (i32, i32) {
    %c0_i32 = arith.constant 0 : i32
    %c0_i32_0 = arith.constant 0 : i32
    %c0_i32_1 = arith.constant 0 : i32
    return %c0_i32, %c0_i32_0 : i32, i32
  }
  func.func @transform_8(%arg0: i32) -> (i32, i32) {
    %c0_i32 = arith.constant 0 : i32
    %c0_i32_0 = arith.constant 0 : i32
    %c0_i32_1 = arith.constant 0 : i32
    return %c0_i32, %c0_i32_0 : i32, i32
  }
  func.func @transform_9(%arg0: i32) -> (i32, i32) {
    %c0_i32 = arith.constant 0 : i32
    %c0_i32_0 = arith.constant 0 : i32
    %c0_i32_1 = arith.constant 0 : i32
    return %c0_i32, %c0_i32_0 : i32, i32
  }
  func.func @transform_10(%arg0: i32) -> (i32, i32) {
    %c0_i32 = arith.constant 0 : i32
    %c0_i32_0 = arith.constant 0 : i32
    %c0_i32_1 = arith.constant 0 : i32
    return %c0_i32, %c0_i32_0 : i32, i32
  }
  func.func @transform_11(%arg0: i32) -> (i32, i32) {
    %c0_i32 = arith.constant 0 : i32
    %c0_i32_0 = arith.constant 0 : i32
    %c0_i32_1 = arith.constant 0 : i32
    return %c0_i32, %c0_i32_0 : i32, i32
  }
  func.func @transform_12(%arg0: i32) -> (i32, i32) {
    %c0_i32 = arith.constant 0 : i32
    %c0_i32_0 = arith.constant 0 : i32
    %c0_i32_1 = arith.constant 0 : i32
    return %c0_i32, %c0_i32_0 : i32, i32
  }
  func.func @transform_13(%arg0: i32) -> (i32, i32) {
    %c0_i32 = arith.constant 0 : i32
    %c0_i32_0 = arith.constant 0 : i32
    %c0_i32_1 = arith.constant 0 : i32
    return %c0_i32, %c0_i32_0 : i32, i32
  }
  func.func @transform_14(%arg0: i32) -> (i32, i32) {
    %c0_i32 = arith.constant 0 : i32
    %c0_i32_0 = arith.constant 0 : i32
    %c0_i32_1 = arith.constant 0 : i32
    return %c0_i32, %c0_i32_0 : i32, i32
  }
  func.func @transform_15(%arg0: i32) -> (i32, i32, i32) {
    %c0_i32 = arith.constant 0 : i32
    %c0_i32_0 = arith.constant 0 : i32
    %c0_i32_1 = arith.constant 0 : i32
    return %arg0, %c0_i32, %c0_i32_0 : i32, i32, i32
  }
}

module attributes {stable_mosaic.version = 11 : i64} {
  func.func @_encoder_layer_kernel(%arg0: i32, %arg1: memref<2x8x128xbf16, #tpu.memory_space<vmem>>, %arg2: memref<2x1x8xf32, #tpu.memory_space<vmem>>, %arg3: memref<2x8x1xf32, #tpu.memory_space<vmem>>, %arg4: memref<128x384xbf16, #tpu.memory_space<vmem>>, %arg5: memref<1x384xf32, #tpu.memory_space<vmem>>, %arg6: memref<4x32x128xbf16, #tpu.memory_space<vmem>>, %arg7: memref<1x128xf32, #tpu.memory_space<vmem>>, %arg8: memref<128x256xbf16, #tpu.memory_space<vmem>>, %arg9: memref<1x256xf32, #tpu.memory_space<vmem>>, %arg10: memref<256x128xbf16, #tpu.memory_space<vmem>>, %arg11: memref<1x128xf32, #tpu.memory_space<vmem>>, %arg12: memref<1x128xf32, #tpu.memory_space<vmem>>, %arg13: memref<1x128xf32, #tpu.memory_space<vmem>>, %arg14: memref<1x128xf32, #tpu.memory_space<vmem>>, %arg15: memref<1x128xf32, #tpu.memory_space<vmem>>, %arg16: memref<2x8x128xbf16, #tpu.memory_space<vmem>>) attributes {dimension_semantics = [#tpu.dimension_semantics<parallel>], iteration_bounds = array<i64: 2>, scalar_prefetch = 0 : i64, scratch_operands = 0 : i64, tpu.core_type = #tpu.core_type<tc>, window_params = [{transform_indices = @transform_0, window_bounds = array<i64: 2, 8, 128>}, {transform_indices = @transform_1, window_bounds = array<i64: 2, 1, 8>}, {transform_indices = @transform_2, window_bounds = array<i64: 2, 8, 1>}, {pipeline_mode = #tpu.pipeline_mode<synchronous>, transform_indices = @transform_3, window_bounds = array<i64: 128, 384>}, {pipeline_mode = #tpu.pipeline_mode<synchronous>, transform_indices = @transform_4, window_bounds = array<i64: 1, 384>}, {pipeline_mode = #tpu.pipeline_mode<synchronous>, transform_indices = @transform_5, window_bounds = array<i64: 4, 32, 128>}, {pipeline_mode = #tpu.pipeline_mode<synchronous>, transform_indices = @transform_6, window_bounds = array<i64: 1, 128>}, {pipeline_mode = #tpu.pipeline_mode<synchronous>, transform_indices = @transform_7, window_bounds = array<i64: 128, 256>}, {pipeline_mode = #tpu.pipeline_mode<synchronous>, transform_indices = @transform_8, window_bounds = array<i64: 1, 256>}, {pipeline_mode = #tpu.pipeline_mode<synchronous>, transform_indices = @transform_9, window_bounds = array<i64: 256, 128>}, {pipeline_mode = #tpu.pipeline_mode<synchronous>, transform_indices = @transform_10, window_bounds = array<i64: 1, 128>}, {pipeline_mode = #tpu.pipeline_mode<synchronous>, transform_indices = @transform_11, window_bounds = array<i64: 1, 128>}, {pipeline_mode = #tpu.pipeline_mode<synchronous>, transform_indices = @transform_12, window_bounds = array<i64: 1, 128>}, {pipeline_mode = #tpu.pipeline_mode<synchronous>, transform_indices = @transform_13, window_bounds = array<i64: 1, 128>}, {pipeline_mode = #tpu.pipeline_mode<synchronous>, transform_indices = @transform_14, window_bounds = array<i64: 1, 128>}, {transform_indices = @transform_15, window_bounds = array<i64: 2, 8, 128>}]} {
    %c0 = arith.constant 0 : index
    %c0_0 = arith.constant 0 : index
    %c0_1 = arith.constant 0 : index
    %0 = vector.load %arg1[%c0, %c0_0, %c0_1] : memref<2x8x128xbf16, #tpu.memory_space<vmem>>, vector<2x8x128xbf16>
    %1 = vector.shape_cast %0 : vector<2x8x128xbf16> to vector<16x128xbf16>
    %2 = arith.extf %1 : vector<16x128xbf16> to vector<16x128xf32>
    %c0_2 = arith.constant 0 : index
    %c0_3 = arith.constant 0 : index
    %3 = vector.load %arg4[%c0_2, %c0_3] : memref<128x384xbf16, #tpu.memory_space<vmem>>, vector<128x384xbf16>
    %cst = arith.constant dense<0.000000e+00> : vector<16x384xf32>
    %4 = tpu.matmul %1, %3, %cst {dimension_numbers = #tpu.dot_dimension_numbers<[1], [0], [0], [1], [0, 0, 1, 1], [], []>} : vector<16x128xbf16>, vector<128x384xbf16>, vector<16x384xf32> -> vector<16x384xf32>
    %c0_4 = arith.constant 0 : index
    %c0_5 = arith.constant 0 : index
    %5 = vector.load %arg5[%c0_4, %c0_5] : memref<1x384xf32, #tpu.memory_space<vmem>>, vector<1x384xf32>
    %6 = vector.broadcast %5 : vector<1x384xf32> to vector<16x384xf32>
    %7 = arith.addf %4, %6 : vector<16x384xf32>
    %8 = vector.extract_strided_slice %7 {offsets = [0, 0], sizes = [16, 32], strides = [1, 1]} : vector<16x384xf32> to vector<16x32xf32>
    %9 = vector.extract_strided_slice %7 {offsets = [0, 32], sizes = [16, 32], strides = [1, 1]} : vector<16x384xf32> to vector<16x32xf32>
    %10 = vector.extract_strided_slice %7 {offsets = [0, 64], sizes = [16, 32], strides = [1, 1]} : vector<16x384xf32> to vector<16x32xf32>
    %11 = vector.extract_strided_slice %7 {offsets = [0, 96], sizes = [16, 32], strides = [1, 1]} : vector<16x384xf32> to vector<16x32xf32>
    %12 = vector.shape_cast %8 : vector<16x32xf32> to vector<1x16x32xf32>
    %13 = vector.shape_cast %9 : vector<16x32xf32> to vector<1x16x32xf32>
    %14 = vector.shape_cast %10 : vector<16x32xf32> to vector<1x16x32xf32>
    %15 = vector.shape_cast %11 : vector<16x32xf32> to vector<1x16x32xf32>
    %16 = tpu.concatenate %12, %13, %14, %15 in 0 : vector<1x16x32xf32>, vector<1x16x32xf32>, vector<1x16x32xf32>, vector<1x16x32xf32> -> vector<4x16x32xf32>
    %17 = vector.shape_cast %16 : vector<4x16x32xf32> to vector<8x8x32xf32>
    %18 = arith.truncf %17 : vector<8x8x32xf32> to vector<8x8x32xbf16>
    %19 = vector.extract_strided_slice %7 {offsets = [0, 128], sizes = [16, 32], strides = [1, 1]} : vector<16x384xf32> to vector<16x32xf32>
    %20 = vector.extract_strided_slice %7 {offsets = [0, 160], sizes = [16, 32], strides = [1, 1]} : vector<16x384xf32> to vector<16x32xf32>
    %21 = vector.extract_strided_slice %7 {offsets = [0, 192], sizes = [16, 32], strides = [1, 1]} : vector<16x384xf32> to vector<16x32xf32>
    %22 = vector.extract_strided_slice %7 {offsets = [0, 224], sizes = [16, 32], strides = [1, 1]} : vector<16x384xf32> to vector<16x32xf32>
    %23 = vector.shape_cast %19 : vector<16x32xf32> to vector<1x16x32xf32>
    %24 = vector.shape_cast %20 : vector<16x32xf32> to vector<1x16x32xf32>
    %25 = vector.shape_cast %21 : vector<16x32xf32> to vector<1x16x32xf32>
    %26 = vector.shape_cast %22 : vector<16x32xf32> to vector<1x16x32xf32>
    %27 = tpu.concatenate %23, %24, %25, %26 in 0 : vector<1x16x32xf32>, vector<1x16x32xf32>, vector<1x16x32xf32>, vector<1x16x32xf32> -> vector<4x16x32xf32>
    %28 = vector.shape_cast %27 : vector<4x16x32xf32> to vector<8x8x32xf32>
    %29 = arith.truncf %28 : vector<8x8x32xf32> to vector<8x8x32xbf16>
    %30 = vector.extract_strided_slice %7 {offsets = [0, 256], sizes = [16, 32], strides = [1, 1]} : vector<16x384xf32> to vector<16x32xf32>
    %31 = vector.extract_strided_slice %7 {offsets = [0, 288], sizes = [16, 32], strides = [1, 1]} : vector<16x384xf32> to vector<16x32xf32>
    %32 = vector.extract_strided_slice %7 {offsets = [0, 320], sizes = [16, 32], strides = [1, 1]} : vector<16x384xf32> to vector<16x32xf32>
    %33 = vector.extract_strided_slice %7 {offsets = [0, 352], sizes = [16, 32], strides = [1, 1]} : vector<16x384xf32> to vector<16x32xf32>
    %34 = vector.shape_cast %30 : vector<16x32xf32> to vector<1x16x32xf32>
    %35 = vector.shape_cast %31 : vector<16x32xf32> to vector<1x16x32xf32>
    %36 = vector.shape_cast %32 : vector<16x32xf32> to vector<1x16x32xf32>
    %37 = vector.shape_cast %33 : vector<16x32xf32> to vector<1x16x32xf32>
    %38 = tpu.concatenate %34, %35, %36, %37 in 0 : vector<1x16x32xf32>, vector<1x16x32xf32>, vector<1x16x32xf32>, vector<1x16x32xf32> -> vector<4x16x32xf32>
    %39 = vector.shape_cast %38 : vector<4x16x32xf32> to vector<8x8x32xf32>
    %40 = arith.truncf %39 : vector<8x8x32xf32> to vector<8x8x32xbf16>
    "tpu.trace_start"() <{level = 10 : i32, message = "bqd,bkd->bqk"}> : () -> ()
    %cst_6 = arith.constant dense<0.000000e+00> : vector<8x8x8xf32>
    %41 = tpu.matmul %18, %29, %cst_6 {dimension_numbers = #tpu.dot_dimension_numbers<[2], [2], [1], [1], [0, 0, 0, 1, 1, 1], [0], [0]>} : vector<8x8x32xbf16>, vector<8x8x32xbf16>, vector<8x8x8xf32> -> vector<8x8x8xf32>
    "tpu.trace_stop"() : () -> ()
    %c0_7 = arith.constant 0 : index
    %c0_8 = arith.constant 0 : index
    %c0_9 = arith.constant 0 : index
    %42 = vector.load %arg2[%c0_7, %c0_8, %c0_9] : memref<2x1x8xf32, #tpu.memory_space<vmem>>, vector<2x1x8xf32>
    %cst_10 = arith.constant 0.000000e+00 : f32
    %43 = vector.broadcast %cst_10 : f32 to vector<2x1x8xf32>
    %44 = arith.cmpf ogt, %42, %43 : vector<2x1x8xf32>
    %cst_11 = arith.constant 0.000000e+00 : f32
    %cst_12 = arith.constant -1.000000e+09 : f32
    %45 = vector.broadcast %cst_11 : f32 to vector<2x1x8xf32>
    %46 = vector.broadcast %cst_12 : f32 to vector<2x1x8xf32>
    %47 = arith.select %44, %45, %46 : vector<2x1x8xi1>, vector<2x1x8xf32>
    %48 = vector.shape_cast %41 : vector<8x8x8xf32> to vector<4x2x8x8xf32>
    %49 = vector.shape_cast %47 : vector<2x1x8xf32> to vector<1x2x1x8xf32>
    %50 = vector.broadcast %49 : vector<1x2x1x8xf32> to vector<4x2x8x8xf32>
    %51 = arith.addf %48, %50 : vector<4x2x8x8xf32>
    %52 = vector.shape_cast %51 : vector<4x2x8x8xf32> to vector<8x8x8xf32>
    %cst_13 = arith.constant dense<0xFF800000> : vector<8x8xf32>
    %53 = vector.multi_reduction <maximumf>, %52, %cst_13 [2] : vector<8x8x8xf32> to vector<8x8xf32>
    %54 = vector.shape_cast %53 : vector<8x8xf32> to vector<8x8x1xf32>
    %55 = vector.broadcast %54 : vector<8x8x1xf32> to vector<8x8x8xf32>
    %56 = arith.subf %52, %55 : vector<8x8x8xf32>
    %57 = math.exp %56 : vector<8x8x8xf32>
    %cst_14 = arith.constant dense<0.000000e+00> : vector<8x8xf32>
    %58 = vector.multi_reduction <add>, %57, %cst_14 [2] : vector<8x8x8xf32> to vector<8x8xf32>
    %59 = vector.shape_cast %58 : vector<8x8xf32> to vector<8x8x1xf32>
    %60 = tpu.reciprocal %59 {approx = true} : vector<8x8x1xf32> -> vector<8x8x1xf32>
    %61 = vector.broadcast %60 : vector<8x8x1xf32> to vector<8x8x8xf32>
    %62 = arith.mulf %57, %61 : vector<8x8x8xf32>
    %63 = arith.truncf %62 : vector<8x8x8xf32> to vector<8x8x8xbf16>
    "tpu.trace_start"() <{level = 10 : i32, message = "bqk,bkd->bqd"}> : () -> ()
    %cst_15 = arith.constant dense<0.000000e+00> : vector<8x8x32xf32>
    %64 = tpu.matmul %63, %40, %cst_15 {dimension_numbers = #tpu.dot_dimension_numbers<[2], [1], [1], [2], [0, 0, 0, 1, 1, 2], [0], [0]>} : vector<8x8x8xbf16>, vector<8x8x32xbf16>, vector<8x8x32xf32> -> vector<8x8x32xf32>
    "tpu.trace_stop"() : () -> ()
    %65 = vector.shape_cast %64 : vector<8x8x32xf32> to vector<4x16x32xf32>
    %cst_16 = arith.constant 0.000000e+00 : f32
    %66 = vector.broadcast %cst_16 : f32 to vector<16x128xf32>
    %67 = vector.extract_strided_slice %65 {offsets = [0, 0, 0], sizes = [1, 16, 32], strides = [1, 1, 1]} : vector<4x16x32xf32> to vector<1x16x32xf32>
    %68 = vector.shape_cast %67 : vector<1x16x32xf32> to vector<16x32xf32>
    %69 = arith.truncf %68 : vector<16x32xf32> to vector<16x32xbf16>
    %c0_17 = arith.constant 0 : index
    %c0_18 = arith.constant 0 : index
    %c0_19 = arith.constant 0 : index
    %70 = vector.load %arg6[%c0_17, %c0_18, %c0_19] : memref<4x32x128xbf16, #tpu.memory_space<vmem>>, vector<1x32x128xbf16>
    %71 = vector.shape_cast %70 : vector<1x32x128xbf16> to vector<32x128xbf16>
    %cst_20 = arith.constant dense<0.000000e+00> : vector<16x128xf32>
    %72 = tpu.matmul %69, %71, %cst_20 {dimension_numbers = #tpu.dot_dimension_numbers<[1], [0], [0], [1], [0, 0, 1, 1], [], []>} : vector<16x32xbf16>, vector<32x128xbf16>, vector<16x128xf32> -> vector<16x128xf32>
    %73 = arith.addf %66, %72 : vector<16x128xf32>
    %74 = vector.extract_strided_slice %65 {offsets = [1, 0, 0], sizes = [1, 16, 32], strides = [1, 1, 1]} : vector<4x16x32xf32> to vector<1x16x32xf32>
    %75 = vector.shape_cast %74 : vector<1x16x32xf32> to vector<16x32xf32>
    %76 = arith.truncf %75 : vector<16x32xf32> to vector<16x32xbf16>
    %c1 = arith.constant 1 : index
    %c0_21 = arith.constant 0 : index
    %c0_22 = arith.constant 0 : index
    %77 = vector.load %arg6[%c1, %c0_21, %c0_22] : memref<4x32x128xbf16, #tpu.memory_space<vmem>>, vector<1x32x128xbf16>
    %78 = vector.shape_cast %77 : vector<1x32x128xbf16> to vector<32x128xbf16>
    %cst_23 = arith.constant dense<0.000000e+00> : vector<16x128xf32>
    %79 = tpu.matmul %76, %78, %cst_23 {dimension_numbers = #tpu.dot_dimension_numbers<[1], [0], [0], [1], [0, 0, 1, 1], [], []>} : vector<16x32xbf16>, vector<32x128xbf16>, vector<16x128xf32> -> vector<16x128xf32>
    %80 = arith.addf %73, %79 : vector<16x128xf32>
    %81 = vector.extract_strided_slice %65 {offsets = [2, 0, 0], sizes = [1, 16, 32], strides = [1, 1, 1]} : vector<4x16x32xf32> to vector<1x16x32xf32>
    %82 = vector.shape_cast %81 : vector<1x16x32xf32> to vector<16x32xf32>
    %83 = arith.truncf %82 : vector<16x32xf32> to vector<16x32xbf16>
    %c2 = arith.constant 2 : index
    %c0_24 = arith.constant 0 : index
    %c0_25 = arith.constant 0 : index
    %84 = vector.load %arg6[%c2, %c0_24, %c0_25] : memref<4x32x128xbf16, #tpu.memory_space<vmem>>, vector<1x32x128xbf16>
    %85 = vector.shape_cast %84 : vector<1x32x128xbf16> to vector<32x128xbf16>
    %cst_26 = arith.constant dense<0.000000e+00> : vector<16x128xf32>
    %86 = tpu.matmul %83, %85, %cst_26 {dimension_numbers = #tpu.dot_dimension_numbers<[1], [0], [0], [1], [0, 0, 1, 1], [], []>} : vector<16x32xbf16>, vector<32x128xbf16>, vector<16x128xf32> -> vector<16x128xf32>
    %87 = arith.addf %80, %86 : vector<16x128xf32>
    %88 = vector.extract_strided_slice %65 {offsets = [3, 0, 0], sizes = [1, 16, 32], strides = [1, 1, 1]} : vector<4x16x32xf32> to vector<1x16x32xf32>
    %89 = vector.shape_cast %88 : vector<1x16x32xf32> to vector<16x32xf32>
    %90 = arith.truncf %89 : vector<16x32xf32> to vector<16x32xbf16>
    %c3 = arith.constant 3 : index
    %c0_27 = arith.constant 0 : index
    %c0_28 = arith.constant 0 : index
    %91 = vector.load %arg6[%c3, %c0_27, %c0_28] : memref<4x32x128xbf16, #tpu.memory_space<vmem>>, vector<1x32x128xbf16>
    %92 = vector.shape_cast %91 : vector<1x32x128xbf16> to vector<32x128xbf16>
    %cst_29 = arith.constant dense<0.000000e+00> : vector<16x128xf32>
    %93 = tpu.matmul %90, %92, %cst_29 {dimension_numbers = #tpu.dot_dimension_numbers<[1], [0], [0], [1], [0, 0, 1, 1], [], []>} : vector<16x32xbf16>, vector<32x128xbf16>, vector<16x128xf32> -> vector<16x128xf32>
    %94 = arith.addf %87, %93 : vector<16x128xf32>
    %c0_30 = arith.constant 0 : index
    %c0_31 = arith.constant 0 : index
    %95 = vector.load %arg7[%c0_30, %c0_31] : memref<1x128xf32, #tpu.memory_space<vmem>>, vector<1x128xf32>
    %96 = vector.broadcast %95 : vector<1x128xf32> to vector<16x128xf32>
    %97 = arith.addf %94, %96 : vector<16x128xf32>
    %98 = arith.addf %2, %97 : vector<16x128xf32>
    %cst_32 = arith.constant dense<0.000000e+00> : vector<16xf32>
    %99 = vector.multi_reduction <add>, %98, %cst_32 [1] : vector<16x128xf32> to vector<16xf32>
    %100 = vector.shape_cast %99 : vector<16xf32> to vector<16x1xf32>
    %cst_33 = arith.constant 1.280000e+02 : f32
    %101 = vector.broadcast %cst_33 : f32 to vector<16x1xf32>
    %102 = arith.divf %100, %101 : vector<16x1xf32>
    %103 = vector.broadcast %102 : vector<16x1xf32> to vector<16x128xf32>
    %104 = arith.subf %98, %103 : vector<16x128xf32>
    %105 = arith.mulf %104, %104 : vector<16x128xf32>
    %cst_34 = arith.constant dense<0.000000e+00> : vector<16xf32>
    %106 = vector.multi_reduction <add>, %105, %cst_34 [1] : vector<16x128xf32> to vector<16xf32>
    %107 = vector.shape_cast %106 : vector<16xf32> to vector<16x1xf32>
    %cst_35 = arith.constant 1.280000e+02 : f32
    %108 = vector.broadcast %cst_35 : f32 to vector<16x1xf32>
    %109 = arith.divf %107, %108 : vector<16x1xf32>
    %110 = vector.broadcast %102 : vector<16x1xf32> to vector<16x128xf32>
    %111 = arith.subf %98, %110 : vector<16x128xf32>
    %cst_36 = arith.constant 9.99999974E-6 : f32
    %112 = vector.broadcast %cst_36 : f32 to vector<16x1xf32>
    %113 = arith.addf %109, %112 : vector<16x1xf32>
    %114 = math.rsqrt %113 : vector<16x1xf32>
    %115 = vector.broadcast %114 : vector<16x1xf32> to vector<16x128xf32>
    %116 = arith.mulf %111, %115 : vector<16x128xf32>
    %c0_37 = arith.constant 0 : index
    %c0_38 = arith.constant 0 : index
    %117 = vector.load %arg12[%c0_37, %c0_38] : memref<1x128xf32, #tpu.memory_space<vmem>>, vector<1x128xf32>
    %118 = vector.broadcast %117 : vector<1x128xf32> to vector<16x128xf32>
    %119 = arith.mulf %116, %118 : vector<16x128xf32>
    %c0_39 = arith.constant 0 : index
    %c0_40 = arith.constant 0 : index
    %120 = vector.load %arg13[%c0_39, %c0_40] : memref<1x128xf32, #tpu.memory_space<vmem>>, vector<1x128xf32>
    %121 = vector.broadcast %120 : vector<1x128xf32> to vector<16x128xf32>
    %122 = arith.addf %119, %121 : vector<16x128xf32>
    %123 = arith.truncf %122 : vector<16x128xf32> to vector<16x128xbf16>
    %cst_41 = arith.constant 0.000000e+00 : f32
    %124 = vector.broadcast %cst_41 : f32 to vector<16x128xf32>
    %c0_42 = arith.constant 0 : index
    %c0_43 = arith.constant 0 : index
    %125 = vector.load %arg8[%c0_42, %c0_43] : memref<128x256xbf16, #tpu.memory_space<vmem>>, vector<128x256xbf16>
    %cst_44 = arith.constant dense<0.000000e+00> : vector<16x256xf32>
    %126 = tpu.matmul %123, %125, %cst_44 {dimension_numbers = #tpu.dot_dimension_numbers<[1], [0], [0], [1], [0, 0, 1, 1], [], []>} : vector<16x128xbf16>, vector<128x256xbf16>, vector<16x256xf32> -> vector<16x256xf32>
    %c0_45 = arith.constant 0 : index
    %c0_46 = arith.constant 0 : index
    %127 = vector.load %arg9[%c0_45, %c0_46] : memref<1x256xf32, #tpu.memory_space<vmem>>, vector<1x256xf32>
    %128 = vector.broadcast %127 : vector<1x256xf32> to vector<16x256xf32>
    %129 = arith.addf %126, %128 : vector<16x256xf32>
    %cst_47 = arith.constant 5.000000e-01 : f32
    %130 = vector.broadcast %cst_47 : f32 to vector<16x256xf32>
    %131 = arith.mulf %130, %129 : vector<16x256xf32>
    %cst_48 = arith.constant 0.707106769 : f32
    %132 = vector.broadcast %cst_48 : f32 to vector<16x256xf32>
    %133 = arith.mulf %129, %132 : vector<16x256xf32>
    %134 = math.erf %133 : vector<16x256xf32>
    %cst_49 = arith.constant 1.000000e+00 : f32
    %135 = vector.broadcast %cst_49 : f32 to vector<16x256xf32>
    %136 = arith.addf %135, %134 : vector<16x256xf32>
    %137 = arith.mulf %131, %136 : vector<16x256xf32>
    %138 = arith.truncf %137 : vector<16x256xf32> to vector<16x256xbf16>
    %c0_50 = arith.constant 0 : index
    %c0_51 = arith.constant 0 : index
    %139 = vector.load %arg10[%c0_50, %c0_51] : memref<256x128xbf16, #tpu.memory_space<vmem>>, vector<256x128xbf16>
    %cst_52 = arith.constant dense<0.000000e+00> : vector<16x128xf32>
    %140 = tpu.matmul %138, %139, %cst_52 {dimension_numbers = #tpu.dot_dimension_numbers<[1], [0], [0], [1], [0, 0, 1, 1], [], []>} : vector<16x256xbf16>, vector<256x128xbf16>, vector<16x128xf32> -> vector<16x128xf32>
    %141 = arith.addf %124, %140 : vector<16x128xf32>
    %c0_53 = arith.constant 0 : index
    %c0_54 = arith.constant 0 : index
    %142 = vector.load %arg11[%c0_53, %c0_54] : memref<1x128xf32, #tpu.memory_space<vmem>>, vector<1x128xf32>
    %143 = vector.broadcast %142 : vector<1x128xf32> to vector<16x128xf32>
    %144 = arith.addf %141, %143 : vector<16x128xf32>
    %145 = arith.addf %122, %144 : vector<16x128xf32>
    %cst_55 = arith.constant dense<0.000000e+00> : vector<16xf32>
    %146 = vector.multi_reduction <add>, %145, %cst_55 [1] : vector<16x128xf32> to vector<16xf32>
    %147 = vector.shape_cast %146 : vector<16xf32> to vector<16x1xf32>
    %cst_56 = arith.constant 1.280000e+02 : f32
    %148 = vector.broadcast %cst_56 : f32 to vector<16x1xf32>
    %149 = arith.divf %147, %148 : vector<16x1xf32>
    %150 = vector.broadcast %149 : vector<16x1xf32> to vector<16x128xf32>
    %151 = arith.subf %145, %150 : vector<16x128xf32>
    %152 = arith.mulf %151, %151 : vector<16x128xf32>
    %cst_57 = arith.constant dense<0.000000e+00> : vector<16xf32>
    %153 = vector.multi_reduction <add>, %152, %cst_57 [1] : vector<16x128xf32> to vector<16xf32>
    %154 = vector.shape_cast %153 : vector<16xf32> to vector<16x1xf32>
    %cst_58 = arith.constant 1.280000e+02 : f32
    %155 = vector.broadcast %cst_58 : f32 to vector<16x1xf32>
    %156 = arith.divf %154, %155 : vector<16x1xf32>
    %157 = vector.broadcast %149 : vector<16x1xf32> to vector<16x128xf32>
    %158 = arith.subf %145, %157 : vector<16x128xf32>
    %cst_59 = arith.constant 9.99999974E-6 : f32
    %159 = vector.broadcast %cst_59 : f32 to vector<16x1xf32>
    %160 = arith.addf %156, %159 : vector<16x1xf32>
    %161 = math.rsqrt %160 : vector<16x1xf32>
    %162 = vector.broadcast %161 : vector<16x1xf32> to vector<16x128xf32>
    %163 = arith.mulf %158, %162 : vector<16x128xf32>
    %c0_60 = arith.constant 0 : index
    %c0_61 = arith.constant 0 : index
    %164 = vector.load %arg14[%c0_60, %c0_61] : memref<1x128xf32, #tpu.memory_space<vmem>>, vector<1x128xf32>
    %165 = vector.broadcast %164 : vector<1x128xf32> to vector<16x128xf32>
    %166 = arith.mulf %163, %165 : vector<16x128xf32>
    %c0_62 = arith.constant 0 : index
    %c0_63 = arith.constant 0 : index
    %167 = vector.load %arg15[%c0_62, %c0_63] : memref<1x128xf32, #tpu.memory_space<vmem>>, vector<1x128xf32>
    %168 = vector.broadcast %167 : vector<1x128xf32> to vector<16x128xf32>
    %169 = arith.addf %166, %168 : vector<16x128xf32>
    %170 = vector.shape_cast %169 : vector<16x128xf32> to vector<2x8x128xf32>
    %171 = arith.truncf %170 : vector<2x8x128xf32> to vector<2x8x128xbf16>
    %c0_64 = arith.constant 0 : index
    %c0_65 = arith.constant 0 : index
    %c0_66 = arith.constant 0 : index
    %172 = vector.load %arg16[%c0_64, %c0_65, %c0_66] : memref<2x8x128xbf16, #tpu.memory_space<vmem>>, vector<2x8x128xbf16>
    tpu.vector_store %arg16[%c0_64, %c0_65, %c0_66], %171 {strides = array<i32>} : memref<2x8x128xbf16, #tpu.memory_space<vmem>>, vector<2x8x128xbf16>,
    return
  }
  func.func @transform_0(%arg0: i32) -> (i32, i32, i32) {
    %c0_i32 = arith.constant 0 : i32
    %c0_i32_0 = arith.constant 0 : i32
    %c0_i32_1 = arith.constant 0 : i32
    return %arg0, %c0_i32, %c0_i32_0 : i32, i32, i32
  }
  func.func @transform_1(%arg0: i32) -> (i32, i32, i32) {
    %c0_i32 = arith.constant 0 : i32
    %c0_i32_0 = arith.constant 0 : i32
    %c0_i32_1 = arith.constant 0 : i32
    return %arg0, %c0_i32, %c0_i32_0 : i32, i32, i32
  }
  func.func @transform_2(%arg0: i32) -> (i32, i32, i32) {
    %c0_i32 = arith.constant 0 : i32
    %c0_i32_0 = arith.constant 0 : i32
    %c0_i32_1 = arith.constant 0 : i32
    return %arg0, %c0_i32, %c0_i32_0 : i32, i32, i32
  }
  func.func @transform_3(%arg0: i32) -> (i32, i32) {
    %c0_i32 = arith.constant 0 : i32
    %c0_i32_0 = arith.constant 0 : i32
    %c0_i32_1 = arith.constant 0 : i32
    return %c0_i32, %c0_i32_0 : i32, i32
  }
  func.func @transform_4(%arg0: i32) -> (i32, i32) {
    %c0_i32 = arith.constant 0 : i32
    %c0_i32_0 = arith.constant 0 : i32
    %c0_i32_1 = arith.constant 0 : i32
    return %c0_i32, %c0_i32_0 : i32, i32
  }
  func.func @transform_5(%arg0: i32) -> (i32, i32, i32) {
    %c0_i32 = arith.constant 0 : i32
    %c0_i32_0 = arith.constant 0 : i32
    %c0_i32_1 = arith.constant 0 : i32
    %c0_i32_2 = arith.constant 0 : i32
    return %c0_i32, %c0_i32_0, %c0_i32_1 : i32, i32, i32
  }
  func.func @transform_6(%arg0: i32) -> (i32, i32) {
    %c0_i32 = arith.constant 0 : i32
    %c0_i32_0 = arith.constant 0 : i32
    %c0_i32_1 = arith.constant 0 : i32
    return %c0_i32, %c0_i32_0 : i32, i32
  }
  func.func @transform_7(%arg0: i32) -> (i32, i32) {
    %c0_i32 = arith.constant 0 : i32
    %c0_i32_0 = arith.constant 0 : i32
    %c0_i32_1 = arith.constant 0 : i32
    return %c0_i32, %c0_i32_0 : i32, i32
  }
  func.func @transform_8(%arg0: i32) -> (i32, i32) {
    %c0_i32 = arith.constant 0 : i32
    %c0_i32_0 = arith.constant 0 : i32
    %c0_i32_1 = arith.constant 0 : i32
    return %c0_i32, %c0_i32_0 : i32, i32
  }
  func.func @transform_9(%arg0: i32) -> (i32, i32) {
    %c0_i32 = arith.constant 0 : i32
    %c0_i32_0 = arith.constant 0 : i32
    %c0_i32_1 = arith.constant 0 : i32
    return %c0_i32, %c0_i32_0 : i32, i32
  }
  func.func @transform_10(%arg0: i32) -> (i32, i32) {
    %c0_i32 = arith.constant 0 : i32
    %c0_i32_0 = arith.constant 0 : i32
    %c0_i32_1 = arith.constant 0 : i32
    return %c0_i32, %c0_i32_0 : i32, i32
  }
  func.func @transform_11(%arg0: i32) -> (i32, i32) {
    %c0_i32 = arith.constant 0 : i32
    %c0_i32_0 = arith.constant 0 : i32
    %c0_i32_1 = arith.constant 0 : i32
    return %c0_i32, %c0_i32_0 : i32, i32
  }
  func.func @transform_12(%arg0: i32) -> (i32, i32) {
    %c0_i32 = arith.constant 0 : i32
    %c0_i32_0 = arith.constant 0 : i32
    %c0_i32_1 = arith.constant 0 : i32
    return %c0_i32, %c0_i32_0 : i32, i32
  }
  func.func @transform_13(%arg0: i32) -> (i32, i32) {
    %c0_i32 = arith.constant 0 : i32
    %c0_i32_0 = arith.constant 0 : i32
    %c0_i32_1 = arith.constant 0 : i32
    return %c0_i32, %c0_i32_0 : i32, i32
  }
  func.func @transform_14(%arg0: i32) -> (i32, i32) {
    %c0_i32 = arith.constant 0 : i32
    %c0_i32_0 = arith.constant 0 : i32
    %c0_i32_1 = arith.constant 0 : i32
    return %c0_i32, %c0_i32_0 : i32, i32
  }
  func.func @transform_15(%arg0: i32) -> (i32, i32, i32) {
    %c0_i32 = arith.constant 0 : i32
    %c0_i32_0 = arith.constant 0 : i32
    %c0_i32_1 = arith.constant 0 : i32
    return %arg0, %c0_i32, %c0_i32_0 : i32, i32, i32
  }
}

</mosaic_0001>

<llo_original>
// kernel: tpu_custom_call.1
$region0: #{tpu_custom_call.1}
  #allocation0 [shape = 'u32[]', space=smem, size = 0x4, offset = 0x4, fixed_abs, tag = 'smem constant byte address 0x4 - core index']
  #allocation1 [shape = 'u32[144,128]{1,0:T(1,128)}', space=vmem, size = 0x12000, scoped, tag = 'internal scratch']
  %s0 = inlined_call_operand.vmem [shape: bf16[4,8,128], index: 0, kind: input, shape index: {}]
  %s1 = inlined_call_operand.vmem [shape: f32[4,1,8], index: 1, kind: input, shape index: {}]
  %s2 = inlined_call_operand.vmem [shape: f32[4,8,1], index: 2, kind: input, shape index: {}]
  %s3 = inlined_call_operand.hbm [shape: bf16[128,384], index: 3, kind: input, shape index: {}]
  %s4 = inlined_call_operand.vmem [shape: f32[1,384], index: 4, kind: input, shape index: {}]
  %s5 = inlined_call_operand.hbm [shape: bf16[4,32,128], index: 5, kind: input, shape index: {}]
  %s6 = inlined_call_operand.vmem [shape: f32[1,128], index: 6, kind: input, shape index: {}]
  %s7 = inlined_call_operand.hbm [shape: bf16[128,256], index: 7, kind: input, shape index: {}]
  %s8 = inlined_call_operand.vmem [shape: f32[1,256], index: 8, kind: input, shape index: {}]
  %s9 = inlined_call_operand.hbm [shape: bf16[256,128], index: 9, kind: input, shape index: {}]
  %s10 = inlined_call_operand.vmem [shape: f32[1,128], index: 10, kind: input, shape index: {}]
  %s11 = inlined_call_operand.vmem [shape: f32[1,128], index: 11, kind: input, shape index: {}]
  %s12 = inlined_call_operand.vmem [shape: f32[1,128], index: 12, kind: input, shape index: {}]
  %s13 = inlined_call_operand.vmem [shape: f32[1,128], index: 13, kind: input, shape index: {}]
  %s14 = inlined_call_operand.vmem [shape: f32[1,128], index: 14, kind: input, shape index: {}]
  %s15 = inlined_call_operand.hbm [shape: bf16[4,8,128], index: 15, kind: output, shape index: {}]
  %s16 = sld [smem:[#allocation0]]
  $region109: #{tpu_custom_call.1} parent=0
    _
  %s18 = ssub.s32 1, %s16
  %s19 = scalar_select 0, %s18, %s16
  $region1: #{tpu_custom_call.1} parent=0
    #allocation2 [shape = 'u8[98304]{0}', space=vmem, size = 0x18000, scoped, tag = 'input window, operand 3, single buffered']
    #allocation3 [shape = 's32[2]{0}', space=sflag, size = 0x8, scoped, tag = 'scoped memory for tpu_custom_call.1']
    #allocation4 [shape = 's32[2]{0}', space=sflag, size = 0x8, scoped, tag = 'scoped memory for tpu_custom_call.1']
    #allocation5 [shape = 'u8[32768]{0}', space=vmem, size = 0x8000, scoped, tag = 'input window, operand 5, single buffered']
    #allocation6 [shape = 's32[1]{0}', space=sflag, size = 0x4, scoped, tag = 'scoped memory for tpu_custom_call.1']
    #allocation7 [shape = 'u8[65536]{0}', space=vmem, size = 0x10000, scoped, tag = 'input window, operand 7, single buffered']
    #allocation8 [shape = 'u8[65536]{0}', space=vmem, size = 0x10000, scoped, tag = 'input window, operand 9, single buffered']
    #allocation9 [shape = 's32[1]{0}', space=sflag, size = 0x4, scoped, tag = 'scoped memory for tpu_custom_call.1']
    #allocation10 [shape = 'u8[8192]{0}', space=vmem, size = 0x2000, scoped, tag = 'output window, operand 0']
    %20 = vsyncpa [#allocation3], 0
    %21 = vsyncpa [#allocation6], 0
    %22 = vsyncpa [#allocation9], 0
    %23 = vsyncpa [#allocation4], 0
    %s24 = scalar_lea.sflag [#allocation4], 1
    %25 = vsyncpa %s24, 0
    loop: start=0, step=1, limit=4
    $region2: #{tpu_custom_call.1} parent=1 // loop_pre_header
      _
    $region3: #{tpu_custom_call.1} parent=1 // loop_header
      %s27 = sphi 0, %s31
      %p28 = scmp.ge.s32.totalorder %s27, 4
      %s37 = sphi 0, %s39
      %s40 = sphi 0, %s37
      %s41 = sphi 0, %s40
      %s57 = sphi 0, %s41
      %s63 = sphi 0, %s65
      %s66 = sphi 0, %s63
      %s67 = sphi 0, %s66
      %s83 = sphi 0, %s67
      %s89 = sphi 0, %s91
      %s92 = sphi 0, %s89
      %s93 = sphi 0, %s92
      %s109 = sphi 0, %s93
      %s113 = sphi 0, %s113
      %s115 = sphi 0, %s113
      %s116 = sphi 0, %s115
      %s130 = sphi 0, %s116
      %s134 = sphi 0, %s134
      %s136 = sphi 0, %s134
      %s137 = sphi 0, %s136
      %s151 = sphi 0, %s137
      %s155 = sphi 0, %s155
      %s157 = sphi 0, %s155
      %s158 = sphi 0, %s157
      %s172 = sphi 0, %s158
      %s176 = sphi 0, %s176
      %s178 = sphi 0, %s176
      %s179 = sphi 0, %s178
      %s193 = sphi 0, %s179
      %s197 = sphi 0, %s197
      %s199 = sphi 0, %s197
      %s200 = sphi 0, %s199
      %s214 = sphi 0, %s200
      %s218 = sphi 0, %s218
      %s220 = sphi 0, %s218
      %s221 = sphi 0, %s220
      %s235 = sphi 0, %s221
      %s239 = sphi 0, %s239
      %s241 = sphi 0, %s239
      %s242 = sphi 0, %s241
      %s256 = sphi 0, %s242
      %s260 = sphi 0, %s260
      %s262 = sphi 0, %s260
      %s263 = sphi 0, %s262
      %s277 = sphi 0, %s263
      %s281 = sphi 0, %s281
      %s283 = sphi 0, %s281
      %s284 = sphi 0, %s283
      %s298 = sphi 0, %s284
      %s302 = sphi 0, %s302
      %s304 = sphi 0, %s302
      %s305 = sphi 0, %s304
      %s319 = sphi 0, %s305
      %s323 = sphi 0, %s323
      %s325 = sphi 0, %s323
      %s326 = sphi 0, %s325
      %s340 = sphi 0, %s326
      %s344 = sphi 0, %s344
      %s346 = sphi 0, %s344
      %s347 = sphi 0, %s346
      %s361 = sphi 0, %s347
      %s367 = sphi 0, %s369
      %s370 = sphi 0, %s367
      %s371 = sphi 0, %s370
      %s387 = sphi 0, %s371
    $region4: #{tpu_custom_call.1} parent=1 // loop_header_branch
      %30 = sbr.rel (%p28) target = $region8
    $region5: #{tpu_custom_call.1} parent=1 // loop_body
      %s32 = ssub.s32 %s27, 1
      %s33 = ssub.s32 %s27, 2
      %s34 = sadd.s32 %s27, 1
      %s35 = ssub.s32 %s27, %s34
      %p36 = scmp.eq.s32.totalorder %s35, 0
      %s38 = sadd.s32 %s37, 1
      %s39 = scalar_select %p36, %s37, %s38
      %p42 = pneg %p36
      %p43 = scmp.eq.s32.totalorder %s27, 1
      %p44 = por %p42, %p43
      %p45 = scmp.ne.s32.totalorder %s37, %s40
      %p46 = scmp.eq.s32.totalorder %s27, 0
      %p47 = por %p45, %p46
      %p48 = scmp.ne.s32.totalorder %s37, %s40
      %p49 = scmp.eq.s32.totalorder %s32, 1
      %p50 = por %p48, %p49
      %p51 = scmp.ne.s32.totalorder %s40, %s41
      %p52 = scmp.eq.s32.totalorder %s32, 0
      %p53 = por %p51, %p52
      %p54 = scmp.ne.s32.totalorder %s40, %s41
      %p55 = scmp.eq.s32.totalorder %s33, 1
      %p56 = por %p54, %p55
      %p58 = scmp.ne.s32.totalorder %s41, %s57
      %p59 = scmp.eq.s32.totalorder %s33, 0
      %p60 = por %p58, %p59
      %s61 = ssub.s32 %s27, %s34
      %p62 = scmp.eq.s32.totalorder %s61, 0
      %s64 = sadd.s32 %s63, 1
      %s65 = scalar_select %p62, %s63, %s64
      %p68 = pneg %p62
      %p69 = scmp.eq.s32.totalorder %s27, 1
      %p70 = por %p68, %p69
      %p71 = scmp.ne.s32.totalorder %s63, %s66
      %p72 = scmp.eq.s32.totalorder %s27, 0
      %p73 = por %p71, %p72
      %p74 = scmp.ne.s32.totalorder %s63, %s66
      %p75 = scmp.eq.s32.totalorder %s32, 1
      %p76 = por %p74, %p75
      %p77 = scmp.ne.s32.totalorder %s66, %s67
      %p78 = scmp.eq.s32.totalorder %s32, 0
      %p79 = por %p77, %p78
      %p80 = scmp.ne.s32.totalorder %s66, %s67
      %p81 = scmp.eq.s32.totalorder %s33, 1
      %p82 = por %p80, %p81
      %p84 = scmp.ne.s32.totalorder %s67, %s83
      %p85 = scmp.eq.s32.totalorder %s33, 0
      %p86 = por %p84, %p85
      %s87 = ssub.s32 %s27, %s34
      %p88 = scmp.eq.s32.totalorder %s87, 0
      %s90 = sadd.s32 %s89, 1
      %s91 = scalar_select %p88, %s89, %s90
      %p94 = pneg %p88
      %p95 = scmp.eq.s32.totalorder %s27, 1
      %p96 = por %p94, %p95
      %p97 = scmp.ne.s32.totalorder %s89, %s92
      %p98 = scmp.eq.s32.totalorder %s27, 0
      %p99 = por %p97, %p98
      %p100 = scmp.ne.s32.totalorder %s89, %s92
      %p101 = scmp.eq.s32.totalorder %s32, 1
      %p102 = por %p100, %p101
      %p103 = scmp.ne.s32.totalorder %s92, %s93
      %p104 = scmp.eq.s32.totalorder %s32, 0
      %p105 = por %p103, %p104
      %p106 = scmp.ne.s32.totalorder %s92, %s93
      %p107 = scmp.eq.s32.totalorder %s33, 1
      %p108 = por %p106, %p107
      %p110 = scmp.ne.s32.totalorder %s93, %s109
      %p111 = scmp.eq.s32.totalorder %s33, 0
      %p112 = por %p110, %p111
      %s114 = sadd.s32 %s113, 1
      %p117 = scmp.eq.s32.totalorder %s27, 1
      %p118 = scmp.ne.s32.totalorder %s113, %s115
      %p119 = scmp.eq.s32.totalorder %s27, 0
      %p120 = por %p118, %p119
      %p121 = scmp.ne.s32.totalorder %s113, %s115
      %p122 = scmp.eq.s32.totalorder %s32, 1
      %p123 = por %p121, %p122
      %p124 = scmp.ne.s32.totalorder %s115, %s116
      %p125 = scmp.eq.s32.totalorder %s32, 0
      %p126 = por %p124, %p125
      %p127 = scmp.ne.s32.totalorder %s115, %s116
      %p128 = scmp.eq.s32.totalorder %s33, 1
      %p129 = por %p127, %p128
      %p131 = scmp.ne.s32.totalorder %s116, %s130
      %p132 = scmp.eq.s32.totalorder %s33, 0
      %p133 = por %p131, %p132
      %s135 = sadd.s32 %s134, 1
      %p138 = scmp.eq.s32.totalorder %s27, 1
      %p139 = scmp.ne.s32.totalorder %s134, %s136
      %p140 = scmp.eq.s32.totalorder %s27, 0
      %p141 = por %p139, %p140
      %p142 = scmp.ne.s32.totalorder %s134, %s136
      %p143 = scmp.eq.s32.totalorder %s32, 1
      %p144 = por %p142, %p143
      %p145 = scmp.ne.s32.totalorder %s136, %s137
      %p146 = scmp.eq.s32.totalorder %s32, 0
      %p147 = por %p145, %p146
      %p148 = scmp.ne.s32.totalorder %s136, %s137
      %p149 = scmp.eq.s32.totalorder %s33, 1
      %p150 = por %p148, %p149
      %p152 = scmp.ne.s32.totalorder %s137, %s151
      %p153 = scmp.eq.s32.totalorder %s33, 0
      %p154 = por %p152, %p153
      %s156 = sadd.s32 %s155, 1
      %p159 = scmp.eq.s32.totalorder %s27, 1
      %p160 = scmp.ne.s32.totalorder %s155, %s157
      %p161 = scmp.eq.s32.totalorder %s27, 0
      %p162 = por %p160, %p161
      %p163 = scmp.ne.s32.totalorder %s155, %s157
      %p164 = scmp.eq.s32.totalorder %s32, 1
      %p165 = por %p163, %p164
      %p166 = scmp.ne.s32.totalorder %s157, %s158
      %p167 = scmp.eq.s32.totalorder %s32, 0
      %p168 = por %p166, %p167
      %p169 = scmp.ne.s32.totalorder %s157, %s158
      %p170 = scmp.eq.s32.totalorder %s33, 1
      %p171 = por %p169, %p170
      %p173 = scmp.ne.s32.totalorder %s158, %s172
      %p174 = scmp.eq.s32.totalorder %s33, 0
      %p175 = por %p173, %p174
      %s177 = sadd.s32 %s176, 1
      %p180 = scmp.eq.s32.totalorder %s27, 1
      %p181 = scmp.ne.s32.totalorder %s176, %s178
      %p182 = scmp.eq.s32.totalorder %s27, 0
      %p183 = por %p181, %p182
      %p184 = scmp.ne.s32.totalorder %s176, %s178
      %p185 = scmp.eq.s32.totalorder %s32, 1
      %p186 = por %p184, %p185
      %p187 = scmp.ne.s32.totalorder %s178, %s179
      %p188 = scmp.eq.s32.totalorder %s32, 0
      %p189 = por %p187, %p188
      %p190 = scmp.ne.s32.totalorder %s178, %s179
      %p191 = scmp.eq.s32.totalorder %s33, 1
      %p192 = por %p190, %p191
      %p194 = scmp.ne.s32.totalorder %s179, %s193
      %p195 = scmp.eq.s32.totalorder %s33, 0
      %p196 = por %p194, %p195
      %s198 = sadd.s32 %s197, 1
      %p201 = scmp.eq.s32.totalorder %s27, 1
      %p202 = scmp.ne.s32.totalorder %s197, %s199
      %p203 = scmp.eq.s32.totalorder %s27, 0
      %p204 = por %p202, %p203
      %p205 = scmp.ne.s32.totalorder %s197, %s199
      %p206 = scmp.eq.s32.totalorder %s32, 1
      %p207 = por %p205, %p206
      %p208 = scmp.ne.s32.totalorder %s199, %s200
      %p209 = scmp.eq.s32.totalorder %s32, 0
      %p210 = por %p208, %p209
      %p211 = scmp.ne.s32.totalorder %s199, %s200
      %p212 = scmp.eq.s32.totalorder %s33, 1
      %p213 = por %p211, %p212
      %p215 = scmp.ne.s32.totalorder %s200, %s214
      %p216 = scmp.eq.s32.totalorder %s33, 0
      %p217 = por %p215, %p216
      %s219 = sadd.s32 %s218, 1
      %p222 = scmp.eq.s32.totalorder %s27, 1
      %p223 = scmp.ne.s32.totalorder %s218, %s220
      %p224 = scmp.eq.s32.totalorder %s27, 0
      %p225 = por %p223, %p224
      %p226 = scmp.ne.s32.totalorder %s218, %s220
      %p227 = scmp.eq.s32.totalorder %s32, 1
      %p228 = por %p226, %p227
      %p229 = scmp.ne.s32.totalorder %s220, %s221
      %p230 = scmp.eq.s32.totalorder %s32, 0
      %p231 = por %p229, %p230
      %p232 = scmp.ne.s32.totalorder %s220, %s221
      %p233 = scmp.eq.s32.totalorder %s33, 1
      %p234 = por %p232, %p233
      %p236 = scmp.ne.s32.totalorder %s221, %s235
      %p237 = scmp.eq.s32.totalorder %s33, 0
      %p238 = por %p236, %p237
      %s240 = sadd.s32 %s239, 1
      %p243 = scmp.eq.s32.totalorder %s27, 1
      %p244 = scmp.ne.s32.totalorder %s239, %s241
      %p245 = scmp.eq.s32.totalorder %s27, 0
      %p246 = por %p244, %p245
      %p247 = scmp.ne.s32.totalorder %s239, %s241
      %p248 = scmp.eq.s32.totalorder %s32, 1
      %p249 = por %p247, %p248
      %p250 = scmp.ne.s32.totalorder %s241, %s242
      %p251 = scmp.eq.s32.totalorder %s32, 0
      %p252 = por %p250, %p251
      %p253 = scmp.ne.s32.totalorder %s241, %s242
      %p254 = scmp.eq.s32.totalorder %s33, 1
      %p255 = por %p253, %p254
      %p257 = scmp.ne.s32.totalorder %s242, %s256
      %p258 = scmp.eq.s32.totalorder %s33, 0
      %p259 = por %p257, %p258
      %s261 = sadd.s32 %s260, 1
      %p264 = scmp.eq.s32.totalorder %s27, 1
      %p265 = scmp.ne.s32.totalorder %s260, %s262
      %p266 = scmp.eq.s32.totalorder %s27, 0
      %p267 = por %p265, %p266
      %p268 = scmp.ne.s32.totalorder %s260, %s262
      %p269 = scmp.eq.s32.totalorder %s32, 1
      %p270 = por %p268, %p269
      %p271 = scmp.ne.s32.totalorder %s262, %s263
      %p272 = scmp.eq.s32.totalorder %s32, 0
      %p273 = por %p271, %p272
      %p274 = scmp.ne.s32.totalorder %s262, %s263
      %p275 = scmp.eq.s32.totalorder %s33, 1
      %p276 = por %p274, %p275
      %p278 = scmp.ne.s32.totalorder %s263, %s277
      %p279 = scmp.eq.s32.totalorder %s33, 0
      %p280 = por %p278, %p279
      %s282 = sadd.s32 %s281, 1
      %p285 = scmp.eq.s32.totalorder %s27, 1
      %p286 = scmp.ne.s32.totalorder %s281, %s283
      %p287 = scmp.eq.s32.totalorder %s27, 0
      %p288 = por %p286, %p287
      %p289 = scmp.ne.s32.totalorder %s281, %s283
      %p290 = scmp.eq.s32.totalorder %s32, 1
      %p291 = por %p289, %p290
      %p292 = scmp.ne.s32.totalorder %s283, %s284
      %p293 = scmp.eq.s32.totalorder %s32, 0
      %p294 = por %p292, %p293
      %p295 = scmp.ne.s32.totalorder %s283, %s284
      %p296 = scmp.eq.s32.totalorder %s33, 1
      %p297 = por %p295, %p296
      %p299 = scmp.ne.s32.totalorder %s284, %s298
      %p300 = scmp.eq.s32.totalorder %s33, 0
      %p301 = por %p299, %p300
      %s303 = sadd.s32 %s302, 1
      %p306 = scmp.eq.s32.totalorder %s27, 1
      %p307 = scmp.ne.s32.totalorder %s302, %s304
      %p308 = scmp.eq.s32.totalorder %s27, 0
      %p309 = por %p307, %p308
      %p310 = scmp.ne.s32.totalorder %s302, %s304
      %p311 = scmp.eq.s32.totalorder %s32, 1
      %p312 = por %p310, %p311
      %p313 = scmp.ne.s32.totalorder %s304, %s305
      %p314 = scmp.eq.s32.totalorder %s32, 0
      %p315 = por %p313, %p314
      %p316 = scmp.ne.s32.totalorder %s304, %s305
      %p317 = scmp.eq.s32.totalorder %s33, 1
      %p318 = por %p316, %p317
      %p320 = scmp.ne.s32.totalorder %s305, %s319
      %p321 = scmp.eq.s32.totalorder %s33, 0
      %p322 = por %p320, %p321
      %s324 = sadd.s32 %s323, 1
      %p327 = scmp.eq.s32.totalorder %s27, 1
      %p328 = scmp.ne.s32.totalorder %s323, %s325
      %p329 = scmp.eq.s32.totalorder %s27, 0
      %p330 = por %p328, %p329
      %p331 = scmp.ne.s32.totalorder %s323, %s325
      %p332 = scmp.eq.s32.totalorder %s32, 1
      %p333 = por %p331, %p332
      %p334 = scmp.ne.s32.totalorder %s325, %s326
      %p335 = scmp.eq.s32.totalorder %s32, 0
      %p336 = por %p334, %p335
      %p337 = scmp.ne.s32.totalorder %s325, %s326
      %p338 = scmp.eq.s32.totalorder %s33, 1
      %p339 = por %p337, %p338
      %p341 = scmp.ne.s32.totalorder %s326, %s340
      %p342 = scmp.eq.s32.totalorder %s33, 0
      %p343 = por %p341, %p342
      %s345 = sadd.s32 %s344, 1
      %p348 = scmp.eq.s32.totalorder %s27, 1
      %p349 = scmp.ne.s32.totalorder %s344, %s346
      %p350 = scmp.eq.s32.totalorder %s27, 0
      %p351 = por %p349, %p350
      %p352 = scmp.ne.s32.totalorder %s344, %s346
      %p353 = scmp.eq.s32.totalorder %s32, 1
      %p354 = por %p352, %p353
      %p355 = scmp.ne.s32.totalorder %s346, %s347
      %p356 = scmp.eq.s32.totalorder %s32, 0
      %p357 = por %p355, %p356
      %p358 = scmp.ne.s32.totalorder %s346, %s347
      %p359 = scmp.eq.s32.totalorder %s33, 1
      %p360 = por %p358, %p359
      %p362 = scmp.ne.s32.totalorder %s347, %s361
      %p363 = scmp.eq.s32.totalorder %s33, 0
      %p364 = por %p362, %p363
      %s365 = ssub.s32 %s27, %s34
      %p366 = scmp.eq.s32.totalorder %s365, 0
      %s368 = sadd.s32 %s367, 1
      %s369 = scalar_select %p366, %s367, %s368
      %p372 = pneg %p366
      %p373 = scmp.eq.s32.totalorder %s27, 1
      %p374 = por %p372, %p373
      %p375 = scmp.ne.s32.totalorder %s367, %s370
      %p376 = scmp.eq.s32.totalorder %s27, 0
      %p377 = por %p375, %p376
      %p378 = scmp.ne.s32.totalorder %s367, %s370
      %p379 = scmp.eq.s32.totalorder %s32, 1
      %p380 = por %p378, %p379
      %p381 = scmp.ne.s32.totalorder %s370, %s371
      %p382 = scmp.eq.s32.totalorder %s32, 0
      %p383 = por %p381, %p382
      %p384 = scmp.ne.s32.totalorder %s370, %s371
      %p385 = scmp.eq.s32.totalorder %s33, 1
      %p386 = por %p384, %p385
      %p388 = scmp.ne.s32.totalorder %s371, %s387
      %p389 = scmp.eq.s32.totalorder %s33, 0
      %p390 = por %p388, %p389
      %p391 = scmp.le.s32.totalorder 1, %s27
      %p392 = scmp.lt.s32.totalorder %s27, 3
      %p393 = pnand %p391, %p392
      %p394 = pneg %p393
      // Predicated region
      $region9: #{tpu_custom_call.1} parent=5 // pred_check
        _
      $region10: #{tpu_custom_call.1} parent=5 // pred_check_branch
        %396 = sbr.rel (%p393) target = $region12
      $region11: #{tpu_custom_call.1} parent=5 // pred_region
        %s397 = ssub.s32 %s27, 1
        // Predicated region
        $region13: #{tpu_custom_call.1} parent=11 // pred_check
          %p398 = pneg %p126
        $region14: #{tpu_custom_call.1} parent=11 // pred_check_branch
          %400 = sbr.rel (%p398) target = $region16
        $region15: #{tpu_custom_call.1} parent=11 // pred_region
          %s402 = ssub.s32 3072, 3072
          %403 = vsyncadd [#allocation3], %s402
          %s404 = sshll.u32 [#allocation2], 4
          %s405 = int_to_ptr.vmem [resolvable:$true] %s404
          %410 = dma.hbm_to_vmem [thread:$0]  %s3, 3072, %s405, [#allocation3], 192, 192, 12
        $region16: #{tpu_custom_call.1} parent=11 // pred_fallthru
          _
        // Predicated region
        $region17: #{tpu_custom_call.1} parent=11 // pred_check
          %p411 = pneg %p147
        $region18: #{tpu_custom_call.1} parent=11 // pred_check_branch
          %413 = sbr.rel (%p411) target = $region20
        $region19: #{tpu_custom_call.1} parent=11 // pred_region
          _
        $region20: #{tpu_custom_call.1} parent=11 // pred_fallthru
          _
        // Predicated region
        $region21: #{tpu_custom_call.1} parent=11 // pred_check
          %p414 = pneg %p168
        $region22: #{tpu_custom_call.1} parent=11 // pred_check_branch
          %416 = sbr.rel (%p414) target = $region24
        $region23: #{tpu_custom_call.1} parent=11 // pred_region
          %s418 = ssub.s32 1024, 1024
          %419 = vsyncadd [#allocation6], %s418
          %s420 = sshll.u32 [#allocation5], 4
          %s421 = int_to_ptr.vmem [resolvable:$true] %s420
          %426 = dma.hbm_to_vmem [thread:$0]  %s5, 1024, %s421, [#allocation6], 64, 64, 4
        $region24: #{tpu_custom_call.1} parent=11 // pred_fallthru
          _
        // Predicated region
        $region25: #{tpu_custom_call.1} parent=11 // pred_check
          %p427 = pneg %p189
        $region26: #{tpu_custom_call.1} parent=11 // pred_check_branch
          %429 = sbr.rel (%p427) target = $region28
        $region27: #{tpu_custom_call.1} parent=11 // pred_region
          _
        $region28: #{tpu_custom_call.1} parent=11 // pred_fallthru
          _
        // Predicated region
        $region29: #{tpu_custom_call.1} parent=11 // pred_check
          %p430 = pneg %p210
        $region30: #{tpu_custom_call.1} parent=11 // pred_check_branch
          %432 = sbr.rel (%p430) target = $region32
        $region31: #{tpu_custom_call.1} parent=11 // pred_region
          %s434 = ssub.s32 2048, 2048
          %435 = vsyncadd [#allocation6], %s434
          %s436 = sshll.u32 [#allocation7], 4
          %s437 = int_to_ptr.vmem [resolvable:$true] %s436
          %442 = dma.hbm_to_vmem [thread:$0]  %s7, 2048, %s437, [#allocation6], 128, 128, 8
        $region32: #{tpu_custom_call.1} parent=11 // pred_fallthru
          _
        // Predicated region
        $region33: #{tpu_custom_call.1} parent=11 // pred_check
          %p443 = pneg %p231
        $region34: #{tpu_custom_call.1} parent=11 // pred_check_branch
          %445 = sbr.rel (%p443) target = $region36
        $region35: #{tpu_custom_call.1} parent=11 // pred_region
          _
        $region36: #{tpu_custom_call.1} parent=11 // pred_fallthru
          _
        // Predicated region
        $region37: #{tpu_custom_call.1} parent=11 // pred_check
          %p446 = pneg %p252
        $region38: #{tpu_custom_call.1} parent=11 // pred_check_branch
          %448 = sbr.rel (%p446) target = $region40
        $region39: #{tpu_custom_call.1} parent=11 // pred_region
          %s450 = ssub.s32 2048, 2048
          %451 = vsyncadd [#allocation9], %s450
          %s452 = sshll.u32 [#allocation8], 4
          %s453 = int_to_ptr.vmem [resolvable:$true] %s452
          %458 = dma.hbm_to_vmem [thread:$0]  %s9, 2048, %s453, [#allocation9], 64, 64, 4
        $region40: #{tpu_custom_call.1} parent=11 // pred_fallthru
          _
        // Predicated region
        $region41: #{tpu_custom_call.1} parent=11 // pred_check
          %p459 = pneg %p273
        $region42: #{tpu_custom_call.1} parent=11 // pred_check_branch
          %461 = sbr.rel (%p459) target = $region44
        $region43: #{tpu_custom_call.1} parent=11 // pred_region
          _
        $region44: #{tpu_custom_call.1} parent=11 // pred_fallthru
          _
        // Predicated region
        $region45: #{tpu_custom_call.1} parent=11 // pred_check
          %p462 = pneg %p294
        $region46: #{tpu_custom_call.1} parent=11 // pred_check_branch
          %464 = sbr.rel (%p462) target = $region48
        $region47: #{tpu_custom_call.1} parent=11 // pred_region
          _
        $region48: #{tpu_custom_call.1} parent=11 // pred_fallthru
          _
        // Predicated region
        $region49: #{tpu_custom_call.1} parent=11 // pred_check
          %p465 = pneg %p315
        $region50: #{tpu_custom_call.1} parent=11 // pred_check_branch
          %467 = sbr.rel (%p465) target = $region52
        $region51: #{tpu_custom_call.1} parent=11 // pred_region
          _
        $region52: #{tpu_custom_call.1} parent=11 // pred_fallthru
          _
        // Predicated region
        $region53: #{tpu_custom_call.1} parent=11 // pred_check
          %p468 = pneg %p336
        $region54: #{tpu_custom_call.1} parent=11 // pred_check_branch
          %470 = sbr.rel (%p468) target = $region56
        $region55: #{tpu_custom_call.1} parent=11 // pred_region
          _
        $region56: #{tpu_custom_call.1} parent=11 // pred_fallthru
          _
        // Predicated region
        $region57: #{tpu_custom_call.1} parent=11 // pred_check
          %p471 = pneg %p357
        $region58: #{tpu_custom_call.1} parent=11 // pred_check_branch
          %473 = sbr.rel (%p471) target = $region60
        $region59: #{tpu_custom_call.1} parent=11 // pred_region
          _
        $region60: #{tpu_custom_call.1} parent=11 // pred_fallthru
          _
      $region12: #{tpu_custom_call.1} parent=5 // pred_fallthru
        _
      %p474 = scmp.lt.s32.totalorder %s27, 2
      // Predicated region
      $region61: #{tpu_custom_call.1} parent=5 // pred_check
        %p475 = pneg %p474
      $region62: #{tpu_custom_call.1} parent=5 // pred_check_branch
        %477 = sbr.rel (%p475) target = $region64
      $region63: #{tpu_custom_call.1} parent=5 // pred_region
        // Predicated region
        $region65: #{tpu_custom_call.1} parent=63 // pred_check
          %p478 = pneg %p47
        $region66: #{tpu_custom_call.1} parent=63 // pred_check_branch
          %480 = sbr.rel (%p478) target = $region68
        $region67: #{tpu_custom_call.1} parent=63 // pred_region
          %s481 = smul.u32 2, %s27
          %p482 = scmp.lt.s32.totalorder %s481, 3
          %s483 = scalar_select %p482, %s481, 3
          %s484 = smul.addr %s483, 4
          %s485 = scalar_lea.vmem %s0, %s484
          %s486 = smul.u32 2, %s27
        $region68: #{tpu_custom_call.1} parent=63 // pred_fallthru
          _
        // Predicated region
        $region69: #{tpu_custom_call.1} parent=63 // pred_check
          %p487 = pneg %p73
        $region70: #{tpu_custom_call.1} parent=63 // pred_check_branch
          %489 = sbr.rel (%p487) target = $region72
        $region71: #{tpu_custom_call.1} parent=63 // pred_region
          %s490 = smul.u32 2, %s27
          %p491 = scmp.lt.s32.totalorder %s490, 3
          %s492 = scalar_select %p491, %s490, 3
          %s493 = scalar_lea.vmem %s1, %s492
          %s494 = smul.u32 2, %s27
        $region72: #{tpu_custom_call.1} parent=63 // pred_fallthru
          _
        // Predicated region
        $region73: #{tpu_custom_call.1} parent=63 // pred_check
          %p495 = pneg %p99
        $region74: #{tpu_custom_call.1} parent=63 // pred_check_branch
          %497 = sbr.rel (%p495) target = $region76
        $region75: #{tpu_custom_call.1} parent=63 // pred_region
          %s498 = smul.u32 2, %s27
          %p499 = scmp.lt.s32.totalorder %s498, 3
          %s500 = scalar_select %p499, %s498, 3
          %s501 = smul.addr %s500, 8
          %s502 = scalar_lea.vmem %s2, %s501
          %s503 = smul.u32 2, %s27
        $region76: #{tpu_custom_call.1} parent=63 // pred_fallthru
          _
      $region64: #{tpu_custom_call.1} parent=5 // pred_fallthru
        _
      %p504 = scmp.le.s32.totalorder 1, %s27
      %p505 = scmp.lt.s32.totalorder %s27, 3
      %p506 = pnand %p504, %p505
      %p507 = pneg %p506
      // Predicated region
      $region77: #{tpu_custom_call.1} parent=5 // pred_check
        _
      $region78: #{tpu_custom_call.1} parent=5 // pred_check_branch
        %509 = sbr.rel (%p506) target = $region80
      $region79: #{tpu_custom_call.1} parent=5 // pred_region
        %s510 = ssub.s32 %s27, 1
        // Predicated region
        $region81: #{tpu_custom_call.1} parent=79 // pred_check
          %p511 = pneg %p126
        $region82: #{tpu_custom_call.1} parent=79 // pred_check_branch
          %513 = sbr.rel (%p511) target = $region84
        $region83: #{tpu_custom_call.1} parent=79 // pred_region
          %514 = dma.done [#allocation3], 3072
        $region84: #{tpu_custom_call.1} parent=79 // pred_fallthru
          _
        // Predicated region
        $region85: #{tpu_custom_call.1} parent=79 // pred_check
          %p515 = pneg %p168
        $region86: #{tpu_custom_call.1} parent=79 // pred_check_branch
          %517 = sbr.rel (%p515) target = $region88
        $region87: #{tpu_custom_call.1} parent=79 // pred_region
          %518 = dma.done [#allocation6], 1024
        $region88: #{tpu_custom_call.1} parent=79 // pred_fallthru
          _
        // Predicated region
        $region89: #{tpu_custom_call.1} parent=79 // pred_check
          %p519 = pneg %p210
        $region90: #{tpu_custom_call.1} parent=79 // pred_check_branch
          %521 = sbr.rel (%p519) target = $region92
        $region91: #{tpu_custom_call.1} parent=79 // pred_region
          %522 = dma.done [#allocation6], 2048
        $region92: #{tpu_custom_call.1} parent=79 // pred_fallthru
          _
        // Predicated region
        $region93: #{tpu_custom_call.1} parent=79 // pred_check
          %p523 = pneg %p252
        $region94: #{tpu_custom_call.1} parent=79 // pred_check_branch
          %525 = sbr.rel (%p523) target = $region96
        $region95: #{tpu_custom_call.1} parent=79 // pred_region
          %526 = dma.done [#allocation9], 2048
        $region96: #{tpu_custom_call.1} parent=79 // pred_fallthru
          _
        %s527 = smul.u32 2, %s32
        %p528 = scmp.lt.s32.totalorder %s527, 3
        %s529 = scalar_select %p528, %s527, 3
        %s530 = smul.addr %s529, 4
        %s531 = scalar_lea.vmem %s0, %s530
        %p532 = pneg %p53
        %p533 = pneg %p50
        %s534 = smul.u32 2, %s32
        %p535 = scmp.lt.s32.totalorder %s534, 3
        %s536 = scalar_select %p535, %s534, 3
        %s537 = scalar_lea.vmem %s1, %s536
        %p538 = pneg %p79
        %p539 = pneg %p76
        %s540 = smul.u32 2, %s32
        %p541 = scmp.lt.s32.totalorder %s540, 3
        %s542 = scalar_select %p541, %s540, 3
        %s543 = smul.addr %s542, 8
        %s544 = scalar_lea.vmem %s2, %s543
        %p545 = pneg %p105
        %p546 = pneg %p102
        %p547 = pneg %p126
        %p548 = pneg %p123
        %p549 = pneg %p147
        %p550 = pneg %p144
        %p551 = pneg %p168
        %p552 = pneg %p165
        %p553 = pneg %p189
        %p554 = pneg %p186
        %p555 = pneg %p210
        %p556 = pneg %p207
        %p557 = pneg %p231
        %p558 = pneg %p228
        %p559 = pneg %p252
        %p560 = pneg %p249
        %p561 = pneg %p273
        %p562 = pneg %p270
        %p563 = pneg %p294
        %p564 = pneg %p291
        %p565 = pneg %p315
        %p566 = pneg %p312
        %p567 = pneg %p336
        %p568 = pneg %p333
        %p569 = pneg %p357
        %p570 = pneg %p354
        %p571 = pneg %p383
        %p572 = pneg %p380
        %s573 = sand.u32 %s370, 1
        %s574 = scalar_lea.sflag [#allocation4], %s573
        %s575 = sand.u32 %s370, 1
        %s576 = smul.addr %s575, 8
        %s577 = scalar_lea.vmem [#allocation10], %s576
        %s578 = smul.u32 2, %s32
        %p579 = scmp.lt.s32.totalorder %s578, 3
        %s580 = scalar_select %p579, %s578, 3
        %s581 = smul.addr %s580, 4
        %s582 = scalar_lea.vmem %s0, %s581
        %s583 = smul.u32 2, %s32
        %s584 = smul.u32 2, %s32
        %p585 = scmp.lt.s32.totalorder %s584, 3
        %s586 = scalar_select %p585, %s584, 3
        %s587 = scalar_lea.vmem %s1, %s586
        %s588 = smul.u32 2, %s32
        %s589 = smul.u32 2, %s32
        %p590 = scmp.lt.s32.totalorder %s589, 3
        %s591 = scalar_select %p590, %s589, 3
        %s592 = smul.addr %s591, 8
        %s593 = scalar_lea.vmem %s2, %s592
        %s594 = smul.u32 2, %s32
        %s595 = smul.u32 2, %s32
        %v597 = vld [vmem:[%s582] sm:$0xf]
        %v598 = vld [vmem:[%s582 + $0x4] sm:$0xf]
        %v599 = vunpack.c.l.bf16 %v597
        %v600 = vunpack.c.l.bf16 %v598
        %v601 = vld [vmem:[#allocation2] sm:$0xff]
        %v602 = vld [vmem:[#allocation2 + $0x8] sm:$0xf]
        %v603 = vld [vmem:[#allocation2 + $0xc] sm:$0xff]
        %v604 = vld [vmem:[#allocation2 + $0x14] sm:$0xf]
        %v605 = vld [vmem:[#allocation2 + $0x18] sm:$0xff]
        %v606 = vld [vmem:[#allocation2 + $0x20] sm:$0xf]
        %v607 = vld [vmem:[#allocation2 + $0x24] sm:$0xff]
        %v608 = vld [vmem:[#allocation2 + $0x2c] sm:$0xf]
        %v609 = vld [vmem:[#allocation2 + $0x30] sm:$0xff]
        %v610 = vld [vmem:[#allocation2 + $0x38] sm:$0xf]
        %v611 = vld [vmem:[#allocation2 + $0x3c] sm:$0xff]
        %v612 = vld [vmem:[#allocation2 + $0x44] sm:$0xf]
        %v613 = vld [vmem:[#allocation2 + $0x48] sm:$0xff]
        %v614 = vld [vmem:[#allocation2 + $0x50] sm:$0xf]
        %v615 = vld [vmem:[#allocation2 + $0x54] sm:$0xff]
        %v616 = vld [vmem:[#allocation2 + $0x5c] sm:$0xf]
        %v617 = vld [vmem:[#allocation2 + $0x60] sm:$0xff]
        %v618 = vld [vmem:[#allocation2 + $0x68] sm:$0xf]
        %v619 = vld [vmem:[#allocation2 + $0x6c] sm:$0xff]
        %v620 = vld [vmem:[#allocation2 + $0x74] sm:$0xf]
        %v621 = vld [vmem:[#allocation2 + $0x78] sm:$0xff]
        %v622 = vld [vmem:[#allocation2 + $0x80] sm:$0xf]
        %v623 = vld [vmem:[#allocation2 + $0x84] sm:$0xff]
        %v624 = vld [vmem:[#allocation2 + $0x8c] sm:$0xf]
        %v625 = vld [vmem:[#allocation2 + $0x90] sm:$0xff]
        %v626 = vld [vmem:[#allocation2 + $0x98] sm:$0xf]
        %v627 = vld [vmem:[#allocation2 + $0x9c] sm:$0xff]
        %v628 = vld [vmem:[#allocation2 + $0xa4] sm:$0xf]
        %v629 = vld [vmem:[#allocation2 + $0xa8] sm:$0xff]
        %v630 = vld [vmem:[#allocation2 + $0xb0] sm:$0xf]
        %v631 = vld [vmem:[#allocation2 + $0xb4] sm:$0xff]
        %v632 = vld [vmem:[#allocation2 + $0xbc] sm:$0xf]
        %v633 = vld [vmem:[%s4] sm:$0x7]
        %v635 = vlaneseq
        %v636 = vshrl.u32 %v635, 7
        %v637 = vsub.s32 0, %v636
        %v638 = vrot.slane %v633, %v637
        %v639 = vlaneseq
        %v640 = vshrl.u32 %v639, 7
        %v641 = vsub.s32 1, %v640
        %v642 = vrot.slane %v633, %v641
        %v643 = vlaneseq
        %v644 = vshrl.u32 %v643, 7
        %v645 = vsub.s32 2, %v644
        %v646 = vrot.slane %v633, %v645
        %v652 = vunpack.c.l.b16 %v597
        %v653 = vunpack.c.l.b16 %v598
        %v654 = vpack.c.b16 %v653, %v652
        %v688 = vunpack.c.l.b16 %v601
        %v689 = vunpack.c.h.b16 %v601
        %v690 = vunpack.c.l.b16 %v602
        %v691 = vunpack.c.l.b16 %v603
        %v692 = vunpack.c.h.b16 %v603
        %v693 = vunpack.c.l.b16 %v604
        %v694 = vunpack.c.l.b16 %v605
        %v695 = vunpack.c.h.b16 %v605
        %v696 = vunpack.c.l.b16 %v606
        %v697 = vunpack.c.l.b16 %v607
        %v698 = vunpack.c.h.b16 %v607
        %v699 = vunpack.c.l.b16 %v608
        %v700 = vunpack.c.l.b16 %v609
        %v701 = vunpack.c.h.b16 %v609
        %v702 = vunpack.c.l.b16 %v610
        %v703 = vunpack.c.l.b16 %v611
        %v704 = vunpack.c.h.b16 %v611
        %v705 = vunpack.c.l.b16 %v612
        %v706 = vunpack.c.l.b16 %v613
        %v707 = vunpack.c.h.b16 %v613
        %v708 = vunpack.c.l.b16 %v614
        %v709 = vunpack.c.l.b16 %v615
        %v710 = vunpack.c.h.b16 %v615
        %v711 = vunpack.c.l.b16 %v616
        %v712 = vunpack.c.l.b16 %v617
        %v713 = vunpack.c.h.b16 %v617
        %v714 = vunpack.c.l.b16 %v618
        %v715 = vunpack.c.l.b16 %v619
        %v716 = vunpack.c.h.b16 %v619
        %v717 = vunpack.c.l.b16 %v620
        %v718 = vunpack.c.l.b16 %v621
        %v719 = vunpack.c.h.b16 %v621
        %v720 = vunpack.c.l.b16 %v622
        %v721 = vunpack.c.l.b16 %v623
        %v722 = vunpack.c.h.b16 %v623
        %v723 = vunpack.c.l.b16 %v624
        %v724 = vunpack.c.l.b16 %v625
        %v725 = vunpack.c.h.b16 %v625
        %v726 = vunpack.c.l.b16 %v626
        %v727 = vunpack.c.l.b16 %v627
        %v728 = vunpack.c.h.b16 %v627
        %v729 = vunpack.c.l.b16 %v628
        %v730 = vunpack.c.l.b16 %v629
        %v731 = vunpack.c.h.b16 %v629
        %v732 = vunpack.c.l.b16 %v630
        %v733 = vunpack.c.l.b16 %v631
        %v734 = vunpack.c.h.b16 %v631
        %v735 = vunpack.c.l.b16 %v632
        %v736 = vpack.c.b16 %v691, %v688
        %v737 = vpack.c.b16 %v692, %v689
        %v738 = vpack.c.b16 %v693, %v690
        %v739 = vpack.c.b16 %v697, %v694
        %v740 = vpack.c.b16 %v698, %v695
        %v741 = vpack.c.b16 %v699, %v696
        %v742 = vpack.c.b16 %v703, %v700
        %v743 = vpack.c.b16 %v704, %v701
        %v744 = vpack.c.b16 %v705, %v702
        %v745 = vpack.c.b16 %v709, %v706
        %v746 = vpack.c.b16 %v710, %v707
        %v747 = vpack.c.b16 %v711, %v708
        %v748 = vpack.c.b16 %v715, %v712
        %v749 = vpack.c.b16 %v716, %v713
        %v750 = vpack.c.b16 %v717, %v714
        %v751 = vpack.c.b16 %v721, %v718
        %v752 = vpack.c.b16 %v722, %v719
        %v753 = vpack.c.b16 %v723, %v720
        %v754 = vpack.c.b16 %v727, %v724
        %v755 = vpack.c.b16 %v728, %v725
        %v756 = vpack.c.b16 %v729, %v726
        %v757 = vpack.c.b16 %v733, %v730
        %v758 = vpack.c.b16 %v734, %v731
        %v759 = vpack.c.b16 %v735, %v732
        %784 = vmatprep.subr.bf16.mxu0 %v737
        %785 = vmatpush1.bf16.msra.mxu0 %v736
        %786 = vmatprep.subr.bf16.mxu0 %v740
        %787 = vmatpush1.bf16.msra.mxu0 %v739
        %788 = vmatprep.subr.bf16.mxu0 %v743
        %789 = vmatpush1.bf16.msra.mxu0 %v742
        %790 = vmatprep.subr.bf16.mxu0 %v746
        %791 = vmatpush1.bf16.msra.mxu0 %v745
        %792 = vmatprep.subr.bf16.mxu0 %v749
        %793 = vmatpush1.bf16.msra.mxu0 %v748
        %794 = vmatprep.subr.bf16.mxu0 %v752
        %795 = vmatpush1.bf16.msra.mxu0 %v751
        %796 = vmatprep.subr.bf16.mxu0 %v755
        %797 = vmatpush1.bf16.msra.mxu0 %v754
        %798 = vmatprep.subr.bf16.mxu0 %v758
        %799 = vmatpush1.bf16.msra.mxu0 %v757
        %800 = vmatprep.subr.bf16.mxu0 0
        %801 = vmatpush1.bf16.msra.mxu0 0
        %802 = vmatprep.subr.bf16.mxu0 0
        %803 = vmatpush1.bf16.msra.mxu0 0
        %804 = vmatprep.subr.bf16.mxu0 0
        %805 = vmatpush1.bf16.msra.mxu0 0
        %806 = vmatprep.subr.bf16.mxu0 0
        %807 = vmatpush1.bf16.msra.mxu0 0
        %808 = vmatprep.subr.bf16.mxu0 0
        %809 = vmatpush1.bf16.msra.mxu0 0
        %810 = vmatprep.subr.bf16.mxu0 0
        %811 = vmatpush1.bf16.msra.mxu0 0
        %812 = vmatprep.subr.bf16.mxu0 0
        %813 = vmatpush1.bf16.msra.mxu0 0
        %814 = vmatprep.subr.bf16.mxu0 0
        %815 = vmatpush1.bf16.msra.mxu0 0
        %816 = vmatprep.mubr.bf16.mxu0 0
        %817 = vmatmul.mubr.bf16.gmra.mrb[0].mxu0 %v654
        %v818 = vpop.f32.mrb[0].mxu0
        %v819 = vadd.f32 %v638, %v818
        %v820 = vpop.f32.mrb[0].mxu0
        %v821 = vadd.f32 %v642, %v820
        %v822 = vpop.f32.mrb[0].mxu0
        %v823 = vadd.f32 %v638, %v822
        %v824 = vpop.f32.mrb[0].mxu0
        %v825 = vadd.f32 %v642, %v824
        %826 = vdwg.mxu0
        %827 = vmatprep.subr.bf16.mxu0 0
        %828 = vmatpush1.bf16.msra.mxu0 %v738
        %829 = vmatprep.subr.bf16.mxu0 0
        %830 = vmatpush1.bf16.msra.mxu0 %v741
        %831 = vmatprep.subr.bf16.mxu0 0
        %832 = vmatpush1.bf16.msra.mxu0 %v744
        %833 = vmatprep.subr.bf16.mxu0 0
        %834 = vmatpush1.bf16.msra.mxu0 %v747
        %835 = vmatprep.subr.bf16.mxu0 0
        %836 = vmatpush1.bf16.msra.mxu0 %v750
        %837 = vmatprep.subr.bf16.mxu0 0
        %838 = vmatpush1.bf16.msra.mxu0 %v753
        %839 = vmatprep.subr.bf16.mxu0 0
        %840 = vmatpush1.bf16.msra.mxu0 %v756
        %841 = vmatprep.subr.bf16.mxu0 0
        %842 = vmatpush1.bf16.msra.mxu0 %v759
        %843 = vmatprep.subr.bf16.mxu0 0
        %844 = vmatpush1.bf16.msra.mxu0 0
        %845 = vmatprep.subr.bf16.mxu0 0
        %846 = vmatpush1.bf16.msra.mxu0 0
        %847 = vmatprep.subr.bf16.mxu0 0
        %848 = vmatpush1.bf16.msra.mxu0 0
        %849 = vmatprep.subr.bf16.mxu0 0
        %850 = vmatpush1.bf16.msra.mxu0 0
        %851 = vmatprep.subr.bf16.mxu0 0
        %852 = vmatpush1.bf16.msra.mxu0 0
        %853 = vmatprep.subr.bf16.mxu0 0
        %854 = vmatpush1.bf16.msra.mxu0 0
        %855 = vmatprep.subr.bf16.mxu0 0
        %856 = vmatpush1.bf16.msra.mxu0 0
        %857 = vmatprep.subr.bf16.mxu0 0
        %858 = vmatpush1.bf16.msra.mxu0 0
        %859 = vmatprep.mubr.bf16.mxu0 0
        %860 = vmatmul.mubr.bf16.gmra.mrb[0].mxu0 %v654
        %v861 = vpop.f32.mrb[0].mxu0
        %v862 = vadd.f32 %v646, %v861
        %v863 = vpop.f32.mrb[0].mxu0
        %v864 = vpop.f32.mrb[0].mxu0
        %v865 = vadd.f32 %v646, %v864
        %v866 = vpop.f32.mrb[0].mxu0
        %867 = vdwg.mxu0
        %870 = vrot.lane.b32.xlu0 %v819, 96
        %v871 = vpop.permute.xlu0 %870
        %872 = vrot.lane.b32.xlu0 %v823, 96
        %v873 = vpop.permute.xlu0 %872
        %876 = vrot.lane.b32.xlu0 %v819, 64
        %v877 = vpop.permute.xlu0 %876
        %878 = vrot.lane.b32.xlu0 %v823, 64
        %v879 = vpop.permute.xlu0 %878
        %882 = vrot.lane.b32.xlu0 %v819, 32
        %v883 = vpop.permute.xlu0 %882
        %884 = vrot.lane.b32.xlu0 %v823, 32
        %v885 = vpop.permute.xlu0 %884
        %v888 = vpack.c.bf16 %v819, %v819
        %v889 = vpack.c.bf16 %v823, %v823
        %v890 = vpack.c.bf16 %v871, %v871
        %v891 = vpack.c.bf16 %v873, %v873
        %v892 = vpack.c.bf16 %v877, %v877
        %v893 = vpack.c.bf16 %v879, %v879
        %v894 = vpack.c.bf16 %v883, %v883
        %v895 = vpack.c.bf16 %v885, %v885
        %898 = vrot.lane.b32.xlu0 %v821, 96
        %v899 = vpop.permute.xlu0 %898
        %900 = vrot.lane.b32.xlu0 %v825, 96
        %v901 = vpop.permute.xlu0 %900
        %904 = vrot.lane.b32.xlu0 %v821, 64
        %v905 = vpop.permute.xlu0 %904
        %906 = vrot.lane.b32.xlu0 %v825, 64
        %v907 = vpop.permute.xlu0 %906
        %910 = vrot.lane.b32.xlu0 %v821, 32
        %v911 = vpop.permute.xlu0 %910
        %912 = vrot.lane.b32.xlu0 %v825, 32
        %v913 = vpop.permute.xlu0 %912
        %v916 = vpack.c.bf16 %v821, %v821
        %v917 = vpack.c.bf16 %v825, %v825
        %v918 = vpack.c.bf16 %v899, %v899
        %v919 = vpack.c.bf16 %v901, %v901
        %v920 = vpack.c.bf16 %v905, %v905
        %v921 = vpack.c.bf16 %v907, %v907
        %v922 = vpack.c.bf16 %v911, %v911
        %v923 = vpack.c.bf16 %v913, %v913
        %926 = vrot.lane.b32.xlu0 %v862, 96
        %v927 = vpop.permute.xlu0 %926
        %928 = vrot.lane.b32.xlu0 %v865, 96
        %v929 = vpop.permute.xlu0 %928
        %932 = vrot.lane.b32.xlu0 %v862, 64
        %v933 = vpop.permute.xlu0 %932
        %934 = vrot.lane.b32.xlu0 %v865, 64
        %v935 = vpop.permute.xlu0 %934
        %938 = vrot.lane.b32.xlu0 %v862, 32
        %v939 = vpop.permute.xlu0 %938
        %940 = vrot.lane.b32.xlu0 %v865, 32
        %v941 = vpop.permute.xlu0 %940
        %v944 = vpack.c.bf16 %v862, %v862
        %v945 = vpack.c.bf16 %v865, %v865
        %v946 = vpack.c.bf16 %v927, %v927
        %v947 = vpack.c.bf16 %v929, %v929
        %v948 = vpack.c.bf16 %v933, %v933
        %v949 = vpack.c.bf16 %v935, %v935
        %v950 = vpack.c.bf16 %v939, %v939
        %v951 = vpack.c.bf16 %v941, %v941
        %vm952 = vcmask 261120
        %v954 = vsel %vm952, %v888, 0
        %v957 = vsel %vm952, %v916, 0
        %959 = vmatprep.subr.bf16.mxu0 0
        %960 = vmatpush1.bf16.xpose.msra.mxu0 %v957
        %961 = vmatprep.subr.bf16.mxu0 0
        %962 = vmatpush1.bf16.xpose.msra.mxu0 0
        %963 = vmatprep.subr.bf16.mxu0 0
        %964 = vmatpush1.bf16.xpose.msra.mxu0 0
        %965 = vmatprep.subr.bf16.mxu0 0
        %966 = vmatpush1.bf16.xpose.msra.mxu0 0
        %967 = vmatprep.subr.bf16.mxu0 0
        %968 = vmatpush1.bf16.xpose.msra.mxu0 0
        %969 = vmatprep.subr.bf16.mxu0 0
        %970 = vmatpush1.bf16.xpose.msra.mxu0 0
        %971 = vmatprep.subr.bf16.mxu0 0
        %972 = vmatpush1.bf16.xpose.msra.mxu0 0
        %973 = vmatprep.subr.bf16.mxu0 0
        %974 = vmatpush1.bf16.xpose.msra.mxu0 0
        %975 = vmatprep.subr.bf16.mxu0 0
        %976 = vmatpush1.bf16.xpose.msra.mxu0 0
        %977 = vmatprep.subr.bf16.mxu0 0
        %978 = vmatpush1.bf16.xpose.msra.mxu0 0
        %979 = vmatprep.subr.bf16.mxu0 0
        %980 = vmatpush1.bf16.xpose.msra.mxu0 0
        %981 = vmatprep.subr.bf16.mxu0 0
        %982 = vmatpush1.bf16.xpose.msra.mxu0 0
        %983 = vmatprep.subr.bf16.mxu0 0
        %984 = vmatpush1.bf16.xpose.msra.mxu0 0
        %985 = vmatprep.subr.bf16.mxu0 0
        %986 = vmatpush1.bf16.xpose.msra.mxu0 0
        %987 = vmatprep.subr.bf16.mxu0 0
        %988 = vmatpush1.bf16.xpose.msra.mxu0 0
        %989 = vmatprep.subr.bf16.mxu0 0
        %990 = vmatpush1.bf16.xpose.msra.mxu0 0
        %991 = vmatprep.mubr.bf16.mxu0 0
        %992 = vmatmul.mubr.bf16.gmra.mrb[0].mxu0 %v954
        %v993 = vpop.f32.mrb[0].mxu0
        %v994 = vadd.f32 0.0, %v993
        %v995 = vpop.f32.mrb[0].mxu0
        %v996 = vpop.f32.mrb[0].mxu0
        %v997 = vpop.f32.mrb[0].mxu0
        %998 = vdwg.mxu0
        %v1000 = vsel %vm952, %v889, 0
        %v1003 = vsel %vm952, %v917, 0
        %1005 = vmatprep.subr.bf16.mxu0 0
        %1006 = vmatpush1.bf16.xpose.msra.mxu0 %v1003
        %1007 = vmatprep.subr.bf16.mxu0 0
        %1008 = vmatpush1.bf16.xpose.msra.mxu0 0
        %1009 = vmatprep.subr.bf16.mxu0 0
        %1010 = vmatpush1.bf16.xpose.msra.mxu0 0
        %1011 = vmatprep.subr.bf16.mxu0 0
        %1012 = vmatpush1.bf16.xpose.msra.mxu0 0
        %1013 = vmatprep.subr.bf16.mxu0 0
        %1014 = vmatpush1.bf16.xpose.msra.mxu0 0
        %1015 = vmatprep.subr.bf16.mxu0 0
        %1016 = vmatpush1.bf16.xpose.msra.mxu0 0
        %1017 = vmatprep.subr.bf16.mxu0 0
        %1018 = vmatpush1.bf16.xpose.msra.mxu0 0
        %1019 = vmatprep.subr.bf16.mxu0 0
        %1020 = vmatpush1.bf16.xpose.msra.mxu0 0
        %1021 = vmatprep.subr.bf16.mxu0 0
        %1022 = vmatpush1.bf16.xpose.msra.mxu0 0
        %1023 = vmatprep.subr.bf16.mxu0 0
        %1024 = vmatpush1.bf16.xpose.msra.mxu0 0
        %1025 = vmatprep.subr.bf16.mxu0 0
        %1026 = vmatpush1.bf16.xpose.msra.mxu0 0
        %1027 = vmatprep.subr.bf16.mxu0 0
        %1028 = vmatpush1.bf16.xpose.msra.mxu0 0
        %1029 = vmatprep.subr.bf16.mxu0 0
        %1030 = vmatpush1.bf16.xpose.msra.mxu0 0
        %1031 = vmatprep.subr.bf16.mxu0 0
        %1032 = vmatpush1.bf16.xpose.msra.mxu0 0
        %1033 = vmatprep.subr.bf16.mxu0 0
        %1034 = vmatpush1.bf16.xpose.msra.mxu0 0
        %1035 = vmatprep.subr.bf16.mxu0 0
        %1036 = vmatpush1.bf16.xpose.msra.mxu0 0
        %1037 = vmatprep.mubr.bf16.mxu0 0
        %1038 = vmatmul.mubr.bf16.gmra.mrb[0].mxu0 %v1000
        %v1039 = vpop.f32.mrb[0].mxu0
        %v1040 = vadd.f32 0.0, %v1039
        %v1041 = vpop.f32.mrb[0].mxu0
        %v1042 = vpop.f32.mrb[0].mxu0
        %v1043 = vpop.f32.mrb[0].mxu0
        %1044 = vdwg.mxu0
        %v1046 = vsel %vm952, %v890, 0
        %v1049 = vsel %vm952, %v918, 0
        %1051 = vmatprep.subr.bf16.mxu0 0
        %1052 = vmatpush1.bf16.xpose.msra.mxu0 %v1049
        %1053 = vmatprep.subr.bf16.mxu0 0
        %1054 = vmatpush1.bf16.xpose.msra.mxu0 0
        %1055 = vmatprep.subr.bf16.mxu0 0
        %1056 = vmatpush1.bf16.xpose.msra.mxu0 0
        %1057 = vmatprep.subr.bf16.mxu0 0
        %1058 = vmatpush1.bf16.xpose.msra.mxu0 0
        %1059 = vmatprep.subr.bf16.mxu0 0
        %1060 = vmatpush1.bf16.xpose.msra.mxu0 0
        %1061 = vmatprep.subr.bf16.mxu0 0
        %1062 = vmatpush1.bf16.xpose.msra.mxu0 0
        %1063 = vmatprep.subr.bf16.mxu0 0
        %1064 = vmatpush1.bf16.xpose.msra.mxu0 0
        %1065 = vmatprep.subr.bf16.mxu0 0
        %1066 = vmatpush1.bf16.xpose.msra.mxu0 0
        %1067 = vmatprep.subr.bf16.mxu0 0
        %1068 = vmatpush1.bf16.xpose.msra.mxu0 0
        %1069 = vmatprep.subr.bf16.mxu0 0
        %1070 = vmatpush1.bf16.xpose.msra.mxu0 0
        %1071 = vmatprep.subr.bf16.mxu0 0
        %1072 = vmatpush1.bf16.xpose.msra.mxu0 0
        %1073 = vmatprep.subr.bf16.mxu0 0
        %1074 = vmatpush1.bf16.xpose.msra.mxu0 0
        %1075 = vmatprep.subr.bf16.mxu0 0
        %1076 = vmatpush1.bf16.xpose.msra.mxu0 0
        %1077 = vmatprep.subr.bf16.mxu0 0
        %1078 = vmatpush1.bf16.xpose.msra.mxu0 0
        %1079 = vmatprep.subr.bf16.mxu0 0
        %1080 = vmatpush1.bf16.xpose.msra.mxu0 0
        %1081 = vmatprep.subr.bf16.mxu0 0
        %1082 = vmatpush1.bf16.xpose.msra.mxu0 0
        %1083 = vmatprep.mubr.bf16.mxu0 0
        %1084 = vmatmul.mubr.bf16.gmra.mrb[0].mxu0 %v1046
        %v1085 = vpop.f32.mrb[0].mxu0
        %v1086 = vadd.f32 0.0, %v1085
        %v1087 = vpop.f32.mrb[0].mxu0
        %v1088 = vpop.f32.mrb[0].mxu0
        %v1089 = vpop.f32.mrb[0].mxu0
        %1090 = vdwg.mxu0
        %v1092 = vsel %vm952, %v891, 0
        %v1095 = vsel %vm952, %v919, 0
        %1097 = vmatprep.subr.bf16.mxu0 0
        %1098 = vmatpush1.bf16.xpose.msra.mxu0 %v1095
        %1099 = vmatprep.subr.bf16.mxu0 0
        %1100 = vmatpush1.bf16.xpose.msra.mxu0 0
        %1101 = vmatprep.subr.bf16.mxu0 0
        %1102 = vmatpush1.bf16.xpose.msra.mxu0 0
        %1103 = vmatprep.subr.bf16.mxu0 0
        %1104 = vmatpush1.bf16.xpose.msra.mxu0 0
        %1105 = vmatprep.subr.bf16.mxu0 0
        %1106 = vmatpush1.bf16.xpose.msra.mxu0 0
        %1107 = vmatprep.subr.bf16.mxu0 0
        %1108 = vmatpush1.bf16.xpose.msra.mxu0 0
        %1109 = vmatprep.subr.bf16.mxu0 0
        %1110 = vmatpush1.bf16.xpose.msra.mxu0 0
        %1111 = vmatprep.subr.bf16.mxu0 0
        %1112 = vmatpush1.bf16.xpose.msra.mxu0 0
        %1113 = vmatprep.subr.bf16.mxu0 0
        %1114 = vmatpush1.bf16.xpose.msra.mxu0 0
        %1115 = vmatprep.subr.bf16.mxu0 0
        %1116 = vmatpush1.bf16.xpose.msra.mxu0 0
        %1117 = vmatprep.subr.bf16.mxu0 0
        %1118 = vmatpush1.bf16.xpose.msra.mxu0 0
        %1119 = vmatprep.subr.bf16.mxu0 0
        %1120 = vmatpush1.bf16.xpose.msra.mxu0 0
        %1121 = vmatprep.subr.bf16.mxu0 0
        %1122 = vmatpush1.bf16.xpose.msra.mxu0 0
        %1123 = vmatprep.subr.bf16.mxu0 0
        %1124 = vmatpush1.bf16.xpose.msra.mxu0 0
        %1125 = vmatprep.subr.bf16.mxu0 0
        %1126 = vmatpush1.bf16.xpose.msra.mxu0 0
        %1127 = vmatprep.subr.bf16.mxu0 0
        %1128 = vmatpush1.bf16.xpose.msra.mxu0 0
        %1129 = vmatprep.mubr.bf16.mxu0 0
        %1130 = vmatmul.mubr.bf16.gmra.mrb[0].mxu0 %v1092
        %v1131 = vpop.f32.mrb[0].mxu0
        %v1132 = vadd.f32 0.0, %v1131
        %v1133 = vpop.f32.mrb[0].mxu0
        %v1134 = vpop.f32.mrb[0].mxu0
        %v1135 = vpop.f32.mrb[0].mxu0
        %1136 = vdwg.mxu0
        %v1138 = vsel %vm952, %v892, 0
        %v1141 = vsel %vm952, %v920, 0
        %1143 = vmatprep.subr.bf16.mxu0 0
        %1144 = vmatpush1.bf16.xpose.msra.mxu0 %v1141
        %1145 = vmatprep.subr.bf16.mxu0 0
        %1146 = vmatpush1.bf16.xpose.msra.mxu0 0
        %1147 = vmatprep.subr.bf16.mxu0 0
        %1148 = vmatpush1.bf16.xpose.msra.mxu0 0
        %1149 = vmatprep.subr.bf16.mxu0 0
        %1150 = vmatpush1.bf16.xpose.msra.mxu0 0
        %1151 = vmatprep.subr.bf16.mxu0 0
        %1152 = vmatpush1.bf16.xpose.msra.mxu0 0
        %1153 = vmatprep.subr.bf16.mxu0 0
        %1154 = vmatpush1.bf16.xpose.msra.mxu0 0
        %1155 = vmatprep.subr.bf16.mxu0 0
        %1156 = vmatpush1.bf16.xpose.msra.mxu0 0
        %1157 = vmatprep.subr.bf16.mxu0 0
        %1158 = vmatpush1.bf16.xpose.msra.mxu0 0
        %1159 = vmatprep.subr.bf16.mxu0 0
        %1160 = vmatpush1.bf16.xpose.msra.mxu0 0
        %1161 = vmatprep.subr.bf16.mxu0 0
        %1162 = vmatpush1.bf16.xpose.msra.mxu0 0
        %1163 = vmatprep.subr.bf16.mxu0 0
        %1164 = vmatpush1.bf16.xpose.msra.mxu0 0
        %1165 = vmatprep.subr.bf16.mxu0 0
        %1166 = vmatpush1.bf16.xpose.msra.mxu0 0
        %1167 = vmatprep.subr.bf16.mxu0 0
        %1168 = vmatpush1.bf16.xpose.msra.mxu0 0
        %1169 = vmatprep.subr.bf16.mxu0 0
        %1170 = vmatpush1.bf16.xpose.msra.mxu0 0
        %1171 = vmatprep.subr.bf16.mxu0 0
        %1172 = vmatpush1.bf16.xpose.msra.mxu0 0
        %1173 = vmatprep.subr.bf16.mxu0 0
        %1174 = vmatpush1.bf16.xpose.msra.mxu0 0
        %1175 = vmatprep.mubr.bf16.mxu0 0
        %1176 = vmatmul.mubr.bf16.gmra.mrb[0].mxu0 %v1138
        %v1177 = vpop.f32.mrb[0].mxu0
        %v1178 = vadd.f32 0.0, %v1177
        %v1179 = vpop.f32.mrb[0].mxu0
        %v1180 = vpop.f32.mrb[0].mxu0
        %v1181 = vpop.f32.mrb[0].mxu0
        %1182 = vdwg.mxu0
        %v1184 = vsel %vm952, %v893, 0
        %v1187 = vsel %vm952, %v921, 0
        %1189 = vmatprep.subr.bf16.mxu0 0
        %1190 = vmatpush1.bf16.xpose.msra.mxu0 %v1187
        %1191 = vmatprep.subr.bf16.mxu0 0
        %1192 = vmatpush1.bf16.xpose.msra.mxu0 0
        %1193 = vmatprep.subr.bf16.mxu0 0
        %1194 = vmatpush1.bf16.xpose.msra.mxu0 0
        %1195 = vmatprep.subr.bf16.mxu0 0
        %1196 = vmatpush1.bf16.xpose.msra.mxu0 0
        %1197 = vmatprep.subr.bf16.mxu0 0
        %1198 = vmatpush1.bf16.xpose.msra.mxu0 0
        %1199 = vmatprep.subr.bf16.mxu0 0
        %1200 = vmatpush1.bf16.xpose.msra.mxu0 0
        %1201 = vmatprep.subr.bf16.mxu0 0
        %1202 = vmatpush1.bf16.xpose.msra.mxu0 0
        %1203 = vmatprep.subr.bf16.mxu0 0
        %1204 = vmatpush1.bf16.xpose.msra.mxu0 0
        %1205 = vmatprep.subr.bf16.mxu0 0
        %1206 = vmatpush1.bf16.xpose.msra.mxu0 0
        %1207 = vmatprep.subr.bf16.mxu0 0
        %1208 = vmatpush1.bf16.xpose.msra.mxu0 0
        %1209 = vmatprep.subr.bf16.mxu0 0
        %1210 = vmatpush1.bf16.xpose.msra.mxu0 0
        %1211 = vmatprep.subr.bf16.mxu0 0
        %1212 = vmatpush1.bf16.xpose.msra.mxu0 0
        %1213 = vmatprep.subr.bf16.mxu0 0
        %1214 = vmatpush1.bf16.xpose.msra.mxu0 0
        %1215 = vmatprep.subr.bf16.mxu0 0
        %1216 = vmatpush1.bf16.xpose.msra.mxu0 0
        %1217 = vmatprep.subr.bf16.mxu0 0
        %1218 = vmatpush1.bf16.xpose.msra.mxu0 0
        %1219 = vmatprep.subr.bf16.mxu0 0
        %1220 = vmatpush1.bf16.xpose.msra.mxu0 0
        %1221 = vmatprep.mubr.bf16.mxu0 0
        %1222 = vmatmul.mubr.bf16.gmra.mrb[0].mxu0 %v1184
        %v1223 = vpop.f32.mrb[0].mxu0
        %v1224 = vadd.f32 0.0, %v1223
        %v1225 = vpop.f32.mrb[0].mxu0
        %v1226 = vpop.f32.mrb[0].mxu0
        %v1227 = vpop.f32.mrb[0].mxu0
        %1228 = vdwg.mxu0
        %v1230 = vsel %vm952, %v894, 0
        %v1233 = vsel %vm952, %v922, 0
        %1235 = vmatprep.subr.bf16.mxu0 0
        %1236 = vmatpush1.bf16.xpose.msra.mxu0 %v1233
        %1237 = vmatprep.subr.bf16.mxu0 0
        %1238 = vmatpush1.bf16.xpose.msra.mxu0 0
        %1239 = vmatprep.subr.bf16.mxu0 0
        %1240 = vmatpush1.bf16.xpose.msra.mxu0 0
        %1241 = vmatprep.subr.bf16.mxu0 0
        %1242 = vmatpush1.bf16.xpose.msra.mxu0 0
        %1243 = vmatprep.subr.bf16.mxu0 0
        %1244 = vmatpush1.bf16.xpose.msra.mxu0 0
        %1245 = vmatprep.subr.bf16.mxu0 0
        %1246 = vmatpush1.bf16.xpose.msra.mxu0 0
        %1247 = vmatprep.subr.bf16.mxu0 0
        %1248 = vmatpush1.bf16.xpose.msra.mxu0 0
        %1249 = vmatprep.subr.bf16.mxu0 0
        %1250 = vmatpush1.bf16.xpose.msra.mxu0 0
        %1251 = vmatprep.subr.bf16.mxu0 0
        %1252 = vmatpush1.bf16.xpose.msra.mxu0 0
        %1253 = vmatprep.subr.bf16.mxu0 0
        %1254 = vmatpush1.bf16.xpose.msra.mxu0 0
        %1255 = vmatprep.subr.bf16.mxu0 0
        %1256 = vmatpush1.bf16.xpose.msra.mxu0 0
        %1257 = vmatprep.subr.bf16.mxu0 0
        %1258 = vmatpush1.bf16.xpose.msra.mxu0 0
        %1259 = vmatprep.subr.bf16.mxu0 0
        %1260 = vmatpush1.bf16.xpose.msra.mxu0 0
        %1261 = vmatprep.subr.bf16.mxu0 0
        %1262 = vmatpush1.bf16.xpose.msra.mxu0 0
        %1263 = vmatprep.subr.bf16.mxu0 0
        %1264 = vmatpush1.bf16.xpose.msra.mxu0 0
        %1265 = vmatprep.subr.bf16.mxu0 0
        %1266 = vmatpush1.bf16.xpose.msra.mxu0 0
        %1267 = vmatprep.mubr.bf16.mxu0 0
        %1268 = vmatmul.mubr.bf16.gmra.mrb[0].mxu0 %v1230
        %v1269 = vpop.f32.mrb[0].mxu0
        %v1270 = vadd.f32 0.0, %v1269
        %v1271 = vpop.f32.mrb[0].mxu0
        %v1272 = vpop.f32.mrb[0].mxu0
        %v1273 = vpop.f32.mrb[0].mxu0
        %1274 = vdwg.mxu0
        %v1276 = vsel %vm952, %v895, 0
        %v1279 = vsel %vm952, %v923, 0
        %1281 = vmatprep.subr.bf16.mxu0 0
        %1282 = vmatpush1.bf16.xpose.msra.mxu0 %v1279
        %1283 = vmatprep.subr.bf16.mxu0 0
        %1284 = vmatpush1.bf16.xpose.msra.mxu0 0
        %1285 = vmatprep.subr.bf16.mxu0 0
        %1286 = vmatpush1.bf16.xpose.msra.mxu0 0
        %1287 = vmatprep.subr.bf16.mxu0 0
        %1288 = vmatpush1.bf16.xpose.msra.mxu0 0
        %1289 = vmatprep.subr.bf16.mxu0 0
        %1290 = vmatpush1.bf16.xpose.msra.mxu0 0
        %1291 = vmatprep.subr.bf16.mxu0 0
        %1292 = vmatpush1.bf16.xpose.msra.mxu0 0
        %1293 = vmatprep.subr.bf16.mxu0 0
        %1294 = vmatpush1.bf16.xpose.msra.mxu0 0
        %1295 = vmatprep.subr.bf16.mxu0 0
        %1296 = vmatpush1.bf16.xpose.msra.mxu0 0
        %1297 = vmatprep.subr.bf16.mxu0 0
        %1298 = vmatpush1.bf16.xpose.msra.mxu0 0
        %1299 = vmatprep.subr.bf16.mxu0 0
        %1300 = vmatpush1.bf16.xpose.msra.mxu0 0
        %1301 = vmatprep.subr.bf16.mxu0 0
        %1302 = vmatpush1.bf16.xpose.msra.mxu0 0
        %1303 = vmatprep.subr.bf16.mxu0 0
        %1304 = vmatpush1.bf16.xpose.msra.mxu0 0
        %1305 = vmatprep.subr.bf16.mxu0 0
        %1306 = vmatpush1.bf16.xpose.msra.mxu0 0
        %1307 = vmatprep.subr.bf16.mxu0 0
        %1308 = vmatpush1.bf16.xpose.msra.mxu0 0
        %1309 = vmatprep.subr.bf16.mxu0 0
        %1310 = vmatpush1.bf16.xpose.msra.mxu0 0
        %1311 = vmatprep.subr.bf16.mxu0 0
        %1312 = vmatpush1.bf16.xpose.msra.mxu0 0
        %1313 = vmatprep.mubr.bf16.mxu0 0
        %1314 = vmatmul.mubr.bf16.gmra.mrb[0].mxu0 %v1276
        %v1315 = vpop.f32.mrb[0].mxu0
        %v1316 = vadd.f32 0.0, %v1315
        %v1317 = vpop.f32.mrb[0].mxu0
        %v1318 = vpop.f32.mrb[0].mxu0
        %v1319 = vpop.f32.mrb[0].mxu0
        %1320 = vdwg.mxu0
        %v1321 = vld [vmem:[%s587] sm:$0x1]
        %v1322 = vld [vmem:[%s587 + $0x1] sm:$0x1]
        %vm1323 = vcmp.gt.f32.partialorder %v1321, 0.0
        %vm1324 = vcmp.gt.f32.partialorder %v1322, 0.0
        %v1325 = vsel %vm1323, 0.0, -1e+09
        %v1326 = vsel %vm1324, 0.0, -1e+09
        %v1329 = vlaneseq
        %v1330 = vshrl.u32 %v1329, 7
        %v1331 = vsub.s32 0, %v1330
        %v1332 = vrot.slane %v1325, %v1331
        %v1333 = vlaneseq
        %v1334 = vshrl.u32 %v1333, 7
        %v1335 = vsub.s32 0, %v1334
        %v1336 = vrot.slane %v1326, %v1335
        %v1339 = vadd.f32 %v994, %v1332
        %v1340 = vadd.f32 %v1040, %v1336
        %v1341 = vadd.f32 %v1086, %v1332
        %v1342 = vadd.f32 %v1132, %v1336
        %v1343 = vadd.f32 %v1178, %v1332
        %v1344 = vadd.f32 %v1224, %v1336
        %v1345 = vadd.f32 %v1270, %v1332
        %v1346 = vadd.f32 %v1316, %v1336
        %vm1347 = vcmask 64512
        %v1348 = vsel %vm1347, %v1339, -inf
        %1349 = vmax.xlane.f32.xlu0 %v1348
        %v1350 = vpop.xlane.xlu0 %1349
        %v1351 = vsel %vm1347, %v1340, -inf
        %1352 = vmax.xlane.f32.xlu0 %v1351
        %v1353 = vpop.xlane.xlu0 %1352
        %v1354 = vsel %vm1347, %v1341, -inf
        %1355 = vmax.xlane.f32.xlu0 %v1354
        %v1356 = vpop.xlane.xlu0 %1355
        %v1357 = vsel %vm1347, %v1342, -inf
        %1358 = vmax.xlane.f32.xlu0 %v1357
        %v1359 = vpop.xlane.xlu0 %1358
        %v1360 = vsel %vm1347, %v1343, -inf
        %1361 = vmax.xlane.f32.xlu0 %v1360
        %v1362 = vpop.xlane.xlu0 %1361
        %v1363 = vsel %vm1347, %v1344, -inf
        %1364 = vmax.xlane.f32.xlu0 %v1363
        %v1365 = vpop.xlane.xlu0 %1364
        %v1366 = vsel %vm1347, %v1345, -inf
        %1367 = vmax.xlane.f32.xlu0 %v1366
        %v1368 = vpop.xlane.xlu0 %1367
        %v1369 = vsel %vm1347, %v1346, -inf
        %1370 = vmax.xlane.f32.xlu0 %v1369
        %v1371 = vpop.xlane.xlu0 %1370
        %v1372 = vsub.f32 %v1339, %v1350
        %v1373 = vsub.f32 %v1340, %v1353
        %v1374 = vsub.f32 %v1341, %v1356
        %v1375 = vsub.f32 %v1342, %v1359
        %v1376 = vsub.f32 %v1343, %v1362
        %v1377 = vsub.f32 %v1344, %v1365
        %v1378 = vsub.f32 %v1345, %v1368
        %v1379 = vsub.f32 %v1346, %v1371
        %v1380 = vmul.f32 %v1372, 1.442695
        %v1381 = vpow.pop %v1380
        %v1382 = vmul.f32 %v1373, 1.442695
        %v1383 = vpow.pop %v1382
        %v1384 = vmul.f32 %v1374, 1.442695
        %v1385 = vpow.pop %v1384
        %v1386 = vmul.f32 %v1375, 1.442695
        %v1387 = vpow.pop %v1386
        %v1388 = vmul.f32 %v1376, 1.442695
        %v1389 = vpow.pop %v1388
        %v1390 = vmul.f32 %v1377, 1.442695
        %v1391 = vpow.pop %v1390
        %v1392 = vmul.f32 %v1378, 1.442695
        %v1393 = vpow.pop %v1392
        %v1394 = vmul.f32 %v1379, 1.442695
        %v1395 = vpow.pop %v1394
        %v1396 = vsel %vm1347, %v1381, 0.0
        %1397 = vadd.xlane.f32.xlu0 %v1396
        %v1398 = vpop.xlane.xlu0 %1397
        %v1399 = vsel %vm1347, %v1383, 0.0
        %1400 = vadd.xlane.f32.xlu0 %v1399
        %v1401 = vpop.xlane.xlu0 %1400
        %v1402 = vsel %vm1347, %v1385, 0.0
        %1403 = vadd.xlane.f32.xlu0 %v1402
        %v1404 = vpop.xlane.xlu0 %1403
        %v1405 = vsel %vm1347, %v1387, 0.0
        %1406 = vadd.xlane.f32.xlu0 %v1405
        %v1407 = vpop.xlane.xlu0 %1406
        %v1408 = vsel %vm1347, %v1389, 0.0
        %1409 = vadd.xlane.f32.xlu0 %v1408
        %v1410 = vpop.xlane.xlu0 %1409
        %v1411 = vsel %vm1347, %v1391, 0.0
        %1412 = vadd.xlane.f32.xlu0 %v1411
        %v1413 = vpop.xlane.xlu0 %1412
        %v1414 = vsel %vm1347, %v1393, 0.0
        %1415 = vadd.xlane.f32.xlu0 %v1414
        %v1416 = vpop.xlane.xlu0 %1415
        %v1417 = vsel %vm1347, %v1395, 0.0
        %1418 = vadd.xlane.f32.xlu0 %v1417
        %v1419 = vpop.xlane.xlu0 %1418
        %v1420 = vrcp.pop %v1398
        %v1421 = vrcp.pop %v1401
        %v1422 = vrcp.pop %v1404
        %v1423 = vrcp.pop %v1407
        %v1424 = vrcp.pop %v1410
        %v1425 = vrcp.pop %v1413
        %v1426 = vrcp.pop %v1416
        %v1427 = vrcp.pop %v1419
        %v1428 = vmul.f32 %v1381, %v1420
        %v1429 = vmul.f32 %v1383, %v1421
        %v1430 = vmul.f32 %v1385, %v1422
        %v1431 = vmul.f32 %v1387, %v1423
        %v1432 = vmul.f32 %v1389, %v1424
        %v1433 = vmul.f32 %v1391, %v1425
        %v1434 = vmul.f32 %v1393, %v1426
        %v1435 = vmul.f32 %v1395, %v1427
        %v1436 = vpack.c.bf16 %v1428, %v1428
        %v1437 = vpack.c.bf16 %v1429, %v1429
        %v1438 = vpack.c.bf16 %v1430, %v1430
        %v1439 = vpack.c.bf16 %v1431, %v1431
        %v1440 = vpack.c.bf16 %v1432, %v1432
        %v1441 = vpack.c.bf16 %v1433, %v1433
        %v1442 = vpack.c.bf16 %v1434, %v1434
        %v1443 = vpack.c.bf16 %v1435, %v1435
        %v1445 = vsel %vm1347, %v1436, 0
        %vm1447 = vcmask 1043456
        %v1449 = vsel %vm1447, %v944, 0
        %1451 = vmatprep.subr.bf16.mxu0 0
        %1452 = vmatpush1.bf16.msra.mxu0 %v1449
        %1453 = vmatprep.subr.bf16.mxu0 0
        %1454 = vmatpush1.bf16.msra.mxu0 0
        %1455 = vmatprep.subr.bf16.mxu0 0
        %1456 = vmatpush1.bf16.msra.mxu0 0
        %1457 = vmatprep.subr.bf16.mxu0 0
        %1458 = vmatpush1.bf16.msra.mxu0 0
        %1459 = vmatprep.subr.bf16.mxu0 0
        %1460 = vmatpush1.bf16.msra.mxu0 0
        %1461 = vmatprep.subr.bf16.mxu0 0
        %1462 = vmatpush1.bf16.msra.mxu0 0
        %1463 = vmatprep.subr.bf16.mxu0 0
        %1464 = vmatpush1.bf16.msra.mxu0 0
        %1465 = vmatprep.subr.bf16.mxu0 0
        %1466 = vmatpush1.bf16.msra.mxu0 0
        %1467 = vmatprep.subr.bf16.mxu0 0
        %1468 = vmatpush1.bf16.msra.mxu0 0
        %1469 = vmatprep.subr.bf16.mxu0 0
        %1470 = vmatpush1.bf16.msra.mxu0 0
        %1471 = vmatprep.subr.bf16.mxu0 0
        %1472 = vmatpush1.bf16.msra.mxu0 0
        %1473 = vmatprep.subr.bf16.mxu0 0
        %1474 = vmatpush1.bf16.msra.mxu0 0
        %1475 = vmatprep.subr.bf16.mxu0 0
        %1476 = vmatpush1.bf16.msra.mxu0 0
        %1477 = vmatprep.subr.bf16.mxu0 0
        %1478 = vmatpush1.bf16.msra.mxu0 0
        %1479 = vmatprep.subr.bf16.mxu0 0
        %1480 = vmatpush1.bf16.msra.mxu0 0
        %1481 = vmatprep.subr.bf16.mxu0 0
        %1482 = vmatpush1.bf16.msra.mxu0 0
        %1483 = vmatprep.mubr.bf16.mxu0 0
        %1484 = vmatmul.mubr.bf16.gmra.mrb[0].mxu0 %v1445
        %v1485 = vpop.f32.mrb[0].mxu0
        %v1486 = vadd.f32 0.0, %v1485
        %v1487 = vpop.f32.mrb[0].mxu0
        %v1488 = vpop.f32.mrb[0].mxu0
        %v1489 = vpop.f32.mrb[0].mxu0
        %1490 = vdwg.mxu0
        %v1492 = vsel %vm1347, %v1437, 0
        %v1495 = vsel %vm1447, %v945, 0
        %1497 = vmatprep.subr.bf16.mxu0 0
        %1498 = vmatpush1.bf16.msra.mxu0 %v1495
        %1499 = vmatprep.subr.bf16.mxu0 0
        %1500 = vmatpush1.bf16.msra.mxu0 0
        %1501 = vmatprep.subr.bf16.mxu0 0
        %1502 = vmatpush1.bf16.msra.mxu0 0
        %1503 = vmatprep.subr.bf16.mxu0 0
        %1504 = vmatpush1.bf16.msra.mxu0 0
        %1505 = vmatprep.subr.bf16.mxu0 0
        %1506 = vmatpush1.bf16.msra.mxu0 0
        %1507 = vmatprep.subr.bf16.mxu0 0
        %1508 = vmatpush1.bf16.msra.mxu0 0
        %1509 = vmatprep.subr.bf16.mxu0 0
        %1510 = vmatpush1.bf16.msra.mxu0 0
        %1511 = vmatprep.subr.bf16.mxu0 0
        %1512 = vmatpush1.bf16.msra.mxu0 0
        %1513 = vmatprep.subr.bf16.mxu0 0
        %1514 = vmatpush1.bf16.msra.mxu0 0
        %1515 = vmatprep.subr.bf16.mxu0 0
        %1516 = vmatpush1.bf16.msra.mxu0 0
        %1517 = vmatprep.subr.bf16.mxu0 0
        %1518 = vmatpush1.bf16.msra.mxu0 0
        %1519 = vmatprep.subr.bf16.mxu0 0
        %1520 = vmatpush1.bf16.msra.mxu0 0
        %1521 = vmatprep.subr.bf16.mxu0 0
        %1522 = vmatpush1.bf16.msra.mxu0 0
        %1523 = vmatprep.subr.bf16.mxu0 0
        %1524 = vmatpush1.bf16.msra.mxu0 0
        %1525 = vmatprep.subr.bf16.mxu0 0
        %1526 = vmatpush1.bf16.msra.mxu0 0
        %1527 = vmatprep.subr.bf16.mxu0 0
        %1528 = vmatpush1.bf16.msra.mxu0 0
        %1529 = vmatprep.mubr.bf16.mxu0 0
        %1530 = vmatmul.mubr.bf16.gmra.mrb[0].mxu0 %v1492
        %v1531 = vpop.f32.mrb[0].mxu0
        %v1532 = vadd.f32 0.0, %v1531
        %v1533 = vpop.f32.mrb[0].mxu0
        %v1534 = vpop.f32.mrb[0].mxu0
        %v1535 = vpop.f32.mrb[0].mxu0
        %1536 = vdwg.mxu0
        %v1538 = vsel %vm1347, %v1438, 0
        %v1541 = vsel %vm1447, %v946, 0
        %1543 = vmatprep.subr.bf16.mxu0 0
        %1544 = vmatpush1.bf16.msra.mxu0 %v1541
        %1545 = vmatprep.subr.bf16.mxu0 0
        %1546 = vmatpush1.bf16.msra.mxu0 0
        %1547 = vmatprep.subr.bf16.mxu0 0
        %1548 = vmatpush1.bf16.msra.mxu0 0
        %1549 = vmatprep.subr.bf16.mxu0 0
        %1550 = vmatpush1.bf16.msra.mxu0 0
        %1551 = vmatprep.subr.bf16.mxu0 0
        %1552 = vmatpush1.bf16.msra.mxu0 0
        %1553 = vmatprep.subr.bf16.mxu0 0
        %1554 = vmatpush1.bf16.msra.mxu0 0
        %1555 = vmatprep.subr.bf16.mxu0 0
        %1556 = vmatpush1.bf16.msra.mxu0 0
        %1557 = vmatprep.subr.bf16.mxu0 0
        %1558 = vmatpush1.bf16.msra.mxu0 0
        %1559 = vmatprep.subr.bf16.mxu0 0
        %1560 = vmatpush1.bf16.msra.mxu0 0
        %1561 = vmatprep.subr.bf16.mxu0 0
        %1562 = vmatpush1.bf16.msra.mxu0 0
        %1563 = vmatprep.subr.bf16.mxu0 0
        %1564 = vmatpush1.bf16.msra.mxu0 0
        %1565 = vmatprep.subr.bf16.mxu0 0
        %1566 = vmatpush1.bf16.msra.mxu0 0
        %1567 = vmatprep.subr.bf16.mxu0 0
        %1568 = vmatpush1.bf16.msra.mxu0 0
        %1569 = vmatprep.subr.bf16.mxu0 0
        %1570 = vmatpush1.bf16.msra.mxu0 0
        %1571 = vmatprep.subr.bf16.mxu0 0
        %1572 = vmatpush1.bf16.msra.mxu0 0
        %1573 = vmatprep.subr.bf16.mxu0 0
        %1574 = vmatpush1.bf16.msra.mxu0 0
        %1575 = vmatprep.mubr.bf16.mxu0 0
        %1576 = vmatmul.mubr.bf16.gmra.mrb[0].mxu0 %v1538
        %v1577 = vpop.f32.mrb[0].mxu0
        %v1578 = vadd.f32 0.0, %v1577
        %v1579 = vpop.f32.mrb[0].mxu0
        %v1580 = vpop.f32.mrb[0].mxu0
        %v1581 = vpop.f32.mrb[0].mxu0
        %1582 = vdwg.mxu0
        %v1584 = vsel %vm1347, %v1439, 0
        %v1587 = vsel %vm1447, %v947, 0
        %1589 = vmatprep.subr.bf16.mxu0 0
        %1590 = vmatpush1.bf16.msra.mxu0 %v1587
        %1591 = vmatprep.subr.bf16.mxu0 0
        %1592 = vmatpush1.bf16.msra.mxu0 0
        %1593 = vmatprep.subr.bf16.mxu0 0
        %1594 = vmatpush1.bf16.msra.mxu0 0
        %1595 = vmatprep.subr.bf16.mxu0 0
        %1596 = vmatpush1.bf16.msra.mxu0 0
        %1597 = vmatprep.subr.bf16.mxu0 0
        %1598 = vmatpush1.bf16.msra.mxu0 0
        %1599 = vmatprep.subr.bf16.mxu0 0
        %1600 = vmatpush1.bf16.msra.mxu0 0
        %1601 = vmatprep.subr.bf16.mxu0 0
        %1602 = vmatpush1.bf16.msra.mxu0 0
        %1603 = vmatprep.subr.bf16.mxu0 0
        %1604 = vmatpush1.bf16.msra.mxu0 0
        %1605 = vmatprep.subr.bf16.mxu0 0
        %1606 = vmatpush1.bf16.msra.mxu0 0
        %1607 = vmatprep.subr.bf16.mxu0 0
        %1608 = vmatpush1.bf16.msra.mxu0 0
        %1609 = vmatprep.subr.bf16.mxu0 0
        %1610 = vmatpush1.bf16.msra.mxu0 0
        %1611 = vmatprep.subr.bf16.mxu0 0
        %1612 = vmatpush1.bf16.msra.mxu0 0
        %1613 = vmatprep.subr.bf16.mxu0 0
        %1614 = vmatpush1.bf16.msra.mxu0 0
        %1615 = vmatprep.subr.bf16.mxu0 0
        %1616 = vmatpush1.bf16.msra.mxu0 0
        %1617 = vmatprep.subr.bf16.mxu0 0
        %1618 = vmatpush1.bf16.msra.mxu0 0
        %1619 = vmatprep.subr.bf16.mxu0 0
        %1620 = vmatpush1.bf16.msra.mxu0 0
        %1621 = vmatprep.mubr.bf16.mxu0 0
        %1622 = vmatmul.mubr.bf16.gmra.mrb[0].mxu0 %v1584
        %v1623 = vpop.f32.mrb[0].mxu0
        %v1624 = vadd.f32 0.0, %v1623
        %v1625 = vpop.f32.mrb[0].mxu0
        %v1626 = vpop.f32.mrb[0].mxu0
        %v1627 = vpop.f32.mrb[0].mxu0
        %1628 = vdwg.mxu0
        %v1630 = vsel %vm1347, %v1440, 0
        %v1633 = vsel %vm1447, %v948, 0
        %1635 = vmatprep.subr.bf16.mxu0 0
        %1636 = vmatpush1.bf16.msra.mxu0 %v1633
        %1637 = vmatprep.subr.bf16.mxu0 0
        %1638 = vmatpush1.bf16.msra.mxu0 0
        %1639 = vmatprep.subr.bf16.mxu0 0
        %1640 = vmatpush1.bf16.msra.mxu0 0
        %1641 = vmatprep.subr.bf16.mxu0 0
        %1642 = vmatpush1.bf16.msra.mxu0 0
        %1643 = vmatprep.subr.bf16.mxu0 0
        %1644 = vmatpush1.bf16.msra.mxu0 0
        %1645 = vmatprep.subr.bf16.mxu0 0
        %1646 = vmatpush1.bf16.msra.mxu0 0
        %1647 = vmatprep.subr.bf16.mxu0 0
        %1648 = vmatpush1.bf16.msra.mxu0 0
        %1649 = vmatprep.subr.bf16.mxu0 0
        %1650 = vmatpush1.bf16.msra.mxu0 0
        %1651 = vmatprep.subr.bf16.mxu0 0
        %1652 = vmatpush1.bf16.msra.mxu0 0
        %1653 = vmatprep.subr.bf16.mxu0 0
        %1654 = vmatpush1.bf16.msra.mxu0 0
        %1655 = vmatprep.subr.bf16.mxu0 0
        %1656 = vmatpush1.bf16.msra.mxu0 0
        %1657 = vmatprep.subr.bf16.mxu0 0
        %1658 = vmatpush1.bf16.msra.mxu0 0
        %1659 = vmatprep.subr.bf16.mxu0 0
        %1660 = vmatpush1.bf16.msra.mxu0 0
        %1661 = vmatprep.subr.bf16.mxu0 0
        %1662 = vmatpush1.bf16.msra.mxu0 0
        %1663 = vmatprep.subr.bf16.mxu0 0
        %1664 = vmatpush1.bf16.msra.mxu0 0
        %1665 = vmatprep.subr.bf16.mxu0 0
        %1666 = vmatpush1.bf16.msra.mxu0 0
        %1667 = vmatprep.mubr.bf16.mxu0 0
        %1668 = vmatmul.mubr.bf16.gmra.mrb[0].mxu0 %v1630
        %v1669 = vpop.f32.mrb[0].mxu0
        %v1670 = vadd.f32 0.0, %v1669
        %v1671 = vpop.f32.mrb[0].mxu0
        %v1672 = vpop.f32.mrb[0].mxu0
        %v1673 = vpop.f32.mrb[0].mxu0
        %1674 = vdwg.mxu0
        %v1676 = vsel %vm1347, %v1441, 0
        %v1679 = vsel %vm1447, %v949, 0
        %1681 = vmatprep.subr.bf16.mxu0 0
        %1682 = vmatpush1.bf16.msra.mxu0 %v1679
        %1683 = vmatprep.subr.bf16.mxu0 0
        %1684 = vmatpush1.bf16.msra.mxu0 0
        %1685 = vmatprep.subr.bf16.mxu0 0
        %1686 = vmatpush1.bf16.msra.mxu0 0
        %1687 = vmatprep.subr.bf16.mxu0 0
        %1688 = vmatpush1.bf16.msra.mxu0 0
        %1689 = vmatprep.subr.bf16.mxu0 0
        %1690 = vmatpush1.bf16.msra.mxu0 0
        %1691 = vmatprep.subr.bf16.mxu0 0
        %1692 = vmatpush1.bf16.msra.mxu0 0
        %1693 = vmatprep.subr.bf16.mxu0 0
        %1694 = vmatpush1.bf16.msra.mxu0 0
        %1695 = vmatprep.subr.bf16.mxu0 0
        %1696 = vmatpush1.bf16.msra.mxu0 0
        %1697 = vmatprep.subr.bf16.mxu0 0
        %1698 = vmatpush1.bf16.msra.mxu0 0
        %1699 = vmatprep.subr.bf16.mxu0 0
        %1700 = vmatpush1.bf16.msra.mxu0 0
        %1701 = vmatprep.subr.bf16.mxu0 0
        %1702 = vmatpush1.bf16.msra.mxu0 0
        %1703 = vmatprep.subr.bf16.mxu0 0
        %1704 = vmatpush1.bf16.msra.mxu0 0
        %1705 = vmatprep.subr.bf16.mxu0 0
        %1706 = vmatpush1.bf16.msra.mxu0 0
        %1707 = vmatprep.subr.bf16.mxu0 0
        %1708 = vmatpush1.bf16.msra.mxu0 0
        %1709 = vmatprep.subr.bf16.mxu0 0
        %1710 = vmatpush1.bf16.msra.mxu0 0
        %1711 = vmatprep.subr.bf16.mxu0 0
        %1712 = vmatpush1.bf16.msra.mxu0 0
        %1713 = vmatprep.mubr.bf16.mxu0 0
        %1714 = vmatmul.mubr.bf16.gmra.mrb[0].mxu0 %v1676
        %v1715 = vpop.f32.mrb[0].mxu0
        %v1716 = vadd.f32 0.0, %v1715
        %v1717 = vpop.f32.mrb[0].mxu0
        %v1718 = vpop.f32.mrb[0].mxu0
        %v1719 = vpop.f32.mrb[0].mxu0
        %1720 = vdwg.mxu0
        %v1722 = vsel %vm1347, %v1442, 0
        %v1725 = vsel %vm1447, %v950, 0
        %1727 = vmatprep.subr.bf16.mxu0 0
        %1728 = vmatpush1.bf16.msra.mxu0 %v1725
        %1729 = vmatprep.subr.bf16.mxu0 0
        %1730 = vmatpush1.bf16.msra.mxu0 0
        %1731 = vmatprep.subr.bf16.mxu0 0
        %1732 = vmatpush1.bf16.msra.mxu0 0
        %1733 = vmatprep.subr.bf16.mxu0 0
        %1734 = vmatpush1.bf16.msra.mxu0 0
        %1735 = vmatprep.subr.bf16.mxu0 0
        %1736 = vmatpush1.bf16.msra.mxu0 0
        %1737 = vmatprep.subr.bf16.mxu0 0
        %1738 = vmatpush1.bf16.msra.mxu0 0
        %1739 = vmatprep.subr.bf16.mxu0 0
        %1740 = vmatpush1.bf16.msra.mxu0 0
        %1741 = vmatprep.subr.bf16.mxu0 0
        %1742 = vmatpush1.bf16.msra.mxu0 0
        %1743 = vmatprep.subr.bf16.mxu0 0
        %1744 = vmatpush1.bf16.msra.mxu0 0
        %1745 = vmatprep.subr.bf16.mxu0 0
        %1746 = vmatpush1.bf16.msra.mxu0 0
        %1747 = vmatprep.subr.bf16.mxu0 0
        %1748 = vmatpush1.bf16.msra.mxu0 0
        %1749 = vmatprep.subr.bf16.mxu0 0
        %1750 = vmatpush1.bf16.msra.mxu0 0
        %1751 = vmatprep.subr.bf16.mxu0 0
        %1752 = vmatpush1.bf16.msra.mxu0 0
        %1753 = vmatprep.subr.bf16.mxu0 0
        %1754 = vmatpush1.bf16.msra.mxu0 0
        %1755 = vmatprep.subr.bf16.mxu0 0
        %1756 = vmatpush1.bf16.msra.mxu0 0
        %1757 = vmatprep.subr.bf16.mxu0 0
        %1758 = vmatpush1.bf16.msra.mxu0 0
        %1759 = vmatprep.mubr.bf16.mxu0 0
        %1760 = vmatmul.mubr.bf16.gmra.mrb[0].mxu0 %v1722
        %v1761 = vpop.f32.mrb[0].mxu0
        %v1762 = vadd.f32 0.0, %v1761
        %v1763 = vpop.f32.mrb[0].mxu0
        %v1764 = vpop.f32.mrb[0].mxu0
        %v1765 = vpop.f32.mrb[0].mxu0
        %1766 = vdwg.mxu0
        %v1768 = vsel %vm1347, %v1443, 0
        %v1771 = vsel %vm1447, %v951, 0
        %1773 = vmatprep.subr.bf16.mxu0 0
        %1774 = vmatpush1.bf16.msra.mxu0 %v1771
        %1775 = vmatprep.subr.bf16.mxu0 0
        %1776 = vmatpush1.bf16.msra.mxu0 0
        %1777 = vmatprep.subr.bf16.mxu0 0
        %1778 = vmatpush1.bf16.msra.mxu0 0
        %1779 = vmatprep.subr.bf16.mxu0 0
        %1780 = vmatpush1.bf16.msra.mxu0 0
        %1781 = vmatprep.subr.bf16.mxu0 0
        %1782 = vmatpush1.bf16.msra.mxu0 0
        %1783 = vmatprep.subr.bf16.mxu0 0
        %1784 = vmatpush1.bf16.msra.mxu0 0
        %1785 = vmatprep.subr.bf16.mxu0 0
        %1786 = vmatpush1.bf16.msra.mxu0 0
        %1787 = vmatprep.subr.bf16.mxu0 0
        %1788 = vmatpush1.bf16.msra.mxu0 0
        %1789 = vmatprep.subr.bf16.mxu0 0
        %1790 = vmatpush1.bf16.msra.mxu0 0
        %1791 = vmatprep.subr.bf16.mxu0 0
        %1792 = vmatpush1.bf16.msra.mxu0 0
        %1793 = vmatprep.subr.bf16.mxu0 0
        %1794 = vmatpush1.bf16.msra.mxu0 0
        %1795 = vmatprep.subr.bf16.mxu0 0
        %1796 = vmatpush1.bf16.msra.mxu0 0
        %1797 = vmatprep.subr.bf16.mxu0 0
        %1798 = vmatpush1.bf16.msra.mxu0 0
        %1799 = vmatprep.subr.bf16.mxu0 0
        %1800 = vmatpush1.bf16.msra.mxu0 0
        %1801 = vmatprep.subr.bf16.mxu0 0
        %1802 = vmatpush1.bf16.msra.mxu0 0
        %1803 = vmatprep.subr.bf16.mxu0 0
        %1804 = vmatpush1.bf16.msra.mxu0 0
        %1805 = vmatprep.mubr.bf16.mxu0 0
        %1806 = vmatmul.mubr.bf16.gmra.mrb[0].mxu0 %v1768
        %v1807 = vpop.f32.mrb[0].mxu0
        %v1808 = vadd.f32 0.0, %v1807
        %v1809 = vpop.f32.mrb[0].mxu0
        %v1810 = vpop.f32.mrb[0].mxu0
        %v1811 = vpop.f32.mrb[0].mxu0
        %1812 = vdwg.mxu0
        %v1813 = vpack.c.bf16 %v1532, %v1486
        %v1814 = vld [vmem:[#allocation5] sm:$0xf]
        %v1815 = vld [vmem:[#allocation5 + $0x4] sm:$0xf]
        %v1816 = vld [vmem:[#allocation5 + $0x8] sm:$0xf]
        %v1817 = vld [vmem:[#allocation5 + $0xc] sm:$0xf]
        %v1818 = vpack.c.bf16 %v1624, %v1578
        %s1819 = scalar_lea.vmem [#allocation5], 16
        %v1820 = vld [vmem:[%s1819] sm:$0xf]
        %v1821 = vld [vmem:[%s1819 + $0x4] sm:$0xf]
        %v1822 = vld [vmem:[%s1819 + $0x8] sm:$0xf]
        %v1823 = vld [vmem:[%s1819 + $0xc] sm:$0xf]
        %v1828 = vunpack.c.l.b16 %v1820
        %v1829 = vunpack.c.l.b16 %v1821
        %v1830 = vunpack.c.l.b16 %v1822
        %v1831 = vunpack.c.l.b16 %v1823
        %v1832 = vpack.c.b16 %v1829, %v1828
        %v1833 = vpack.c.b16 %v1831, %v1830
        %v1837 = vsel %vm952, %v1818, 0
        %1839 = vmatprep.subr.bf16.mxu0 0
        %1840 = vmatpush1.bf16.msra.mxu0 %v1832
        %1841 = vmatprep.subr.bf16.mxu0 0
        %1842 = vmatpush1.bf16.msra.mxu0 %v1833
        %1843 = vmatprep.subr.bf16.mxu0 0
        %1844 = vmatpush1.bf16.msra.mxu0 0
        %1845 = vmatprep.subr.bf16.mxu0 0
        %1846 = vmatpush1.bf16.msra.mxu0 0
        %1847 = vmatprep.subr.bf16.mxu0 0
        %1848 = vmatpush1.bf16.msra.mxu0 0
        %1849 = vmatprep.subr.bf16.mxu0 0
        %1850 = vmatpush1.bf16.msra.mxu0 0
        %1851 = vmatprep.subr.bf16.mxu0 0
        %1852 = vmatpush1.bf16.msra.mxu0 0
        %1853 = vmatprep.subr.bf16.mxu0 0
        %1854 = vmatpush1.bf16.msra.mxu0 0
        %1855 = vmatprep.subr.bf16.mxu0 0
        %1856 = vmatpush1.bf16.msra.mxu0 0
        %1857 = vmatprep.subr.bf16.mxu0 0
        %1858 = vmatpush1.bf16.msra.mxu0 0
        %1859 = vmatprep.subr.bf16.mxu0 0
        %1860 = vmatpush1.bf16.msra.mxu0 0
        %1861 = vmatprep.subr.bf16.mxu0 0
        %1862 = vmatpush1.bf16.msra.mxu0 0
        %1863 = vmatprep.subr.bf16.mxu0 0
        %1864 = vmatpush1.bf16.msra.mxu0 0
        %1865 = vmatprep.subr.bf16.mxu0 0
        %1866 = vmatpush1.bf16.msra.mxu0 0
        %1867 = vmatprep.subr.bf16.mxu0 0
        %1868 = vmatpush1.bf16.msra.mxu0 0
        %1869 = vmatprep.subr.bf16.mxu0 0
        %1870 = vmatpush1.bf16.msra.mxu0 0
        %1871 = vmatprep.mubr.bf16.mxu0 0
        %1872 = vmatmul.mubr.bf16.gmra.mrb[0].mxu0 %v1837
        %v1873 = vpop.f32.mrb[0].mxu0
        %v1874 = vadd.f32 0.0, %v1873
        %v1875 = vpop.f32.mrb[0].mxu0
        %v1876 = vpop.f32.mrb[0].mxu0
        %v1877 = vadd.f32 0.0, %v1876
        %v1878 = vpop.f32.mrb[0].mxu0
        %1879 = vdwg.mxu0
        %v1884 = vunpack.c.l.b16 %v1814
        %v1885 = vunpack.c.l.b16 %v1815
        %v1886 = vunpack.c.l.b16 %v1816
        %v1887 = vunpack.c.l.b16 %v1817
        %v1888 = vpack.c.b16 %v1885, %v1884
        %v1889 = vpack.c.b16 %v1887, %v1886
        %v1893 = vsel %vm952, %v1813, 0
        %1895 = vmatprep.subr.bf16.mxu0 0
        %1896 = vmatpush1.bf16.msra.mxu0 %v1888
        %1897 = vmatprep.subr.bf16.mxu0 0
        %1898 = vmatpush1.bf16.msra.mxu0 %v1889
        %1899 = vmatprep.subr.bf16.mxu0 0
        %1900 = vmatpush1.bf16.msra.mxu0 0
        %1901 = vmatprep.subr.bf16.mxu0 0
        %1902 = vmatpush1.bf16.msra.mxu0 0
        %1903 = vmatprep.subr.bf16.mxu0 0
        %1904 = vmatpush1.bf16.msra.mxu0 0
        %1905 = vmatprep.subr.bf16.mxu0 0
        %1906 = vmatpush1.bf16.msra.mxu0 0
        %1907 = vmatprep.subr.bf16.mxu0 0
        %1908 = vmatpush1.bf16.msra.mxu0 0
        %1909 = vmatprep.subr.bf16.mxu0 0
        %1910 = vmatpush1.bf16.msra.mxu0 0
        %1911 = vmatprep.subr.bf16.mxu0 0
        %1912 = vmatpush1.bf16.msra.mxu0 0
        %1913 = vmatprep.subr.bf16.mxu0 0
        %1914 = vmatpush1.bf16.msra.mxu0 0
        %1915 = vmatprep.subr.bf16.mxu0 0
        %1916 = vmatpush1.bf16.msra.mxu0 0
        %1917 = vmatprep.subr.bf16.mxu0 0
        %1918 = vmatpush1.bf16.msra.mxu0 0
        %1919 = vmatprep.subr.bf16.mxu0 0
        %1920 = vmatpush1.bf16.msra.mxu0 0
        %1921 = vmatprep.subr.bf16.mxu0 0
        %1922 = vmatpush1.bf16.msra.mxu0 0
        %1923 = vmatprep.subr.bf16.mxu0 0
        %1924 = vmatpush1.bf16.msra.mxu0 0
        %1925 = vmatprep.subr.bf16.mxu0 0
        %1926 = vmatpush1.bf16.msra.mxu0 0
        %1927 = vmatprep.mubr.bf16.mxu0 0
        %1928 = vmatmul.mubr.bf16.gmra.mrb[0].mxu0 %v1893
        %v1929 = vpop.f32.mrb[0].mxu0
        %v1930 = vadd.f32 %v1874, %v1929
        %v1931 = vpop.f32.mrb[0].mxu0
        %v1932 = vpop.f32.mrb[0].mxu0
        %v1933 = vadd.f32 %v1877, %v1932
        %v1934 = vpop.f32.mrb[0].mxu0
        %1935 = vdwg.mxu0
        %v1936 = vpack.c.bf16 %v1716, %v1670
        %s1937 = scalar_lea.vmem [#allocation5], 32
        %v1938 = vld [vmem:[%s1937] sm:$0xf]
        %v1939 = vld [vmem:[%s1937 + $0x4] sm:$0xf]
        %v1940 = vld [vmem:[%s1937 + $0x8] sm:$0xf]
        %v1941 = vld [vmem:[%s1937 + $0xc] sm:$0xf]
        %v1946 = vunpack.c.l.b16 %v1938
        %v1947 = vunpack.c.l.b16 %v1939
        %v1948 = vunpack.c.l.b16 %v1940
        %v1949 = vunpack.c.l.b16 %v1941
        %v1950 = vpack.c.b16 %v1947, %v1946
        %v1951 = vpack.c.b16 %v1949, %v1948
        %v1955 = vsel %vm952, %v1936, 0
        %1957 = vmatprep.subr.bf16.mxu0 0
        %1958 = vmatpush1.bf16.msra.mxu0 %v1950
        %1959 = vmatprep.subr.bf16.mxu0 0
        %1960 = vmatpush1.bf16.msra.mxu0 %v1951
        %1961 = vmatprep.subr.bf16.mxu0 0
        %1962 = vmatpush1.bf16.msra.mxu0 0
        %1963 = vmatprep.subr.bf16.mxu0 0
        %1964 = vmatpush1.bf16.msra.mxu0 0
        %1965 = vmatprep.subr.bf16.mxu0 0
        %1966 = vmatpush1.bf16.msra.mxu0 0
        %1967 = vmatprep.subr.bf16.mxu0 0
        %1968 = vmatpush1.bf16.msra.mxu0 0
        %1969 = vmatprep.subr.bf16.mxu0 0
        %1970 = vmatpush1.bf16.msra.mxu0 0
        %1971 = vmatprep.subr.bf16.mxu0 0
        %1972 = vmatpush1.bf16.msra.mxu0 0
        %1973 = vmatprep.subr.bf16.mxu0 0
        %1974 = vmatpush1.bf16.msra.mxu0 0
        %1975 = vmatprep.subr.bf16.mxu0 0
        %1976 = vmatpush1.bf16.msra.mxu0 0
        %1977 = vmatprep.subr.bf16.mxu0 0
        %1978 = vmatpush1.bf16.msra.mxu0 0
        %1979 = vmatprep.subr.bf16.mxu0 0
        %1980 = vmatpush1.bf16.msra.mxu0 0
        %1981 = vmatprep.subr.bf16.mxu0 0
        %1982 = vmatpush1.bf16.msra.mxu0 0
        %1983 = vmatprep.subr.bf16.mxu0 0
        %1984 = vmatpush1.bf16.msra.mxu0 0
        %1985 = vmatprep.subr.bf16.mxu0 0
        %1986 = vmatpush1.bf16.msra.mxu0 0
        %1987 = vmatprep.subr.bf16.mxu0 0
        %1988 = vmatpush1.bf16.msra.mxu0 0
        %1989 = vmatprep.mubr.bf16.mxu0 0
        %1990 = vmatmul.mubr.bf16.gmra.mrb[0].mxu0 %v1955
        %v1991 = vpop.f32.mrb[0].mxu0
        %v1992 = vadd.f32 0.0, %v1991
        %v1993 = vpop.f32.mrb[0].mxu0
        %v1994 = vpop.f32.mrb[0].mxu0
        %v1995 = vadd.f32 0.0, %v1994
        %v1996 = vpop.f32.mrb[0].mxu0
        %1997 = vdwg.mxu0
        %v1998 = vadd.f32 %v1930, %v1992
        %v1999 = vadd.f32 %v1933, %v1995
        %v2000 = vpack.c.bf16 %v1808, %v1762
        %s2001 = scalar_lea.vmem [#allocation5], 48
        %v2002 = vld [vmem:[%s2001] sm:$0xf]
        %v2003 = vld [vmem:[%s2001 + $0x4] sm:$0xf]
        %v2004 = vld [vmem:[%s2001 + $0x8] sm:$0xf]
        %v2005 = vld [vmem:[%s2001 + $0xc] sm:$0xf]
        %v2010 = vunpack.c.l.b16 %v2002
        %v2011 = vunpack.c.l.b16 %v2003
        %v2012 = vunpack.c.l.b16 %v2004
        %v2013 = vunpack.c.l.b16 %v2005
        %v2014 = vpack.c.b16 %v2011, %v2010
        %v2015 = vpack.c.b16 %v2013, %v2012
        %v2019 = vsel %vm952, %v2000, 0
        %2021 = vmatprep.subr.bf16.mxu0 0
        %2022 = vmatpush1.bf16.msra.mxu0 %v2014
        %2023 = vmatprep.subr.bf16.mxu0 0
        %2024 = vmatpush1.bf16.msra.mxu0 %v2015
        %2025 = vmatprep.subr.bf16.mxu0 0
        %2026 = vmatpush1.bf16.msra.mxu0 0
        %2027 = vmatprep.subr.bf16.mxu0 0
        %2028 = vmatpush1.bf16.msra.mxu0 0
        %2029 = vmatprep.subr.bf16.mxu0 0
        %2030 = vmatpush1.bf16.msra.mxu0 0
        %2031 = vmatprep.subr.bf16.mxu0 0
        %2032 = vmatpush1.bf16.msra.mxu0 0
        %2033 = vmatprep.subr.bf16.mxu0 0
        %2034 = vmatpush1.bf16.msra.mxu0 0
        %2035 = vmatprep.subr.bf16.mxu0 0
        %2036 = vmatpush1.bf16.msra.mxu0 0
        %2037 = vmatprep.subr.bf16.mxu0 0
        %2038 = vmatpush1.bf16.msra.mxu0 0
        %2039 = vmatprep.subr.bf16.mxu0 0
        %2040 = vmatpush1.bf16.msra.mxu0 0
        %2041 = vmatprep.subr.bf16.mxu0 0
        %2042 = vmatpush1.bf16.msra.mxu0 0
        %2043 = vmatprep.subr.bf16.mxu0 0
        %2044 = vmatpush1.bf16.msra.mxu0 0
        %2045 = vmatprep.subr.bf16.mxu0 0
        %2046 = vmatpush1.bf16.msra.mxu0 0
        %2047 = vmatprep.subr.bf16.mxu0 0
        %2048 = vmatpush1.bf16.msra.mxu0 0
        %2049 = vmatprep.subr.bf16.mxu0 0
        %2050 = vmatpush1.bf16.msra.mxu0 0
        %2051 = vmatprep.subr.bf16.mxu0 0
        %2052 = vmatpush1.bf16.msra.mxu0 0
        %2053 = vmatprep.mubr.bf16.mxu0 0
        %2054 = vmatmul.mubr.bf16.gmra.mrb[0].mxu0 %v2019
        %v2055 = vpop.f32.mrb[0].mxu0
        %v2056 = vadd.f32 0.0, %v2055
        %v2057 = vpop.f32.mrb[0].mxu0
        %v2058 = vpop.f32.mrb[0].mxu0
        %v2059 = vadd.f32 0.0, %v2058
        %v2060 = vpop.f32.mrb[0].mxu0
        %2061 = vdwg.mxu0
        %v2062 = vadd.f32 %v1998, %v2056
        %v2063 = vadd.f32 %v1999, %v2059
        %v2064 = vld [vmem:[%s6] sm:$0x1]
        %v2066 = vlaneseq
        %v2067 = vshrl.u32 %v2066, 7
        %v2068 = vsub.s32 0, %v2067
        %v2069 = vrot.slane %v2064, %v2068
        %v2071 = vadd.f32 %v2062, %v2069
        %v2072 = vadd.f32 %v2063, %v2069
        %v2073 = vadd.f32 %v599, %v2071
        %v2074 = vadd.f32 %v600, %v2072
        %2075 = vadd.xlane.f32.xlu0 %v2073
        %v2076 = vpop.xlane.xlu0 %2075
        %2077 = vadd.xlane.f32.xlu0 %v2074
        %v2078 = vpop.xlane.xlu0 %2077
        %v2079 = vrcp.pop 128.0
        %v2080 = vmul.f32 %v2076, %v2079
        %v2081 = vmul.f32 %v2078, %v2079
        %v2082 = vsub.f32 %v2073, %v2080
        %v2083 = vsub.f32 %v2074, %v2081
        %v2084 = vmul.f32 %v2082, %v2082
        %v2085 = vmul.f32 %v2083, %v2083
        %2086 = vadd.xlane.f32.xlu0 %v2084
        %v2087 = vpop.xlane.xlu0 %2086
        %2088 = vadd.xlane.f32.xlu0 %v2085
        %v2089 = vpop.xlane.xlu0 %2088
        %v2090 = vmul.f32 %v2087, %v2079
        %v2091 = vmul.f32 %v2089, %v2079
        %v2092 = vadd.f32 %v2090, 1e-05
        %v2093 = vadd.f32 %v2091, 1e-05
        %v2094 = vrsqrt.pop %v2092
        %v2095 = vrsqrt.pop %v2093
        %v2096 = vmul.f32 %v2082, %v2094
        %v2097 = vmul.f32 %v2083, %v2095
        %v2098 = vld [vmem:[%s11] sm:$0x1]
        %v2100 = vlaneseq
        %v2101 = vshrl.u32 %v2100, 7
        %v2102 = vsub.s32 0, %v2101
        %v2103 = vrot.slane %v2098, %v2102
        %v2105 = vmul.f32 %v2096, %v2103
        %v2106 = vmul.f32 %v2097, %v2103
        %v2107 = vld [vmem:[%s12] sm:$0x1]
        %v2109 = vlaneseq
        %v2110 = vshrl.u32 %v2109, 7
        %v2111 = vsub.s32 0, %v2110
        %v2112 = vrot.slane %v2107, %v2111
        %v2114 = vadd.f32 %v2105, %v2112
        %v2115 = vadd.f32 %v2106, %v2112
        %v2116 = vpack.c.bf16 %v2115, %v2114
        %v2117 = vld [vmem:[#allocation7] sm:$0xff]
        %v2118 = vld [vmem:[#allocation7 + $0x8] sm:$0xff]
        %v2119 = vld [vmem:[#allocation7 + $0x10] sm:$0xff]
        %v2120 = vld [vmem:[#allocation7 + $0x18] sm:$0xff]
        %v2121 = vld [vmem:[#allocation7 + $0x20] sm:$0xff]
        %v2122 = vld [vmem:[#allocation7 + $0x28] sm:$0xff]
        %v2123 = vld [vmem:[#allocation7 + $0x30] sm:$0xff]
        %v2124 = vld [vmem:[#allocation7 + $0x38] sm:$0xff]
        %v2125 = vld [vmem:[#allocation7 + $0x40] sm:$0xff]
        %v2126 = vld [vmem:[#allocation7 + $0x48] sm:$0xff]
        %v2127 = vld [vmem:[#allocation7 + $0x50] sm:$0xff]
        %v2128 = vld [vmem:[#allocation7 + $0x58] sm:$0xff]
        %v2129 = vld [vmem:[#allocation7 + $0x60] sm:$0xff]
        %v2130 = vld [vmem:[#allocation7 + $0x68] sm:$0xff]
        %v2131 = vld [vmem:[#allocation7 + $0x70] sm:$0xff]
        %v2132 = vld [vmem:[#allocation7 + $0x78] sm:$0xff]
        %v2133 = vld [vmem:[%s8] sm:$0x3]
        %v2135 = vlaneseq
        %v2136 = vshrl.u32 %v2135, 7
        %v2137 = vsub.s32 0, %v2136
        %v2138 = vrot.slane %v2133, %v2137
        %v2139 = vlaneseq
        %v2140 = vshrl.u32 %v2139, 7
        %v2141 = vsub.s32 1, %v2140
        %v2142 = vrot.slane %v2133, %v2141
        %v2161 = vunpack.c.l.b16 %v2117
        %v2162 = vunpack.c.h.b16 %v2117
        %v2163 = vunpack.c.l.b16 %v2118
        %v2164 = vunpack.c.h.b16 %v2118
        %v2165 = vunpack.c.l.b16 %v2119
        %v2166 = vunpack.c.h.b16 %v2119
        %v2167 = vunpack.c.l.b16 %v2120
        %v2168 = vunpack.c.h.b16 %v2120
        %v2169 = vunpack.c.l.b16 %v2121
        %v2170 = vunpack.c.h.b16 %v2121
        %v2171 = vunpack.c.l.b16 %v2122
        %v2172 = vunpack.c.h.b16 %v2122
        %v2173 = vunpack.c.l.b16 %v2123
        %v2174 = vunpack.c.h.b16 %v2123
        %v2175 = vunpack.c.l.b16 %v2124
        %v2176 = vunpack.c.h.b16 %v2124
        %v2177 = vunpack.c.l.b16 %v2125
        %v2178 = vunpack.c.h.b16 %v2125
        %v2179 = vunpack.c.l.b16 %v2126
        %v2180 = vunpack.c.h.b16 %v2126
        %v2181 = vunpack.c.l.b16 %v2127
        %v2182 = vunpack.c.h.b16 %v2127
        %v2183 = vunpack.c.l.b16 %v2128
        %v2184 = vunpack.c.h.b16 %v2128
        %v2185 = vunpack.c.l.b16 %v2129
        %v2186 = vunpack.c.h.b16 %v2129
        %v2187 = vunpack.c.l.b16 %v2130
        %v2188 = vunpack.c.h.b16 %v2130
        %v2189 = vunpack.c.l.b16 %v2131
        %v2190 = vunpack.c.h.b16 %v2131
        %v2191 = vunpack.c.l.b16 %v2132
        %v2192 = vunpack.c.h.b16 %v2132
        %v2193 = vpack.c.b16 %v2163, %v2161
        %v2194 = vpack.c.b16 %v2164, %v2162
        %v2195 = vpack.c.b16 %v2167, %v2165
        %v2196 = vpack.c.b16 %v2168, %v2166
        %v2197 = vpack.c.b16 %v2171, %v2169
        %v2198 = vpack.c.b16 %v2172, %v2170
        %v2199 = vpack.c.b16 %v2175, %v2173
        %v2200 = vpack.c.b16 %v2176, %v2174
        %v2201 = vpack.c.b16 %v2179, %v2177
        %v2202 = vpack.c.b16 %v2180, %v2178
        %v2203 = vpack.c.b16 %v2183, %v2181
        %v2204 = vpack.c.b16 %v2184, %v2182
        %v2205 = vpack.c.b16 %v2187, %v2185
        %v2206 = vpack.c.b16 %v2188, %v2186
        %v2207 = vpack.c.b16 %v2191, %v2189
        %v2208 = vpack.c.b16 %v2192, %v2190
        %2225 = vmatprep.subr.bf16.mxu0 %v2194
        %2226 = vmatpush1.bf16.msra.mxu0 %v2193
        %2227 = vmatprep.subr.bf16.mxu0 %v2196
        %2228 = vmatpush1.bf16.msra.mxu0 %v2195
        %2229 = vmatprep.subr.bf16.mxu0 %v2198
        %2230 = vmatpush1.bf16.msra.mxu0 %v2197
        %2231 = vmatprep.subr.bf16.mxu0 %v2200
        %2232 = vmatpush1.bf16.msra.mxu0 %v2199
        %2233 = vmatprep.subr.bf16.mxu0 %v2202
        %2234 = vmatpush1.bf16.msra.mxu0 %v2201
        %2235 = vmatprep.subr.bf16.mxu0 %v2204
        %2236 = vmatpush1.bf16.msra.mxu0 %v2203
        %2237 = vmatprep.subr.bf16.mxu0 %v2206
        %2238 = vmatpush1.bf16.msra.mxu0 %v2205
        %2239 = vmatprep.subr.bf16.mxu0 %v2208
        %2240 = vmatpush1.bf16.msra.mxu0 %v2207
        %2241 = vmatprep.subr.bf16.mxu0 0
        %2242 = vmatpush1.bf16.msra.mxu0 0
        %2243 = vmatprep.subr.bf16.mxu0 0
        %2244 = vmatpush1.bf16.msra.mxu0 0
        %2245 = vmatprep.subr.bf16.mxu0 0
        %2246 = vmatpush1.bf16.msra.mxu0 0
        %2247 = vmatprep.subr.bf16.mxu0 0
        %2248 = vmatpush1.bf16.msra.mxu0 0
        %2249 = vmatprep.subr.bf16.mxu0 0
        %2250 = vmatpush1.bf16.msra.mxu0 0
        %2251 = vmatprep.subr.bf16.mxu0 0
        %2252 = vmatpush1.bf16.msra.mxu0 0
        %2253 = vmatprep.subr.bf16.mxu0 0
        %2254 = vmatpush1.bf16.msra.mxu0 0
        %2255 = vmatprep.subr.bf16.mxu0 0
        %2256 = vmatpush1.bf16.msra.mxu0 0
        %2257 = vmatprep.mubr.bf16.mxu0 0
        %2258 = vmatmul.mubr.bf16.gmra.mrb[0].mxu0 %v2116
        %v2259 = vpop.f32.mrb[0].mxu0
        %v2260 = vadd.f32 %v2138, %v2259
        %v2261 = vpop.f32.mrb[0].mxu0
        %v2262 = vadd.f32 %v2142, %v2261
        %v2263 = vpop.f32.mrb[0].mxu0
        %v2264 = vadd.f32 %v2138, %v2263
        %v2265 = vpop.f32.mrb[0].mxu0
        %v2266 = vadd.f32 %v2142, %v2265
        %2267 = vdwg.mxu0
        %v2268 = vmul.f32 %v2260, 0.5
        %v2269 = vmul.f32 %v2262, 0.5
        %v2270 = vmul.f32 %v2264, 0.5
        %v2271 = vmul.f32 %v2266, 0.5
        %v2272 = vmul.f32 %v2260, 0.70710677
        %v2273 = vmul.f32 %v2262, 0.70710677
        %v2274 = vmul.f32 %v2264, 0.70710677
        %v2275 = vmul.f32 %v2266, 0.70710677
        %v2276 = verf.f32.pop %v2272
        %v2277 = verf.f32.pop %v2273
        %v2278 = verf.f32.pop %v2274
        %v2279 = verf.f32.pop %v2275
        %v2280 = vadd.f32 %v2276, 1.0
        %v2281 = vadd.f32 %v2277, 1.0
        %v2282 = vadd.f32 %v2278, 1.0
        %v2283 = vadd.f32 %v2279, 1.0
        %v2284 = vmul.f32 %v2268, %v2280
        %v2285 = vmul.f32 %v2269, %v2281
        %v2286 = vmul.f32 %v2270, %v2282
        %v2287 = vmul.f32 %v2271, %v2283
        %v2288 = vpack.c.bf16 %v2286, %v2284
        %v2289 = vpack.c.bf16 %v2287, %v2285
        %v2290 = vld [vmem:[#allocation8] sm:$0xf]
        %v2291 = vld [vmem:[#allocation8 + $0x4] sm:$0xf]
        %v2292 = vld [vmem:[#allocation8 + $0x8] sm:$0xf]
        %v2293 = vld [vmem:[#allocation8 + $0xc] sm:$0xf]
        %v2294 = vld [vmem:[#allocation8 + $0x10] sm:$0xf]
        %v2295 = vld [vmem:[#allocation8 + $0x14] sm:$0xf]
        %v2296 = vld [vmem:[#allocation8 + $0x18] sm:$0xf]
        %v2297 = vld [vmem:[#allocation8 + $0x1c] sm:$0xf]
        %v2298 = vld [vmem:[#allocation8 + $0x20] sm:$0xf]
        %v2299 = vld [vmem:[#allocation8 + $0x24] sm:$0xf]
        %v2300 = vld [vmem:[#allocation8 + $0x28] sm:$0xf]
        %v2301 = vld [vmem:[#allocation8 + $0x2c] sm:$0xf]
        %v2302 = vld [vmem:[#allocation8 + $0x30] sm:$0xf]
        %v2303 = vld [vmem:[#allocation8 + $0x34] sm:$0xf]
        %v2304 = vld [vmem:[#allocation8 + $0x38] sm:$0xf]
        %v2305 = vld [vmem:[#allocation8 + $0x3c] sm:$0xf]
        %v2306 = vld [vmem:[#allocation8 + $0x40] sm:$0xf]
        %v2307 = vld [vmem:[#allocation8 + $0x44] sm:$0xf]
        %v2308 = vld [vmem:[#allocation8 + $0x48] sm:$0xf]
        %v2309 = vld [vmem:[#allocation8 + $0x4c] sm:$0xf]
        %v2310 = vld [vmem:[#allocation8 + $0x50] sm:$0xf]
        %v2311 = vld [vmem:[#allocation8 + $0x54] sm:$0xf]
        %v2312 = vld [vmem:[#allocation8 + $0x58] sm:$0xf]
        %v2313 = vld [vmem:[#allocation8 + $0x5c] sm:$0xf]
        %v2314 = vld [vmem:[#allocation8 + $0x60] sm:$0xf]
        %v2315 = vld [vmem:[#allocation8 + $0x64] sm:$0xf]
        %v2316 = vld [vmem:[#allocation8 + $0x68] sm:$0xf]
        %v2317 = vld [vmem:[#allocation8 + $0x6c] sm:$0xf]
        %v2318 = vld [vmem:[#allocation8 + $0x70] sm:$0xf]
        %v2319 = vld [vmem:[#allocation8 + $0x74] sm:$0xf]
        %v2320 = vld [vmem:[#allocation8 + $0x78] sm:$0xf]
        %v2321 = vld [vmem:[#allocation8 + $0x7c] sm:$0xf]
        %v2322 = vld [vmem:[%s10] sm:$0x1]
        %v2324 = vlaneseq
        %v2325 = vshrl.u32 %v2324, 7
        %v2326 = vsub.s32 0, %v2325
        %v2327 = vrot.slane %v2322, %v2326
        %v2361 = vunpack.c.l.b16 %v2290
        %v2362 = vunpack.c.l.b16 %v2291
        %v2363 = vunpack.c.l.b16 %v2292
        %v2364 = vunpack.c.l.b16 %v2293
        %v2365 = vunpack.c.l.b16 %v2294
        %v2366 = vunpack.c.l.b16 %v2295
        %v2367 = vunpack.c.l.b16 %v2296
        %v2368 = vunpack.c.l.b16 %v2297
        %v2369 = vunpack.c.l.b16 %v2298
        %v2370 = vunpack.c.l.b16 %v2299
        %v2371 = vunpack.c.l.b16 %v2300
        %v2372 = vunpack.c.l.b16 %v2301
        %v2373 = vunpack.c.l.b16 %v2302
        %v2374 = vunpack.c.l.b16 %v2303
        %v2375 = vunpack.c.l.b16 %v2304
        %v2376 = vunpack.c.l.b16 %v2305
        %v2377 = vunpack.c.l.b16 %v2306
        %v2378 = vunpack.c.l.b16 %v2307
        %v2379 = vunpack.c.l.b16 %v2308
        %v2380 = vunpack.c.l.b16 %v2309
        %v2381 = vunpack.c.l.b16 %v2310
        %v2382 = vunpack.c.l.b16 %v2311
        %v2383 = vunpack.c.l.b16 %v2312
        %v2384 = vunpack.c.l.b16 %v2313
        %v2385 = vunpack.c.l.b16 %v2314
        %v2386 = vunpack.c.l.b16 %v2315
        %v2387 = vunpack.c.l.b16 %v2316
        %v2388 = vunpack.c.l.b16 %v2317
        %v2389 = vunpack.c.l.b16 %v2318
        %v2390 = vunpack.c.l.b16 %v2319
        %v2391 = vunpack.c.l.b16 %v2320
        %v2392 = vunpack.c.l.b16 %v2321
        %v2393 = vpack.c.b16 %v2362, %v2361
        %v2394 = vpack.c.b16 %v2364, %v2363
        %v2395 = vpack.c.b16 %v2366, %v2365
        %v2396 = vpack.c.b16 %v2368, %v2367
        %v2397 = vpack.c.b16 %v2370, %v2369
        %v2398 = vpack.c.b16 %v2372, %v2371
        %v2399 = vpack.c.b16 %v2374, %v2373
        %v2400 = vpack.c.b16 %v2376, %v2375
        %v2401 = vpack.c.b16 %v2378, %v2377
        %v2402 = vpack.c.b16 %v2380, %v2379
        %v2403 = vpack.c.b16 %v2382, %v2381
        %v2404 = vpack.c.b16 %v2384, %v2383
        %v2405 = vpack.c.b16 %v2386, %v2385
        %v2406 = vpack.c.b16 %v2388, %v2387
        %v2407 = vpack.c.b16 %v2390, %v2389
        %v2408 = vpack.c.b16 %v2392, %v2391
        %2425 = vmatprep.subr.bf16.mxu0 0
        %2426 = vmatpush1.bf16.msra.mxu0 %v2393
        %2427 = vmatprep.subr.bf16.mxu0 0
        %2428 = vmatpush1.bf16.msra.mxu0 %v2394
        %2429 = vmatprep.subr.bf16.mxu0 0
        %2430 = vmatpush1.bf16.msra.mxu0 %v2395
        %2431 = vmatprep.subr.bf16.mxu0 0
        %2432 = vmatpush1.bf16.msra.mxu0 %v2396
        %2433 = vmatprep.subr.bf16.mxu0 0
        %2434 = vmatpush1.bf16.msra.mxu0 %v2397
        %2435 = vmatprep.subr.bf16.mxu0 0
        %2436 = vmatpush1.bf16.msra.mxu0 %v2398
        %2437 = vmatprep.subr.bf16.mxu0 0
        %2438 = vmatpush1.bf16.msra.mxu0 %v2399
        %2439 = vmatprep.subr.bf16.mxu0 0
        %2440 = vmatpush1.bf16.msra.mxu0 %v2400
        %2441 = vmatprep.subr.bf16.mxu0 0
        %2442 = vmatpush1.bf16.msra.mxu0 %v2401
        %2443 = vmatprep.subr.bf16.mxu0 0
        %2444 = vmatpush1.bf16.msra.mxu0 %v2402
        %2445 = vmatprep.subr.bf16.mxu0 0
        %2446 = vmatpush1.bf16.msra.mxu0 %v2403
        %2447 = vmatprep.subr.bf16.mxu0 0
        %2448 = vmatpush1.bf16.msra.mxu0 %v2404
        %2449 = vmatprep.subr.bf16.mxu0 0
        %2450 = vmatpush1.bf16.msra.mxu0 %v2405
        %2451 = vmatprep.subr.bf16.mxu0 0
        %2452 = vmatpush1.bf16.msra.mxu0 %v2406
        %2453 = vmatprep.subr.bf16.mxu0 0
        %2454 = vmatpush1.bf16.msra.mxu0 %v2407
        %2455 = vmatprep.subr.bf16.mxu0 0
        %2456 = vmatpush1.bf16.msra.mxu0 %v2408
        %2457 = vmatprep.mubr.bf16.mxu0 %v2289
        %2458 = vmatmul.mubr.bf16.gmra.mrb[0].mxu0 %v2288
        %v2459 = vpop.f32.mrb[0].mxu0
        %v2460 = vadd.f32 %v2327, %v2459
        %v2461 = vpop.f32.mrb[0].mxu0
        %v2462 = vpop.f32.mrb[0].mxu0
        %v2463 = vadd.f32 %v2327, %v2462
        %v2464 = vpop.f32.mrb[0].mxu0
        %2465 = vdwg.mxu0
        %v2466 = vadd.f32 %v2114, %v2460
        %v2467 = vadd.f32 %v2115, %v2463
        %2468 = vadd.xlane.f32.xlu0 %v2466
        %v2469 = vpop.xlane.xlu0 %2468
        %2470 = vadd.xlane.f32.xlu0 %v2467
        %v2471 = vpop.xlane.xlu0 %2470
        %v2472 = vmul.f32 %v2469, %v2079
        %v2473 = vmul.f32 %v2471, %v2079
        %v2474 = vsub.f32 %v2466, %v2472
        %v2475 = vsub.f32 %v2467, %v2473
        %v2476 = vmul.f32 %v2474, %v2474
        %v2477 = vmul.f32 %v2475, %v2475
        %2478 = vadd.xlane.f32.xlu0 %v2476
        %v2479 = vpop.xlane.xlu0 %2478
        %2480 = vadd.xlane.f32.xlu0 %v2477
        %v2481 = vpop.xlane.xlu0 %2480
        %v2482 = vmul.f32 %v2479, %v2079
        %v2483 = vmul.f32 %v2481, %v2079
        %v2484 = vadd.f32 %v2482, 1e-05
        %v2485 = vadd.f32 %v2483, 1e-05
        %v2486 = vrsqrt.pop %v2484
        %v2487 = vrsqrt.pop %v2485
        %v2488 = vmul.f32 %v2474, %v2486
        %v2489 = vmul.f32 %v2475, %v2487
        %v2490 = vld [vmem:[%s13] sm:$0x1]
        %v2492 = vlaneseq
        %v2493 = vshrl.u32 %v2492, 7
        %v2494 = vsub.s32 0, %v2493
        %v2495 = vrot.slane %v2490, %v2494
        %v2497 = vmul.f32 %v2488, %v2495
        %v2498 = vmul.f32 %v2489, %v2495
        %v2499 = vld [vmem:[%s14] sm:$0x1]
        %v2501 = vlaneseq
        %v2502 = vshrl.u32 %v2501, 7
        %v2503 = vsub.s32 0, %v2502
        %v2504 = vrot.slane %v2499, %v2503
        %v2506 = vadd.f32 %v2497, %v2504
        %v2507 = vadd.f32 %v2498, %v2504
        %v2508 = vpack.c.bf16 %v2506, %v2506
        %v2509 = vpack.c.bf16 %v2507, %v2507
        %2510 = vst [vmem:[%s577] sm:$0xf] %v2508
        %2511 = vst [vmem:[%s577 + $0x4] sm:$0xf] %v2509
        %s2512 = sand.u32 %s370, 1
        %s2513 = scalar_lea.sflag [#allocation4], %s2512
        %s2514 = sand.u32 %s370, 1
        %s2515 = smul.addr %s2514, 8
        %s2516 = scalar_lea.vmem [#allocation10], %s2515
        // Predicated region
        $region97: #{tpu_custom_call.1} parent=79 // pred_check
          %p2517 = pneg %p380
        $region98: #{tpu_custom_call.1} parent=79 // pred_check_branch
          %2519 = sbr.rel (%p2517) target = $region100
        $region99: #{tpu_custom_call.1} parent=79 // pred_region
          %s2520 = smul.u32 2, %s32
          %s2522 = ssub.s32 128, 128
          %2523 = vsyncadd %s2513, %s2522
          %s2524 = smul.addr %s2520, 64
          %s2525 = scalar_lea.hbm %s15, %s2524
          %s2526 = sshll.u32 %s2516, 4
          %s2527 = int_to_ptr.vmem [resolvable:$true] %s2526
          %2532 = dma.vmem_to_hbm [thread:$0]  %s2527, 128, %s2525, %s2513, 64, 64, 4
        $region100: #{tpu_custom_call.1} parent=79 // pred_fallthru
          _
      $region80: #{tpu_custom_call.1} parent=5 // pred_fallthru
        _
      %p2533 = scmp.le.s32.totalorder 2, %s27
      // Predicated region
      $region101: #{tpu_custom_call.1} parent=5 // pred_check
        %p2534 = pneg %p2533
      $region102: #{tpu_custom_call.1} parent=5 // pred_check_branch
        %2536 = sbr.rel (%p2534) target = $region104
      $region103: #{tpu_custom_call.1} parent=5 // pred_region
        %s2537 = ssub.s32 %s27, 2
        // Predicated region
        $region105: #{tpu_custom_call.1} parent=103 // pred_check
          %p2538 = pneg %p386
        $region106: #{tpu_custom_call.1} parent=103 // pred_check_branch
          %2540 = sbr.rel (%p2538) target = $region108
        $region107: #{tpu_custom_call.1} parent=103 // pred_region
          %s2541 = sand.u32 %s371, 1
          %s2542 = scalar_lea.sflag [#allocation4], %s2541
          %s2543 = sand.u32 %s371, 1
          %s2544 = smul.addr %s2543, 8
          %s2545 = scalar_lea.vmem [#allocation10], %s2544
          %2546 = dma.done %s2542, 128
        $region108: #{tpu_custom_call.1} parent=103 // pred_fallthru
          _
      $region104: #{tpu_custom_call.1} parent=5 // pred_fallthru
        _
    $region6: #{tpu_custom_call.1} parent=1 // loop_footer
      %s31 = sadd.s32 1, %s27
    $region7: #{tpu_custom_call.1} parent=1 // loop_footer_branch
      %26 = sbr.rel target = $region3
    $region8: #{tpu_custom_call.1} parent=1 // loop_exit
      _
    %2547 = vsyncpa [#allocation3], 1
    %s2548 = scalar_lea.sflag [#allocation3], 1
    %2549 = vsyncpa %s2548, 1
    %2550 = vsyncpa [#allocation6], 1
    %2551 = vsyncpa [#allocation9], 1
    %2552 = vsyncpa [#allocation4], 1
    %s2553 = scalar_lea.sflag [#allocation4], 1
    %2554 = vsyncpa %s2553, 1

// kernel: tpu_custom_call.1
$region0: #{tpu_custom_call.1}
  #allocation0 [shape = 'u32[]', space=smem, size = 0x4, offset = 0x4, fixed_abs, tag = 'smem constant byte address 0x4 - core index']
  #allocation1 [shape = 'u32[144,128]{1,0:T(1,128)}', space=vmem, size = 0x12000, scoped, tag = 'internal scratch']
  %s0 = inlined_call_operand.vmem [shape: bf16[4,8,128], index: 0, kind: input, shape index: {}]
  %s1 = inlined_call_operand.vmem [shape: f32[4,1,8], index: 1, kind: input, shape index: {}]
  %s2 = inlined_call_operand.vmem [shape: f32[4,8,1], index: 2, kind: input, shape index: {}]
  %s3 = inlined_call_operand.hbm [shape: bf16[128,384], index: 3, kind: input, shape index: {}]
  %s4 = inlined_call_operand.vmem [shape: f32[1,384], index: 4, kind: input, shape index: {}]
  %s5 = inlined_call_operand.hbm [shape: bf16[4,32,128], index: 5, kind: input, shape index: {}]
  %s6 = inlined_call_operand.vmem [shape: f32[1,128], index: 6, kind: input, shape index: {}]
  %s7 = inlined_call_operand.hbm [shape: bf16[128,256], index: 7, kind: input, shape index: {}]
  %s8 = inlined_call_operand.vmem [shape: f32[1,256], index: 8, kind: input, shape index: {}]
  %s9 = inlined_call_operand.hbm [shape: bf16[256,128], index: 9, kind: input, shape index: {}]
  %s10 = inlined_call_operand.vmem [shape: f32[1,128], index: 10, kind: input, shape index: {}]
  %s11 = inlined_call_operand.vmem [shape: f32[1,128], index: 11, kind: input, shape index: {}]
  %s12 = inlined_call_operand.vmem [shape: f32[1,128], index: 12, kind: input, shape index: {}]
  %s13 = inlined_call_operand.vmem [shape: f32[1,128], index: 13, kind: input, shape index: {}]
  %s14 = inlined_call_operand.vmem [shape: f32[1,128], index: 14, kind: input, shape index: {}]
  %s15 = inlined_call_operand.hbm [shape: bf16[4,8,128], index: 15, kind: output, shape index: {}]
  %s16 = sld [smem:[#allocation0]]
  $region109: #{tpu_custom_call.1} parent=0
    _
  %s18 = ssub.s32 1, %s16
  %s19 = scalar_select 0, %s18, %s16
  $region1: #{tpu_custom_call.1} parent=0
    #allocation2 [shape = 'u8[98304]{0}', space=vmem, size = 0x18000, scoped, tag = 'input window, operand 3, single buffered']
    #allocation3 [shape = 's32[2]{0}', space=sflag, size = 0x8, scoped, tag = 'scoped memory for tpu_custom_call.1']
    #allocation4 [shape = 's32[2]{0}', space=sflag, size = 0x8, scoped, tag = 'scoped memory for tpu_custom_call.1']
    #allocation5 [shape = 'u8[32768]{0}', space=vmem, size = 0x8000, scoped, tag = 'input window, operand 5, single buffered']
    #allocation6 [shape = 's32[1]{0}', space=sflag, size = 0x4, scoped, tag = 'scoped memory for tpu_custom_call.1']
    #allocation7 [shape = 'u8[65536]{0}', space=vmem, size = 0x10000, scoped, tag = 'input window, operand 7, single buffered']
    #allocation8 [shape = 'u8[65536]{0}', space=vmem, size = 0x10000, scoped, tag = 'input window, operand 9, single buffered']
    #allocation9 [shape = 's32[1]{0}', space=sflag, size = 0x4, scoped, tag = 'scoped memory for tpu_custom_call.1']
    #allocation10 [shape = 'u8[8192]{0}', space=vmem, size = 0x2000, scoped, tag = 'output window, operand 0']
    %20 = vsyncpa [#allocation3], 0
    %21 = vsyncpa [#allocation6], 0
    %22 = vsyncpa [#allocation9], 0
    %23 = vsyncpa [#allocation4], 0
    %s24 = scalar_lea.sflag [#allocation4], 1
    %25 = vsyncpa %s24, 0
    loop: start=0, step=1, limit=4
    $region2: #{tpu_custom_call.1} parent=1 // loop_pre_header
      _
    $region3: #{tpu_custom_call.1} parent=1 // loop_header
      %s27 = sphi 0, %s31
      %p28 = scmp.ge.s32.totalorder %s27, 4
      %s37 = sphi 0, %s39
      %s40 = sphi 0, %s37
      %s41 = sphi 0, %s40
      %s57 = sphi 0, %s41
      %s63 = sphi 0, %s65
      %s66 = sphi 0, %s63
      %s67 = sphi 0, %s66
      %s83 = sphi 0, %s67
      %s89 = sphi 0, %s91
      %s92 = sphi 0, %s89
      %s93 = sphi 0, %s92
      %s109 = sphi 0, %s93
      %s113 = sphi 0, %s113
      %s115 = sphi 0, %s113
      %s116 = sphi 0, %s115
      %s130 = sphi 0, %s116
      %s134 = sphi 0, %s134
      %s136 = sphi 0, %s134
      %s137 = sphi 0, %s136
      %s151 = sphi 0, %s137
      %s155 = sphi 0, %s155
      %s157 = sphi 0, %s155
      %s158 = sphi 0, %s157
      %s172 = sphi 0, %s158
      %s176 = sphi 0, %s176
      %s178 = sphi 0, %s176
      %s179 = sphi 0, %s178
      %s193 = sphi 0, %s179
      %s197 = sphi 0, %s197
      %s199 = sphi 0, %s197
      %s200 = sphi 0, %s199
      %s214 = sphi 0, %s200
      %s218 = sphi 0, %s218
      %s220 = sphi 0, %s218
      %s221 = sphi 0, %s220
      %s235 = sphi 0, %s221
      %s239 = sphi 0, %s239
      %s241 = sphi 0, %s239
      %s242 = sphi 0, %s241
      %s256 = sphi 0, %s242
      %s260 = sphi 0, %s260
      %s262 = sphi 0, %s260
      %s263 = sphi 0, %s262
      %s277 = sphi 0, %s263
      %s281 = sphi 0, %s281
      %s283 = sphi 0, %s281
      %s284 = sphi 0, %s283
      %s298 = sphi 0, %s284
      %s302 = sphi 0, %s302
      %s304 = sphi 0, %s302
      %s305 = sphi 0, %s304
      %s319 = sphi 0, %s305
      %s323 = sphi 0, %s323
      %s325 = sphi 0, %s323
      %s326 = sphi 0, %s325
      %s340 = sphi 0, %s326
      %s344 = sphi 0, %s344
      %s346 = sphi 0, %s344
      %s347 = sphi 0, %s346
      %s361 = sphi 0, %s347
      %s367 = sphi 0, %s369
      %s370 = sphi 0, %s367
      %s371 = sphi 0, %s370
      %s387 = sphi 0, %s371
    $region4: #{tpu_custom_call.1} parent=1 // loop_header_branch
      %30 = sbr.rel (%p28) target = $region8
    $region5: #{tpu_custom_call.1} parent=1 // loop_body
      %s32 = ssub.s32 %s27, 1
      %s33 = ssub.s32 %s27, 2
      %s34 = sadd.s32 %s27, 1
      %s35 = ssub.s32 %s27, %s34
      %p36 = scmp.eq.s32.totalorder %s35, 0
      %s38 = sadd.s32 %s37, 1
      %s39 = scalar_select %p36, %s37, %s38
      %p42 = pneg %p36
      %p43 = scmp.eq.s32.totalorder %s27, 1
      %p44 = por %p42, %p43
      %p45 = scmp.ne.s32.totalorder %s37, %s40
      %p46 = scmp.eq.s32.totalorder %s27, 0
      %p47 = por %p45, %p46
      %p48 = scmp.ne.s32.totalorder %s37, %s40
      %p49 = scmp.eq.s32.totalorder %s32, 1
      %p50 = por %p48, %p49
      %p51 = scmp.ne.s32.totalorder %s40, %s41
      %p52 = scmp.eq.s32.totalorder %s32, 0
      %p53 = por %p51, %p52
      %p54 = scmp.ne.s32.totalorder %s40, %s41
      %p55 = scmp.eq.s32.totalorder %s33, 1
      %p56 = por %p54, %p55
      %p58 = scmp.ne.s32.totalorder %s41, %s57
      %p59 = scmp.eq.s32.totalorder %s33, 0
      %p60 = por %p58, %p59
      %s61 = ssub.s32 %s27, %s34
      %p62 = scmp.eq.s32.totalorder %s61, 0
      %s64 = sadd.s32 %s63, 1
      %s65 = scalar_select %p62, %s63, %s64
      %p68 = pneg %p62
      %p69 = scmp.eq.s32.totalorder %s27, 1
      %p70 = por %p68, %p69
      %p71 = scmp.ne.s32.totalorder %s63, %s66
      %p72 = scmp.eq.s32.totalorder %s27, 0
      %p73 = por %p71, %p72
      %p74 = scmp.ne.s32.totalorder %s63, %s66
      %p75 = scmp.eq.s32.totalorder %s32, 1
      %p76 = por %p74, %p75
      %p77 = scmp.ne.s32.totalorder %s66, %s67
      %p78 = scmp.eq.s32.totalorder %s32, 0
      %p79 = por %p77, %p78
      %p80 = scmp.ne.s32.totalorder %s66, %s67
      %p81 = scmp.eq.s32.totalorder %s33, 1
      %p82 = por %p80, %p81
      %p84 = scmp.ne.s32.totalorder %s67, %s83
      %p85 = scmp.eq.s32.totalorder %s33, 0
      %p86 = por %p84, %p85
      %s87 = ssub.s32 %s27, %s34
      %p88 = scmp.eq.s32.totalorder %s87, 0
      %s90 = sadd.s32 %s89, 1
      %s91 = scalar_select %p88, %s89, %s90
      %p94 = pneg %p88
      %p95 = scmp.eq.s32.totalorder %s27, 1
      %p96 = por %p94, %p95
      %p97 = scmp.ne.s32.totalorder %s89, %s92
      %p98 = scmp.eq.s32.totalorder %s27, 0
      %p99 = por %p97, %p98
      %p100 = scmp.ne.s32.totalorder %s89, %s92
      %p101 = scmp.eq.s32.totalorder %s32, 1
      %p102 = por %p100, %p101
      %p103 = scmp.ne.s32.totalorder %s92, %s93
      %p104 = scmp.eq.s32.totalorder %s32, 0
      %p105 = por %p103, %p104
      %p106 = scmp.ne.s32.totalorder %s92, %s93
      %p107 = scmp.eq.s32.totalorder %s33, 1
      %p108 = por %p106, %p107
      %p110 = scmp.ne.s32.totalorder %s93, %s109
      %p111 = scmp.eq.s32.totalorder %s33, 0
      %p112 = por %p110, %p111
      %s114 = sadd.s32 %s113, 1
      %p117 = scmp.eq.s32.totalorder %s27, 1
      %p118 = scmp.ne.s32.totalorder %s113, %s115
      %p119 = scmp.eq.s32.totalorder %s27, 0
      %p120 = por %p118, %p119
      %p121 = scmp.ne.s32.totalorder %s113, %s115
      %p122 = scmp.eq.s32.totalorder %s32, 1
      %p123 = por %p121, %p122
      %p124 = scmp.ne.s32.totalorder %s115, %s116
      %p125 = scmp.eq.s32.totalorder %s32, 0
      %p126 = por %p124, %p125
      %p127 = scmp.ne.s32.totalorder %s115, %s116
      %p128 = scmp.eq.s32.totalorder %s33, 1
      %p129 = por %p127, %p128
      %p131 = scmp.ne.s32.totalorder %s116, %s130
      %p132 = scmp.eq.s32.totalorder %s33, 0
      %p133 = por %p131, %p132
      %s135 = sadd.s32 %s134, 1
      %p138 = scmp.eq.s32.totalorder %s27, 1
      %p139 = scmp.ne.s32.totalorder %s134, %s136
      %p140 = scmp.eq.s32.totalorder %s27, 0
      %p141 = por %p139, %p140
      %p142 = scmp.ne.s32.totalorder %s134, %s136
      %p143 = scmp.eq.s32.totalorder %s32, 1
      %p144 = por %p142, %p143
      %p145 = scmp.ne.s32.totalorder %s136, %s137
      %p146 = scmp.eq.s32.totalorder %s32, 0
      %p147 = por %p145, %p146
      %p148 = scmp.ne.s32.totalorder %s136, %s137
      %p149 = scmp.eq.s32.totalorder %s33, 1
      %p150 = por %p148, %p149
      %p152 = scmp.ne.s32.totalorder %s137, %s151
      %p153 = scmp.eq.s32.totalorder %s33, 0
      %p154 = por %p152, %p153
      %s156 = sadd.s32 %s155, 1
      %p159 = scmp.eq.s32.totalorder %s27, 1
      %p160 = scmp.ne.s32.totalorder %s155, %s157
      %p161 = scmp.eq.s32.totalorder %s27, 0
      %p162 = por %p160, %p161
      %p163 = scmp.ne.s32.totalorder %s155, %s157
      %p164 = scmp.eq.s32.totalorder %s32, 1
      %p165 = por %p163, %p164
      %p166 = scmp.ne.s32.totalorder %s157, %s158
      %p167 = scmp.eq.s32.totalorder %s32, 0
      %p168 = por %p166, %p167
      %p169 = scmp.ne.s32.totalorder %s157, %s158
      %p170 = scmp.eq.s32.totalorder %s33, 1
      %p171 = por %p169, %p170
      %p173 = scmp.ne.s32.totalorder %s158, %s172
      %p174 = scmp.eq.s32.totalorder %s33, 0
      %p175 = por %p173, %p174
      %s177 = sadd.s32 %s176, 1
      %p180 = scmp.eq.s32.totalorder %s27, 1
      %p181 = scmp.ne.s32.totalorder %s176, %s178
      %p182 = scmp.eq.s32.totalorder %s27, 0
      %p183 = por %p181, %p182
      %p184 = scmp.ne.s32.totalorder %s176, %s178
      %p185 = scmp.eq.s32.totalorder %s32, 1
      %p186 = por %p184, %p185
      %p187 = scmp.ne.s32.totalorder %s178, %s179
      %p188 = scmp.eq.s32.totalorder %s32, 0
      %p189 = por %p187, %p188
      %p190 = scmp.ne.s32.totalorder %s178, %s179
      %p191 = scmp.eq.s32.totalorder %s33, 1
      %p192 = por %p190, %p191
      %p194 = scmp.ne.s32.totalorder %s179, %s193
      %p195 = scmp.eq.s32.totalorder %s33, 0
      %p196 = por %p194, %p195
      %s198 = sadd.s32 %s197, 1
      %p201 = scmp.eq.s32.totalorder %s27, 1
      %p202 = scmp.ne.s32.totalorder %s197, %s199
      %p203 = scmp.eq.s32.totalorder %s27, 0
      %p204 = por %p202, %p203
      %p205 = scmp.ne.s32.totalorder %s197, %s199
      %p206 = scmp.eq.s32.totalorder %s32, 1
      %p207 = por %p205, %p206
      %p208 = scmp.ne.s32.totalorder %s199, %s200
      %p209 = scmp.eq.s32.totalorder %s32, 0
      %p210 = por %p208, %p209
      %p211 = scmp.ne.s32.totalorder %s199, %s200
      %p212 = scmp.eq.s32.totalorder %s33, 1
      %p213 = por %p211, %p212
      %p215 = scmp.ne.s32.totalorder %s200, %s214
      %p216 = scmp.eq.s32.totalorder %s33, 0
      %p217 = por %p215, %p216
      %s219 = sadd.s32 %s218, 1
      %p222 = scmp.eq.s32.totalorder %s27, 1
      %p223 = scmp.ne.s32.totalorder %s218, %s220
      %p224 = scmp.eq.s32.totalorder %s27, 0
      %p225 = por %p223, %p224
      %p226 = scmp.ne.s32.totalorder %s218, %s220
      %p227 = scmp.eq.s32.totalorder %s32, 1
      %p228 = por %p226, %p227
      %p229 = scmp.ne.s32.totalorder %s220, %s221
      %p230 = scmp.eq.s32.totalorder %s32, 0
      %p231 = por %p229, %p230
      %p232 = scmp.ne.s32.totalorder %s220, %s221
      %p233 = scmp.eq.s32.totalorder %s33, 1
      %p234 = por %p232, %p233
      %p236 = scmp.ne.s32.totalorder %s221, %s235
      %p237 = scmp.eq.s32.totalorder %s33, 0
      %p238 = por %p236, %p237
      %s240 = sadd.s32 %s239, 1
      %p243 = scmp.eq.s32.totalorder %s27, 1
      %p244 = scmp.ne.s32.totalorder %s239, %s241
      %p245 = scmp.eq.s32.totalorder %s27, 0
      %p246 = por %p244, %p245
      %p247 = scmp.ne.s32.totalorder %s239, %s241
      %p248 = scmp.eq.s32.totalorder %s32, 1
      %p249 = por %p247, %p248
      %p250 = scmp.ne.s32.totalorder %s241, %s242
      %p251 = scmp.eq.s32.totalorder %s32, 0
      %p252 = por %p250, %p251
      %p253 = scmp.ne.s32.totalorder %s241, %s242
      %p254 = scmp.eq.s32.totalorder %s33, 1
      %p255 = por %p253, %p254
      %p257 = scmp.ne.s32.totalorder %s242, %s256
      %p258 = scmp.eq.s32.totalorder %s33, 0
      %p259 = por %p257, %p258
      %s261 = sadd.s32 %s260, 1
      %p264 = scmp.eq.s32.totalorder %s27, 1
      %p265 = scmp.ne.s32.totalorder %s260, %s262
      %p266 = scmp.eq.s32.totalorder %s27, 0
      %p267 = por %p265, %p266
      %p268 = scmp.ne.s32.totalorder %s260, %s262
      %p269 = scmp.eq.s32.totalorder %s32, 1
      %p270 = por %p268, %p269
      %p271 = scmp.ne.s32.totalorder %s262, %s263
      %p272 = scmp.eq.s32.totalorder %s32, 0
      %p273 = por %p271, %p272
      %p274 = scmp.ne.s32.totalorder %s262, %s263
      %p275 = scmp.eq.s32.totalorder %s33, 1
      %p276 = por %p274, %p275
      %p278 = scmp.ne.s32.totalorder %s263, %s277
      %p279 = scmp.eq.s32.totalorder %s33, 0
      %p280 = por %p278, %p279
      %s282 = sadd.s32 %s281, 1
      %p285 = scmp.eq.s32.totalorder %s27, 1
      %p286 = scmp.ne.s32.totalorder %s281, %s283
      %p287 = scmp.eq.s32.totalorder %s27, 0
      %p288 = por %p286, %p287
      %p289 = scmp.ne.s32.totalorder %s281, %s283
      %p290 = scmp.eq.s32.totalorder %s32, 1
      %p291 = por %p289, %p290
      %p292 = scmp.ne.s32.totalorder %s283, %s284
      %p293 = scmp.eq.s32.totalorder %s32, 0
      %p294 = por %p292, %p293
      %p295 = scmp.ne.s32.totalorder %s283, %s284
      %p296 = scmp.eq.s32.totalorder %s33, 1
      %p297 = por %p295, %p296
      %p299 = scmp.ne.s32.totalorder %s284, %s298
      %p300 = scmp.eq.s32.totalorder %s33, 0
      %p301 = por %p299, %p300
      %s303 = sadd.s32 %s302, 1
      %p306 = scmp.eq.s32.totalorder %s27, 1
      %p307 = scmp.ne.s32.totalorder %s302, %s304
      %p308 = scmp.eq.s32.totalorder %s27, 0
      %p309 = por %p307, %p308
      %p310 = scmp.ne.s32.totalorder %s302, %s304
      %p311 = scmp.eq.s32.totalorder %s32, 1
      %p312 = por %p310, %p311
      %p313 = scmp.ne.s32.totalorder %s304, %s305
      %p314 = scmp.eq.s32.totalorder %s32, 0
      %p315 = por %p313, %p314
      %p316 = scmp.ne.s32.totalorder %s304, %s305
      %p317 = scmp.eq.s32.totalorder %s33, 1
      %p318 = por %p316, %p317
      %p320 = scmp.ne.s32.totalorder %s305, %s319
      %p321 = scmp.eq.s32.totalorder %s33, 0
      %p322 = por %p320, %p321
      %s324 = sadd.s32 %s323, 1
      %p327 = scmp.eq.s32.totalorder %s27, 1
      %p328 = scmp.ne.s32.totalorder %s323, %s325
      %p329 = scmp.eq.s32.totalorder %s27, 0
      %p330 = por %p328, %p329
      %p331 = scmp.ne.s32.totalorder %s323, %s325
      %p332 = scmp.eq.s32.totalorder %s32, 1
      %p333 = por %p331, %p332
      %p334 = scmp.ne.s32.totalorder %s325, %s326
      %p335 = scmp.eq.s32.totalorder %s32, 0
      %p336 = por %p334, %p335
      %p337 = scmp.ne.s32.totalorder %s325, %s326
      %p338 = scmp.eq.s32.totalorder %s33, 1
      %p339 = por %p337, %p338
      %p341 = scmp.ne.s32.totalorder %s326, %s340
      %p342 = scmp.eq.s32.totalorder %s33, 0
      %p343 = por %p341, %p342
      %s345 = sadd.s32 %s344, 1
      %p348 = scmp.eq.s32.totalorder %s27, 1
      %p349 = scmp.ne.s32.totalorder %s344, %s346
      %p350 = scmp.eq.s32.totalorder %s27, 0
      %p351 = por %p349, %p350
      %p352 = scmp.ne.s32.totalorder %s344, %s346
      %p353 = scmp.eq.s32.totalorder %s32, 1
      %p354 = por %p352, %p353
      %p355 = scmp.ne.s32.totalorder %s346, %s347
      %p356 = scmp.eq.s32.totalorder %s32, 0
      %p357 = por %p355, %p356
      %p358 = scmp.ne.s32.totalorder %s346, %s347
      %p359 = scmp.eq.s32.totalorder %s33, 1
      %p360 = por %p358, %p359
      %p362 = scmp.ne.s32.totalorder %s347, %s361
      %p363 = scmp.eq.s32.totalorder %s33, 0
      %p364 = por %p362, %p363
      %s365 = ssub.s32 %s27, %s34
      %p366 = scmp.eq.s32.totalorder %s365, 0
      %s368 = sadd.s32 %s367, 1
      %s369 = scalar_select %p366, %s367, %s368
      %p372 = pneg %p366
      %p373 = scmp.eq.s32.totalorder %s27, 1
      %p374 = por %p372, %p373
      %p375 = scmp.ne.s32.totalorder %s367, %s370
      %p376 = scmp.eq.s32.totalorder %s27, 0
      %p377 = por %p375, %p376
      %p378 = scmp.ne.s32.totalorder %s367, %s370
      %p379 = scmp.eq.s32.totalorder %s32, 1
      %p380 = por %p378, %p379
      %p381 = scmp.ne.s32.totalorder %s370, %s371
      %p382 = scmp.eq.s32.totalorder %s32, 0
      %p383 = por %p381, %p382
      %p384 = scmp.ne.s32.totalorder %s370, %s371
      %p385 = scmp.eq.s32.totalorder %s33, 1
      %p386 = por %p384, %p385
      %p388 = scmp.ne.s32.totalorder %s371, %s387
      %p389 = scmp.eq.s32.totalorder %s33, 0
      %p390 = por %p388, %p389
      %p391 = scmp.le.s32.totalorder 1, %s27
      %p392 = scmp.lt.s32.totalorder %s27, 3
      %p393 = pnand %p391, %p392
      %p394 = pneg %p393
      // Predicated region
      $region9: #{tpu_custom_call.1} parent=5 // pred_check
        _
      $region10: #{tpu_custom_call.1} parent=5 // pred_check_branch
        %396 = sbr.rel (%p393) target = $region12
      $region11: #{tpu_custom_call.1} parent=5 // pred_region
        %s397 = ssub.s32 %s27, 1
        // Predicated region
        $region13: #{tpu_custom_call.1} parent=11 // pred_check
          %p398 = pneg %p126
        $region14: #{tpu_custom_call.1} parent=11 // pred_check_branch
          %400 = sbr.rel (%p398) target = $region16
        $region15: #{tpu_custom_call.1} parent=11 // pred_region
          %s402 = ssub.s32 3072, 3072
          %403 = vsyncadd [#allocation3], %s402
          %s404 = sshll.u32 [#allocation2], 4
          %s405 = int_to_ptr.vmem [resolvable:$true] %s404
          %410 = dma.hbm_to_vmem [thread:$0]  %s3, 3072, %s405, [#allocation3], 192, 192, 12
        $region16: #{tpu_custom_call.1} parent=11 // pred_fallthru
          _
        // Predicated region
        $region17: #{tpu_custom_call.1} parent=11 // pred_check
          %p411 = pneg %p147
        $region18: #{tpu_custom_call.1} parent=11 // pred_check_branch
          %413 = sbr.rel (%p411) target = $region20
        $region19: #{tpu_custom_call.1} parent=11 // pred_region
          _
        $region20: #{tpu_custom_call.1} parent=11 // pred_fallthru
          _
        // Predicated region
        $region21: #{tpu_custom_call.1} parent=11 // pred_check
          %p414 = pneg %p168
        $region22: #{tpu_custom_call.1} parent=11 // pred_check_branch
          %416 = sbr.rel (%p414) target = $region24
        $region23: #{tpu_custom_call.1} parent=11 // pred_region
          %s418 = ssub.s32 1024, 1024
          %419 = vsyncadd [#allocation6], %s418
          %s420 = sshll.u32 [#allocation5], 4
          %s421 = int_to_ptr.vmem [resolvable:$true] %s420
          %426 = dma.hbm_to_vmem [thread:$0]  %s5, 1024, %s421, [#allocation6], 64, 64, 4
        $region24: #{tpu_custom_call.1} parent=11 // pred_fallthru
          _
        // Predicated region
        $region25: #{tpu_custom_call.1} parent=11 // pred_check
          %p427 = pneg %p189
        $region26: #{tpu_custom_call.1} parent=11 // pred_check_branch
          %429 = sbr.rel (%p427) target = $region28
        $region27: #{tpu_custom_call.1} parent=11 // pred_region
          _
        $region28: #{tpu_custom_call.1} parent=11 // pred_fallthru
          _
        // Predicated region
        $region29: #{tpu_custom_call.1} parent=11 // pred_check
          %p430 = pneg %p210
        $region30: #{tpu_custom_call.1} parent=11 // pred_check_branch
          %432 = sbr.rel (%p430) target = $region32
        $region31: #{tpu_custom_call.1} parent=11 // pred_region
          %s434 = ssub.s32 2048, 2048
          %435 = vsyncadd [#allocation6], %s434
          %s436 = sshll.u32 [#allocation7], 4
          %s437 = int_to_ptr.vmem [resolvable:$true] %s436
          %442 = dma.hbm_to_vmem [thread:$0]  %s7, 2048, %s437, [#allocation6], 128, 128, 8
        $region32: #{tpu_custom_call.1} parent=11 // pred_fallthru
          _
        // Predicated region
        $region33: #{tpu_custom_call.1} parent=11 // pred_check
          %p443 = pneg %p231
        $region34: #{tpu_custom_call.1} parent=11 // pred_check_branch
          %445 = sbr.rel (%p443) target = $region36
        $region35: #{tpu_custom_call.1} parent=11 // pred_region
          _
        $region36: #{tpu_custom_call.1} parent=11 // pred_fallthru
          _
        // Predicated region
        $region37: #{tpu_custom_call.1} parent=11 // pred_check
          %p446 = pneg %p252
        $region38: #{tpu_custom_call.1} parent=11 // pred_check_branch
          %448 = sbr.rel (%p446) target = $region40
        $region39: #{tpu_custom_call.1} parent=11 // pred_region
          %s450 = ssub.s32 2048, 2048
          %451 = vsyncadd [#allocation9], %s450
          %s452 = sshll.u32 [#allocation8], 4
          %s453 = int_to_ptr.vmem [resolvable:$true] %s452
          %458 = dma.hbm_to_vmem [thread:$0]  %s9, 2048, %s453, [#allocation9], 64, 64, 4
        $region40: #{tpu_custom_call.1} parent=11 // pred_fallthru
          _
        // Predicated region
        $region41: #{tpu_custom_call.1} parent=11 // pred_check
          %p459 = pneg %p273
        $region42: #{tpu_custom_call.1} parent=11 // pred_check_branch
          %461 = sbr.rel (%p459) target = $region44
        $region43: #{tpu_custom_call.1} parent=11 // pred_region
          _
        $region44: #{tpu_custom_call.1} parent=11 // pred_fallthru
          _
        // Predicated region
        $region45: #{tpu_custom_call.1} parent=11 // pred_check
          %p462 = pneg %p294
        $region46: #{tpu_custom_call.1} parent=11 // pred_check_branch
          %464 = sbr.rel (%p462) target = $region48
        $region47: #{tpu_custom_call.1} parent=11 // pred_region
          _
        $region48: #{tpu_custom_call.1} parent=11 // pred_fallthru
          _
        // Predicated region
        $region49: #{tpu_custom_call.1} parent=11 // pred_check
          %p465 = pneg %p315
        $region50: #{tpu_custom_call.1} parent=11 // pred_check_branch
          %467 = sbr.rel (%p465) target = $region52
        $region51: #{tpu_custom_call.1} parent=11 // pred_region
          _
        $region52: #{tpu_custom_call.1} parent=11 // pred_fallthru
          _
        // Predicated region
        $region53: #{tpu_custom_call.1} parent=11 // pred_check
          %p468 = pneg %p336
        $region54: #{tpu_custom_call.1} parent=11 // pred_check_branch
          %470 = sbr.rel (%p468) target = $region56
        $region55: #{tpu_custom_call.1} parent=11 // pred_region
          _
        $region56: #{tpu_custom_call.1} parent=11 // pred_fallthru
          _
        // Predicated region
        $region57: #{tpu_custom_call.1} parent=11 // pred_check
          %p471 = pneg %p357
        $region58: #{tpu_custom_call.1} parent=11 // pred_check_branch
          %473 = sbr.rel (%p471) target = $region60
        $region59: #{tpu_custom_call.1} parent=11 // pred_region
          _
        $region60: #{tpu_custom_call.1} parent=11 // pred_fallthru
          _
      $region12: #{tpu_custom_call.1} parent=5 // pred_fallthru
        _
      %p474 = scmp.lt.s32.totalorder %s27, 2
      // Predicated region
      $region61: #{tpu_custom_call.1} parent=5 // pred_check
        %p475 = pneg %p474
      $region62: #{tpu_custom_call.1} parent=5 // pred_check_branch
        %477 = sbr.rel (%p475) target = $region64
      $region63: #{tpu_custom_call.1} parent=5 // pred_region
        // Predicated region
        $region65: #{tpu_custom_call.1} parent=63 // pred_check
          %p478 = pneg %p47
        $region66: #{tpu_custom_call.1} parent=63 // pred_check_branch
          %480 = sbr.rel (%p478) target = $region68
        $region67: #{tpu_custom_call.1} parent=63 // pred_region
          %s481 = smul.u32 2, %s27
          %p482 = scmp.lt.s32.totalorder %s481, 3
          %s483 = scalar_select %p482, %s481, 3
          %s484 = smul.addr %s483, 4
          %s485 = scalar_lea.vmem %s0, %s484
          %s486 = smul.u32 2, %s27
        $region68: #{tpu_custom_call.1} parent=63 // pred_fallthru
          _
        // Predicated region
        $region69: #{tpu_custom_call.1} parent=63 // pred_check
          %p487 = pneg %p73
        $region70: #{tpu_custom_call.1} parent=63 // pred_check_branch
          %489 = sbr.rel (%p487) target = $region72
        $region71: #{tpu_custom_call.1} parent=63 // pred_region
          %s490 = smul.u32 2, %s27
          %p491 = scmp.lt.s32.totalorder %s490, 3
          %s492 = scalar_select %p491, %s490, 3
          %s493 = scalar_lea.vmem %s1, %s492
          %s494 = smul.u32 2, %s27
        $region72: #{tpu_custom_call.1} parent=63 // pred_fallthru
          _
        // Predicated region
        $region73: #{tpu_custom_call.1} parent=63 // pred_check
          %p495 = pneg %p99
        $region74: #{tpu_custom_call.1} parent=63 // pred_check_branch
          %497 = sbr.rel (%p495) target = $region76
        $region75: #{tpu_custom_call.1} parent=63 // pred_region
          %s498 = smul.u32 2, %s27
          %p499 = scmp.lt.s32.totalorder %s498, 3
          %s500 = scalar_select %p499, %s498, 3
          %s501 = smul.addr %s500, 8
          %s502 = scalar_lea.vmem %s2, %s501
          %s503 = smul.u32 2, %s27
        $region76: #{tpu_custom_call.1} parent=63 // pred_fallthru
          _
      $region64: #{tpu_custom_call.1} parent=5 // pred_fallthru
        _
      %p504 = scmp.le.s32.totalorder 1, %s27
      %p505 = scmp.lt.s32.totalorder %s27, 3
      %p506 = pnand %p504, %p505
      %p507 = pneg %p506
      // Predicated region
      $region77: #{tpu_custom_call.1} parent=5 // pred_check
        _
      $region78: #{tpu_custom_call.1} parent=5 // pred_check_branch
        %509 = sbr.rel (%p506) target = $region80
      $region79: #{tpu_custom_call.1} parent=5 // pred_region
        %s510 = ssub.s32 %s27, 1
        // Predicated region
        $region81: #{tpu_custom_call.1} parent=79 // pred_check
          %p511 = pneg %p126
        $region82: #{tpu_custom_call.1} parent=79 // pred_check_branch
          %513 = sbr.rel (%p511) target = $region84
        $region83: #{tpu_custom_call.1} parent=79 // pred_region
          %514 = dma.done [#allocation3], 3072
        $region84: #{tpu_custom_call.1} parent=79 // pred_fallthru
          _
        // Predicated region
        $region85: #{tpu_custom_call.1} parent=79 // pred_check
          %p515 = pneg %p168
        $region86: #{tpu_custom_call.1} parent=79 // pred_check_branch
          %517 = sbr.rel (%p515) target = $region88
        $region87: #{tpu_custom_call.1} parent=79 // pred_region
          %518 = dma.done [#allocation6], 1024
        $region88: #{tpu_custom_call.1} parent=79 // pred_fallthru
          _
        // Predicated region
        $region89: #{tpu_custom_call.1} parent=79 // pred_check
          %p519 = pneg %p210
        $region90: #{tpu_custom_call.1} parent=79 // pred_check_branch
          %521 = sbr.rel (%p519) target = $region92
        $region91: #{tpu_custom_call.1} parent=79 // pred_region
          %522 = dma.done [#allocation6], 2048
        $region92: #{tpu_custom_call.1} parent=79 // pred_fallthru
          _
        // Predicated region
        $region93: #{tpu_custom_call.1} parent=79 // pred_check
          %p523 = pneg %p252
        $region94: #{tpu_custom_call.1} parent=79 // pred_check_branch
          %525 = sbr.rel (%p523) target = $region96
        $region95: #{tpu_custom_call.1} parent=79 // pred_region
          %526 = dma.done [#allocation9], 2048
        $region96: #{tpu_custom_call.1} parent=79 // pred_fallthru
          _
        %s527 = smul.u32 2, %s32
        %p528 = scmp.lt.s32.totalorder %s527, 3
        %s529 = scalar_select %p528, %s527, 3
        %s530 = smul.addr %s529, 4
        %s531 = scalar_lea.vmem %s0, %s530
        %p532 = pneg %p53
        %p533 = pneg %p50
        %s534 = smul.u32 2, %s32
        %p535 = scmp.lt.s32.totalorder %s534, 3
        %s536 = scalar_select %p535, %s534, 3
        %s537 = scalar_lea.vmem %s1, %s536
        %p538 = pneg %p79
        %p539 = pneg %p76
        %s540 = smul.u32 2, %s32
        %p541 = scmp.lt.s32.totalorder %s540, 3
        %s542 = scalar_select %p541, %s540, 3
        %s543 = smul.addr %s542, 8
        %s544 = scalar_lea.vmem %s2, %s543
        %p545 = pneg %p105
        %p546 = pneg %p102
        %p547 = pneg %p126
        %p548 = pneg %p123
        %p549 = pneg %p147
        %p550 = pneg %p144
        %p551 = pneg %p168
        %p552 = pneg %p165
        %p553 = pneg %p189
        %p554 = pneg %p186
        %p555 = pneg %p210
        %p556 = pneg %p207
        %p557 = pneg %p231
        %p558 = pneg %p228
        %p559 = pneg %p252
        %p560 = pneg %p249
        %p561 = pneg %p273
        %p562 = pneg %p270
        %p563 = pneg %p294
        %p564 = pneg %p291
        %p565 = pneg %p315
        %p566 = pneg %p312
        %p567 = pneg %p336
        %p568 = pneg %p333
        %p569 = pneg %p357
        %p570 = pneg %p354
        %p571 = pneg %p383
        %p572 = pneg %p380
        %s573 = sand.u32 %s370, 1
        %s574 = scalar_lea.sflag [#allocation4], %s573
        %s575 = sand.u32 %s370, 1
        %s576 = smul.addr %s575, 8
        %s577 = scalar_lea.vmem [#allocation10], %s576
        %s578 = smul.u32 2, %s32
        %p579 = scmp.lt.s32.totalorder %s578, 3
        %s580 = scalar_select %p579, %s578, 3
        %s581 = smul.addr %s580, 4
        %s582 = scalar_lea.vmem %s0, %s581
        %s583 = smul.u32 2, %s32
        %s584 = smul.u32 2, %s32
        %p585 = scmp.lt.s32.totalorder %s584, 3
        %s586 = scalar_select %p585, %s584, 3
        %s587 = scalar_lea.vmem %s1, %s586
        %s588 = smul.u32 2, %s32
        %s589 = smul.u32 2, %s32
        %p590 = scmp.lt.s32.totalorder %s589, 3
        %s591 = scalar_select %p590, %s589, 3
        %s592 = smul.addr %s591, 8
        %s593 = scalar_lea.vmem %s2, %s592
        %s594 = smul.u32 2, %s32
        %s595 = smul.u32 2, %s32
        %v597 = vld [vmem:[%s582] sm:$0xf]
        %v598 = vld [vmem:[%s582 + $0x4] sm:$0xf]
        %v599 = vunpack.c.l.bf16 %v597
        %v600 = vunpack.c.l.bf16 %v598
        %v601 = vld [vmem:[#allocation2] sm:$0xff]
        %v602 = vld [vmem:[#allocation2 + $0x8] sm:$0xf]
        %v603 = vld [vmem:[#allocation2 + $0xc] sm:$0xff]
        %v604 = vld [vmem:[#allocation2 + $0x14] sm:$0xf]
        %v605 = vld [vmem:[#allocation2 + $0x18] sm:$0xff]
        %v606 = vld [vmem:[#allocation2 + $0x20] sm:$0xf]
        %v607 = vld [vmem:[#allocation2 + $0x24] sm:$0xff]
        %v608 = vld [vmem:[#allocation2 + $0x2c] sm:$0xf]
        %v609 = vld [vmem:[#allocation2 + $0x30] sm:$0xff]
        %v610 = vld [vmem:[#allocation2 + $0x38] sm:$0xf]
        %v611 = vld [vmem:[#allocation2 + $0x3c] sm:$0xff]
        %v612 = vld [vmem:[#allocation2 + $0x44] sm:$0xf]
        %v613 = vld [vmem:[#allocation2 + $0x48] sm:$0xff]
        %v614 = vld [vmem:[#allocation2 + $0x50] sm:$0xf]
        %v615 = vld [vmem:[#allocation2 + $0x54] sm:$0xff]
        %v616 = vld [vmem:[#allocation2 + $0x5c] sm:$0xf]
        %v617 = vld [vmem:[#allocation2 + $0x60] sm:$0xff]
        %v618 = vld [vmem:[#allocation2 + $0x68] sm:$0xf]
        %v619 = vld [vmem:[#allocation2 + $0x6c] sm:$0xff]
        %v620 = vld [vmem:[#allocation2 + $0x74] sm:$0xf]
        %v621 = vld [vmem:[#allocation2 + $0x78] sm:$0xff]
        %v622 = vld [vmem:[#allocation2 + $0x80] sm:$0xf]
        %v623 = vld [vmem:[#allocation2 + $0x84] sm:$0xff]
        %v624 = vld [vmem:[#allocation2 + $0x8c] sm:$0xf]
        %v625 = vld [vmem:[#allocation2 + $0x90] sm:$0xff]
        %v626 = vld [vmem:[#allocation2 + $0x98] sm:$0xf]
        %v627 = vld [vmem:[#allocation2 + $0x9c] sm:$0xff]
        %v628 = vld [vmem:[#allocation2 + $0xa4] sm:$0xf]
        %v629 = vld [vmem:[#allocation2 + $0xa8] sm:$0xff]
        %v630 = vld [vmem:[#allocation2 + $0xb0] sm:$0xf]
        %v631 = vld [vmem:[#allocation2 + $0xb4] sm:$0xff]
        %v632 = vld [vmem:[#allocation2 + $0xbc] sm:$0xf]
        %v633 = vld [vmem:[%s4] sm:$0x7]
        %v635 = vlaneseq
        %v636 = vshrl.u32 %v635, 7
        %v637 = vsub.s32 0, %v636
        %v638 = vrot.slane %v633, %v637
        %v639 = vlaneseq
        %v640 = vshrl.u32 %v639, 7
        %v641 = vsub.s32 1, %v640
        %v642 = vrot.slane %v633, %v641
        %v643 = vlaneseq
        %v644 = vshrl.u32 %v643, 7
        %v645 = vsub.s32 2, %v644
        %v646 = vrot.slane %v633, %v645
        %v652 = vunpack.c.l.b16 %v597
        %v653 = vunpack.c.l.b16 %v598
        %v654 = vpack.c.b16 %v653, %v652
        %v688 = vunpack.c.l.b16 %v601
        %v689 = vunpack.c.h.b16 %v601
        %v690 = vunpack.c.l.b16 %v602
        %v691 = vunpack.c.l.b16 %v603
        %v692 = vunpack.c.h.b16 %v603
        %v693 = vunpack.c.l.b16 %v604
        %v694 = vunpack.c.l.b16 %v605
        %v695 = vunpack.c.h.b16 %v605
        %v696 = vunpack.c.l.b16 %v606
        %v697 = vunpack.c.l.b16 %v607
        %v698 = vunpack.c.h.b16 %v607
        %v699 = vunpack.c.l.b16 %v608
        %v700 = vunpack.c.l.b16 %v609
        %v701 = vunpack.c.h.b16 %v609
        %v702 = vunpack.c.l.b16 %v610
        %v703 = vunpack.c.l.b16 %v611
        %v704 = vunpack.c.h.b16 %v611
        %v705 = vunpack.c.l.b16 %v612
        %v706 = vunpack.c.l.b16 %v613
        %v707 = vunpack.c.h.b16 %v613
        %v708 = vunpack.c.l.b16 %v614
        %v709 = vunpack.c.l.b16 %v615
        %v710 = vunpack.c.h.b16 %v615
        %v711 = vunpack.c.l.b16 %v616
        %v712 = vunpack.c.l.b16 %v617
        %v713 = vunpack.c.h.b16 %v617
        %v714 = vunpack.c.l.b16 %v618
        %v715 = vunpack.c.l.b16 %v619
        %v716 = vunpack.c.h.b16 %v619
        %v717 = vunpack.c.l.b16 %v620
        %v718 = vunpack.c.l.b16 %v621
        %v719 = vunpack.c.h.b16 %v621
        %v720 = vunpack.c.l.b16 %v622
        %v721 = vunpack.c.l.b16 %v623
        %v722 = vunpack.c.h.b16 %v623
        %v723 = vunpack.c.l.b16 %v624
        %v724 = vunpack.c.l.b16 %v625
        %v725 = vunpack.c.h.b16 %v625
        %v726 = vunpack.c.l.b16 %v626
        %v727 = vunpack.c.l.b16 %v627
        %v728 = vunpack.c.h.b16 %v627
        %v729 = vunpack.c.l.b16 %v628
        %v730 = vunpack.c.l.b16 %v629
        %v731 = vunpack.c.h.b16 %v629
        %v732 = vunpack.c.l.b16 %v630
        %v733 = vunpack.c.l.b16 %v631
        %v734 = vunpack.c.h.b16 %v631
        %v735 = vunpack.c.l.b16 %v632
        %v736 = vpack.c.b16 %v691, %v688
        %v737 = vpack.c.b16 %v692, %v689
        %v738 = vpack.c.b16 %v693, %v690
        %v739 = vpack.c.b16 %v697, %v694
        %v740 = vpack.c.b16 %v698, %v695
        %v741 = vpack.c.b16 %v699, %v696
        %v742 = vpack.c.b16 %v703, %v700
        %v743 = vpack.c.b16 %v704, %v701
        %v744 = vpack.c.b16 %v705, %v702
        %v745 = vpack.c.b16 %v709, %v706
        %v746 = vpack.c.b16 %v710, %v707
        %v747 = vpack.c.b16 %v711, %v708
        %v748 = vpack.c.b16 %v715, %v712
        %v749 = vpack.c.b16 %v716, %v713
        %v750 = vpack.c.b16 %v717, %v714
        %v751 = vpack.c.b16 %v721, %v718
        %v752 = vpack.c.b16 %v722, %v719
        %v753 = vpack.c.b16 %v723, %v720
        %v754 = vpack.c.b16 %v727, %v724
        %v755 = vpack.c.b16 %v728, %v725
        %v756 = vpack.c.b16 %v729, %v726
        %v757 = vpack.c.b16 %v733, %v730
        %v758 = vpack.c.b16 %v734, %v731
        %v759 = vpack.c.b16 %v735, %v732
        %784 = vmatprep.subr.bf16.mxu0 %v737
        %785 = vmatpush1.bf16.msra.mxu0 %v736
        %786 = vmatprep.subr.bf16.mxu0 %v740
        %787 = vmatpush1.bf16.msra.mxu0 %v739
        %788 = vmatprep.subr.bf16.mxu0 %v743
        %789 = vmatpush1.bf16.msra.mxu0 %v742
        %790 = vmatprep.subr.bf16.mxu0 %v746
        %791 = vmatpush1.bf16.msra.mxu0 %v745
        %792 = vmatprep.subr.bf16.mxu0 %v749
        %793 = vmatpush1.bf16.msra.mxu0 %v748
        %794 = vmatprep.subr.bf16.mxu0 %v752
        %795 = vmatpush1.bf16.msra.mxu0 %v751
        %796 = vmatprep.subr.bf16.mxu0 %v755
        %797 = vmatpush1.bf16.msra.mxu0 %v754
        %798 = vmatprep.subr.bf16.mxu0 %v758
        %799 = vmatpush1.bf16.msra.mxu0 %v757
        %800 = vmatprep.subr.bf16.mxu0 0
        %801 = vmatpush1.bf16.msra.mxu0 0
        %802 = vmatprep.subr.bf16.mxu0 0
        %803 = vmatpush1.bf16.msra.mxu0 0
        %804 = vmatprep.subr.bf16.mxu0 0
        %805 = vmatpush1.bf16.msra.mxu0 0
        %806 = vmatprep.subr.bf16.mxu0 0
        %807 = vmatpush1.bf16.msra.mxu0 0
        %808 = vmatprep.subr.bf16.mxu0 0
        %809 = vmatpush1.bf16.msra.mxu0 0
        %810 = vmatprep.subr.bf16.mxu0 0
        %811 = vmatpush1.bf16.msra.mxu0 0
        %812 = vmatprep.subr.bf16.mxu0 0
        %813 = vmatpush1.bf16.msra.mxu0 0
        %814 = vmatprep.subr.bf16.mxu0 0
        %815 = vmatpush1.bf16.msra.mxu0 0
        %816 = vmatprep.mubr.bf16.mxu0 0
        %817 = vmatmul.mubr.bf16.gmra.mrb[0].mxu0 %v654
        %v818 = vpop.f32.mrb[0].mxu0
        %v819 = vadd.f32 %v638, %v818
        %v820 = vpop.f32.mrb[0].mxu0
        %v821 = vadd.f32 %v642, %v820
        %v822 = vpop.f32.mrb[0].mxu0
        %v823 = vadd.f32 %v638, %v822
        %v824 = vpop.f32.mrb[0].mxu0
        %v825 = vadd.f32 %v642, %v824
        %826 = vdwg.mxu0
        %827 = vmatprep.subr.bf16.mxu0 0
        %828 = vmatpush1.bf16.msra.mxu0 %v738
        %829 = vmatprep.subr.bf16.mxu0 0
        %830 = vmatpush1.bf16.msra.mxu0 %v741
        %831 = vmatprep.subr.bf16.mxu0 0
        %832 = vmatpush1.bf16.msra.mxu0 %v744
        %833 = vmatprep.subr.bf16.mxu0 0
        %834 = vmatpush1.bf16.msra.mxu0 %v747
        %835 = vmatprep.subr.bf16.mxu0 0
        %836 = vmatpush1.bf16.msra.mxu0 %v750
        %837 = vmatprep.subr.bf16.mxu0 0
        %838 = vmatpush1.bf16.msra.mxu0 %v753
        %839 = vmatprep.subr.bf16.mxu0 0
        %840 = vmatpush1.bf16.msra.mxu0 %v756
        %841 = vmatprep.subr.bf16.mxu0 0
        %842 = vmatpush1.bf16.msra.mxu0 %v759
        %843 = vmatprep.subr.bf16.mxu0 0
        %844 = vmatpush1.bf16.msra.mxu0 0
        %845 = vmatprep.subr.bf16.mxu0 0
        %846 = vmatpush1.bf16.msra.mxu0 0
        %847 = vmatprep.subr.bf16.mxu0 0
        %848 = vmatpush1.bf16.msra.mxu0 0
        %849 = vmatprep.subr.bf16.mxu0 0
        %850 = vmatpush1.bf16.msra.mxu0 0
        %851 = vmatprep.subr.bf16.mxu0 0
        %852 = vmatpush1.bf16.msra.mxu0 0
        %853 = vmatprep.subr.bf16.mxu0 0
        %854 = vmatpush1.bf16.msra.mxu0 0
        %855 = vmatprep.subr.bf16.mxu0 0
        %856 = vmatpush1.bf16.msra.mxu0 0
        %857 = vmatprep.subr.bf16.mxu0 0
        %858 = vmatpush1.bf16.msra.mxu0 0
        %859 = vmatprep.mubr.bf16.mxu0 0
        %860 = vmatmul.mubr.bf16.gmra.mrb[0].mxu0 %v654
        %v861 = vpop.f32.mrb[0].mxu0
        %v862 = vadd.f32 %v646, %v861
        %v863 = vpop.f32.mrb[0].mxu0
        %v864 = vpop.f32.mrb[0].mxu0
        %v865 = vadd.f32 %v646, %v864
        %v866 = vpop.f32.mrb[0].mxu0
        %867 = vdwg.mxu0
        %870 = vrot.lane.b32.xlu0 %v819, 96
        %v871 = vpop.permute.xlu0 %870
        %872 = vrot.lane.b32.xlu0 %v823, 96
        %v873 = vpop.permute.xlu0 %872
        %876 = vrot.lane.b32.xlu0 %v819, 64
        %v877 = vpop.permute.xlu0 %876
        %878 = vrot.lane.b32.xlu0 %v823, 64
        %v879 = vpop.permute.xlu0 %878
        %882 = vrot.lane.b32.xlu0 %v819, 32
        %v883 = vpop.permute.xlu0 %882
        %884 = vrot.lane.b32.xlu0 %v823, 32
        %v885 = vpop.permute.xlu0 %884
        %v888 = vpack.c.bf16 %v819, %v819
        %v889 = vpack.c.bf16 %v823, %v823
        %v890 = vpack.c.bf16 %v871, %v871
        %v891 = vpack.c.bf16 %v873, %v873
        %v892 = vpack.c.bf16 %v877, %v877
        %v893 = vpack.c.bf16 %v879, %v879
        %v894 = vpack.c.bf16 %v883, %v883
        %v895 = vpack.c.bf16 %v885, %v885
        %898 = vrot.lane.b32.xlu0 %v821, 96
        %v899 = vpop.permute.xlu0 %898
        %900 = vrot.lane.b32.xlu0 %v825, 96
        %v901 = vpop.permute.xlu0 %900
        %904 = vrot.lane.b32.xlu0 %v821, 64
        %v905 = vpop.permute.xlu0 %904
        %906 = vrot.lane.b32.xlu0 %v825, 64
        %v907 = vpop.permute.xlu0 %906
        %910 = vrot.lane.b32.xlu0 %v821, 32
        %v911 = vpop.permute.xlu0 %910
        %912 = vrot.lane.b32.xlu0 %v825, 32
        %v913 = vpop.permute.xlu0 %912
        %v916 = vpack.c.bf16 %v821, %v821
        %v917 = vpack.c.bf16 %v825, %v825
        %v918 = vpack.c.bf16 %v899, %v899
        %v919 = vpack.c.bf16 %v901, %v901
        %v920 = vpack.c.bf16 %v905, %v905
        %v921 = vpack.c.bf16 %v907, %v907
        %v922 = vpack.c.bf16 %v911, %v911
        %v923 = vpack.c.bf16 %v913, %v913
        %926 = vrot.lane.b32.xlu0 %v862, 96
        %v927 = vpop.permute.xlu0 %926
        %928 = vrot.lane.b32.xlu0 %v865, 96
        %v929 = vpop.permute.xlu0 %928
        %932 = vrot.lane.b32.xlu0 %v862, 64
        %v933 = vpop.permute.xlu0 %932
        %934 = vrot.lane.b32.xlu0 %v865, 64
        %v935 = vpop.permute.xlu0 %934
        %938 = vrot.lane.b32.xlu0 %v862, 32
        %v939 = vpop.permute.xlu0 %938
        %940 = vrot.lane.b32.xlu0 %v865, 32
        %v941 = vpop.permute.xlu0 %940
        %v944 = vpack.c.bf16 %v862, %v862
        %v945 = vpack.c.bf16 %v865, %v865
        %v946 = vpack.c.bf16 %v927, %v927
        %v947 = vpack.c.bf16 %v929, %v929
        %v948 = vpack.c.bf16 %v933, %v933
        %v949 = vpack.c.bf16 %v935, %v935
        %v950 = vpack.c.bf16 %v939, %v939
        %v951 = vpack.c.bf16 %v941, %v941
        %vm952 = vcmask 261120
        %v954 = vsel %vm952, %v888, 0
        %v957 = vsel %vm952, %v916, 0
        %959 = vmatprep.subr.bf16.mxu0 0
        %960 = vmatpush1.bf16.xpose.msra.mxu0 %v957
        %961 = vmatprep.subr.bf16.mxu0 0
        %962 = vmatpush1.bf16.xpose.msra.mxu0 0
        %963 = vmatprep.subr.bf16.mxu0 0
        %964 = vmatpush1.bf16.xpose.msra.mxu0 0
        %965 = vmatprep.subr.bf16.mxu0 0
        %966 = vmatpush1.bf16.xpose.msra.mxu0 0
        %967 = vmatprep.subr.bf16.mxu0 0
        %968 = vmatpush1.bf16.xpose.msra.mxu0 0
        %969 = vmatprep.subr.bf16.mxu0 0
        %970 = vmatpush1.bf16.xpose.msra.mxu0 0
        %971 = vmatprep.subr.bf16.mxu0 0
        %972 = vmatpush1.bf16.xpose.msra.mxu0 0
        %973 = vmatprep.subr.bf16.mxu0 0
        %974 = vmatpush1.bf16.xpose.msra.mxu0 0
        %975 = vmatprep.subr.bf16.mxu0 0
        %976 = vmatpush1.bf16.xpose.msra.mxu0 0
        %977 = vmatprep.subr.bf16.mxu0 0
        %978 = vmatpush1.bf16.xpose.msra.mxu0 0
        %979 = vmatprep.subr.bf16.mxu0 0
        %980 = vmatpush1.bf16.xpose.msra.mxu0 0
        %981 = vmatprep.subr.bf16.mxu0 0
        %982 = vmatpush1.bf16.xpose.msra.mxu0 0
        %983 = vmatprep.subr.bf16.mxu0 0
        %984 = vmatpush1.bf16.xpose.msra.mxu0 0
        %985 = vmatprep.subr.bf16.mxu0 0
        %986 = vmatpush1.bf16.xpose.msra.mxu0 0
        %987 = vmatprep.subr.bf16.mxu0 0
        %988 = vmatpush1.bf16.xpose.msra.mxu0 0
        %989 = vmatprep.subr.bf16.mxu0 0
        %990 = vmatpush1.bf16.xpose.msra.mxu0 0
        %991 = vmatprep.mubr.bf16.mxu0 0
        %992 = vmatmul.mubr.bf16.gmra.mrb[0].mxu0 %v954
        %v993 = vpop.f32.mrb[0].mxu0
        %v994 = vadd.f32 0.0, %v993
        %v995 = vpop.f32.mrb[0].mxu0
        %v996 = vpop.f32.mrb[0].mxu0
        %v997 = vpop.f32.mrb[0].mxu0
        %998 = vdwg.mxu0
        %v1000 = vsel %vm952, %v889, 0
        %v1003 = vsel %vm952, %v917, 0
        %1005 = vmatprep.subr.bf16.mxu0 0
        %1006 = vmatpush1.bf16.xpose.msra.mxu0 %v1003
        %1007 = vmatprep.subr.bf16.mxu0 0
        %1008 = vmatpush1.bf16.xpose.msra.mxu0 0
        %1009 = vmatprep.subr.bf16.mxu0 0
        %1010 = vmatpush1.bf16.xpose.msra.mxu0 0
        %1011 = vmatprep.subr.bf16.mxu0 0
        %1012 = vmatpush1.bf16.xpose.msra.mxu0 0
        %1013 = vmatprep.subr.bf16.mxu0 0
        %1014 = vmatpush1.bf16.xpose.msra.mxu0 0
        %1015 = vmatprep.subr.bf16.mxu0 0
        %1016 = vmatpush1.bf16.xpose.msra.mxu0 0
        %1017 = vmatprep.subr.bf16.mxu0 0
        %1018 = vmatpush1.bf16.xpose.msra.mxu0 0
        %1019 = vmatprep.subr.bf16.mxu0 0
        %1020 = vmatpush1.bf16.xpose.msra.mxu0 0
        %1021 = vmatprep.subr.bf16.mxu0 0
        %1022 = vmatpush1.bf16.xpose.msra.mxu0 0
        %1023 = vmatprep.subr.bf16.mxu0 0
        %1024 = vmatpush1.bf16.xpose.msra.mxu0 0
        %1025 = vmatprep.subr.bf16.mxu0 0
        %1026 = vmatpush1.bf16.xpose.msra.mxu0 0
        %1027 = vmatprep.subr.bf16.mxu0 0
        %1028 = vmatpush1.bf16.xpose.msra.mxu0 0
        %1029 = vmatprep.subr.bf16.mxu0 0
        %1030 = vmatpush1.bf16.xpose.msra.mxu0 0
        %1031 = vmatprep.subr.bf16.mxu0 0
        %1032 = vmatpush1.bf16.xpose.msra.mxu0 0
        %1033 = vmatprep.subr.bf16.mxu0 0
        %1034 = vmatpush1.bf16.xpose.msra.mxu0 0
        %1035 = vmatprep.subr.bf16.mxu0 0
        %1036 = vmatpush1.bf16.xpose.msra.mxu0 0
        %1037 = vmatprep.mubr.bf16.mxu0 0
        %1038 = vmatmul.mubr.bf16.gmra.mrb[0].mxu0 %v1000
        %v1039 = vpop.f32.mrb[0].mxu0
        %v1040 = vadd.f32 0.0, %v1039
        %v1041 = vpop.f32.mrb[0].mxu0
        %v1042 = vpop.f32.mrb[0].mxu0
        %v1043 = vpop.f32.mrb[0].mxu0
        %1044 = vdwg.mxu0
        %v1046 = vsel %vm952, %v890, 0
        %v1049 = vsel %vm952, %v918, 0
        %1051 = vmatprep.subr.bf16.mxu0 0
        %1052 = vmatpush1.bf16.xpose.msra.mxu0 %v1049
        %1053 = vmatprep.subr.bf16.mxu0 0
        %1054 = vmatpush1.bf16.xpose.msra.mxu0 0
        %1055 = vmatprep.subr.bf16.mxu0 0
        %1056 = vmatpush1.bf16.xpose.msra.mxu0 0
        %1057 = vmatprep.subr.bf16.mxu0 0
        %1058 = vmatpush1.bf16.xpose.msra.mxu0 0
        %1059 = vmatprep.subr.bf16.mxu0 0
        %1060 = vmatpush1.bf16.xpose.msra.mxu0 0
        %1061 = vmatprep.subr.bf16.mxu0 0
        %1062 = vmatpush1.bf16.xpose.msra.mxu0 0
        %1063 = vmatprep.subr.bf16.mxu0 0
        %1064 = vmatpush1.bf16.xpose.msra.mxu0 0
        %1065 = vmatprep.subr.bf16.mxu0 0
        %1066 = vmatpush1.bf16.xpose.msra.mxu0 0
        %1067 = vmatprep.subr.bf16.mxu0 0
        %1068 = vmatpush1.bf16.xpose.msra.mxu0 0
        %1069 = vmatprep.subr.bf16.mxu0 0
        %1070 = vmatpush1.bf16.xpose.msra.mxu0 0
        %1071 = vmatprep.subr.bf16.mxu0 0
        %1072 = vmatpush1.bf16.xpose.msra.mxu0 0
        %1073 = vmatprep.subr.bf16.mxu0 0
        %1074 = vmatpush1.bf16.xpose.msra.mxu0 0
        %1075 = vmatprep.subr.bf16.mxu0 0
        %1076 = vmatpush1.bf16.xpose.msra.mxu0 0
        %1077 = vmatprep.subr.bf16.mxu0 0
        %1078 = vmatpush1.bf16.xpose.msra.mxu0 0
        %1079 = vmatprep.subr.bf16.mxu0 0
        %1080 = vmatpush1.bf16.xpose.msra.mxu0 0
        %1081 = vmatprep.subr.bf16.mxu0 0
        %1082 = vmatpush1.bf16.xpose.msra.mxu0 0
        %1083 = vmatprep.mubr.bf16.mxu0 0
        %1084 = vmatmul.mubr.bf16.gmra.mrb[0].mxu0 %v1046
        %v1085 = vpop.f32.mrb[0].mxu0
        %v1086 = vadd.f32 0.0, %v1085
        %v1087 = vpop.f32.mrb[0].mxu0
        %v1088 = vpop.f32.mrb[0].mxu0
        %v1089 = vpop.f32.mrb[0].mxu0
        %1090 = vdwg.mxu0
        %v1092 = vsel %vm952, %v891, 0
        %v1095 = vsel %vm952, %v919, 0
        %1097 = vmatprep.subr.bf16.mxu0 0
        %1098 = vmatpush1.bf16.xpose.msra.mxu0 %v1095
        %1099 = vmatprep.subr.bf16.mxu0 0
        %1100 = vmatpush1.bf16.xpose.msra.mxu0 0
        %1101 = vmatprep.subr.bf16.mxu0 0
        %1102 = vmatpush1.bf16.xpose.msra.mxu0 0
        %1103 = vmatprep.subr.bf16.mxu0 0
        %1104 = vmatpush1.bf16.xpose.msra.mxu0 0
        %1105 = vmatprep.subr.bf16.mxu0 0
        %1106 = vmatpush1.bf16.xpose.msra.mxu0 0
        %1107 = vmatprep.subr.bf16.mxu0 0
        %1108 = vmatpush1.bf16.xpose.msra.mxu0 0
        %1109 = vmatprep.subr.bf16.mxu0 0
        %1110 = vmatpush1.bf16.xpose.msra.mxu0 0
        %1111 = vmatprep.subr.bf16.mxu0 0
        %1112 = vmatpush1.bf16.xpose.msra.mxu0 0
        %1113 = vmatprep.subr.bf16.mxu0 0
        %1114 = vmatpush1.bf16.xpose.msra.mxu0 0
        %1115 = vmatprep.subr.bf16.mxu0 0
        %1116 = vmatpush1.bf16.xpose.msra.mxu0 0
        %1117 = vmatprep.subr.bf16.mxu0 0
        %1118 = vmatpush1.bf16.xpose.msra.mxu0 0
        %1119 = vmatprep.subr.bf16.mxu0 0
        %1120 = vmatpush1.bf16.xpose.msra.mxu0 0
        %1121 = vmatprep.subr.bf16.mxu0 0
        %1122 = vmatpush1.bf16.xpose.msra.mxu0 0
        %1123 = vmatprep.subr.bf16.mxu0 0
        %1124 = vmatpush1.bf16.xpose.msra.mxu0 0
        %1125 = vmatprep.subr.bf16.mxu0 0
        %1126 = vmatpush1.bf16.xpose.msra.mxu0 0
        %1127 = vmatprep.subr.bf16.mxu0 0
        %1128 = vmatpush1.bf16.xpose.msra.mxu0 0
        %1129 = vmatprep.mubr.bf16.mxu0 0
        %1130 = vmatmul.mubr.bf16.gmra.mrb[0].mxu0 %v1092
        %v1131 = vpop.f32.mrb[0].mxu0
        %v1132 = vadd.f32 0.0, %v1131
        %v1133 = vpop.f32.mrb[0].mxu0
        %v1134 = vpop.f32.mrb[0].mxu0
        %v1135 = vpop.f32.mrb[0].mxu0
        %1136 = vdwg.mxu0
        %v1138 = vsel %vm952, %v892, 0
        %v1141 = vsel %vm952, %v920, 0
        %1143 = vmatprep.subr.bf16.mxu0 0
        %1144 = vmatpush1.bf16.xpose.msra.mxu0 %v1141
        %1145 = vmatprep.subr.bf16.mxu0 0
        %1146 = vmatpush1.bf16.xpose.msra.mxu0 0
        %1147 = vmatprep.subr.bf16.mxu0 0
        %1148 = vmatpush1.bf16.xpose.msra.mxu0 0
        %1149 = vmatprep.subr.bf16.mxu0 0
        %1150 = vmatpush1.bf16.xpose.msra.mxu0 0
        %1151 = vmatprep.subr.bf16.mxu0 0
        %1152 = vmatpush1.bf16.xpose.msra.mxu0 0
        %1153 = vmatprep.subr.bf16.mxu0 0
        %1154 = vmatpush1.bf16.xpose.msra.mxu0 0
        %1155 = vmatprep.subr.bf16.mxu0 0
        %1156 = vmatpush1.bf16.xpose.msra.mxu0 0
        %1157 = vmatprep.subr.bf16.mxu0 0
        %1158 = vmatpush1.bf16.xpose.msra.mxu0 0
        %1159 = vmatprep.subr.bf16.mxu0 0
        %1160 = vmatpush1.bf16.xpose.msra.mxu0 0
        %1161 = vmatprep.subr.bf16.mxu0 0
        %1162 = vmatpush1.bf16.xpose.msra.mxu0 0
        %1163 = vmatprep.subr.bf16.mxu0 0
        %1164 = vmatpush1.bf16.xpose.msra.mxu0 0
        %1165 = vmatprep.subr.bf16.mxu0 0
        %1166 = vmatpush1.bf16.xpose.msra.mxu0 0
        %1167 = vmatprep.subr.bf16.mxu0 0
        %1168 = vmatpush1.bf16.xpose.msra.mxu0 0
        %1169 = vmatprep.subr.bf16.mxu0 0
        %1170 = vmatpush1.bf16.xpose.msra.mxu0 0
        %1171 = vmatprep.subr.bf16.mxu0 0
        %1172 = vmatpush1.bf16.xpose.msra.mxu0 0
        %1173 = vmatprep.subr.bf16.mxu0 0
        %1174 = vmatpush1.bf16.xpose.msra.mxu0 0
        %1175 = vmatprep.mubr.bf16.mxu0 0
        %1176 = vmatmul.mubr.bf16.gmra.mrb[0].mxu0 %v1138
        %v1177 = vpop.f32.mrb[0].mxu0
        %v1178 = vadd.f32 0.0, %v1177
        %v1179 = vpop.f32.mrb[0].mxu0
        %v1180 = vpop.f32.mrb[0].mxu0
        %v1181 = vpop.f32.mrb[0].mxu0
        %1182 = vdwg.mxu0
        %v1184 = vsel %vm952, %v893, 0
        %v1187 = vsel %vm952, %v921, 0
        %1189 = vmatprep.subr.bf16.mxu0 0
        %1190 = vmatpush1.bf16.xpose.msra.mxu0 %v1187
        %1191 = vmatprep.subr.bf16.mxu0 0
        %1192 = vmatpush1.bf16.xpose.msra.mxu0 0
        %1193 = vmatprep.subr.bf16.mxu0 0
        %1194 = vmatpush1.bf16.xpose.msra.mxu0 0
        %1195 = vmatprep.subr.bf16.mxu0 0
        %1196 = vmatpush1.bf16.xpose.msra.mxu0 0
        %1197 = vmatprep.subr.bf16.mxu0 0
        %1198 = vmatpush1.bf16.xpose.msra.mxu0 0
        %1199 = vmatprep.subr.bf16.mxu0 0
        %1200 = vmatpush1.bf16.xpose.msra.mxu0 0
        %1201 = vmatprep.subr.bf16.mxu0 0
        %1202 = vmatpush1.bf16.xpose.msra.mxu0 0
        %1203 = vmatprep.subr.bf16.mxu0 0
        %1204 = vmatpush1.bf16.xpose.msra.mxu0 0
        %1205 = vmatprep.subr.bf16.mxu0 0
        %1206 = vmatpush1.bf16.xpose.msra.mxu0 0
        %1207 = vmatprep.subr.bf16.mxu0 0
        %1208 = vmatpush1.bf16.xpose.msra.mxu0 0
        %1209 = vmatprep.subr.bf16.mxu0 0
        %1210 = vmatpush1.bf16.xpose.msra.mxu0 0
        %1211 = vmatprep.subr.bf16.mxu0 0
        %1212 = vmatpush1.bf16.xpose.msra.mxu0 0
        %1213 = vmatprep.subr.bf16.mxu0 0
        %1214 = vmatpush1.bf16.xpose.msra.mxu0 0
        %1215 = vmatprep.subr.bf16.mxu0 0
        %1216 = vmatpush1.bf16.xpose.msra.mxu0 0
        %1217 = vmatprep.subr.bf16.mxu0 0
        %1218 = vmatpush1.bf16.xpose.msra.mxu0 0
        %1219 = vmatprep.subr.bf16.mxu0 0
        %1220 = vmatpush1.bf16.xpose.msra.mxu0 0
        %1221 = vmatprep.mubr.bf16.mxu0 0
        %1222 = vmatmul.mubr.bf16.gmra.mrb[0].mxu0 %v1184
        %v1223 = vpop.f32.mrb[0].mxu0
        %v1224 = vadd.f32 0.0, %v1223
        %v1225 = vpop.f32.mrb[0].mxu0
        %v1226 = vpop.f32.mrb[0].mxu0
        %v1227 = vpop.f32.mrb[0].mxu0
        %1228 = vdwg.mxu0
        %v1230 = vsel %vm952, %v894, 0
        %v1233 = vsel %vm952, %v922, 0
        %1235 = vmatprep.subr.bf16.mxu0 0
        %1236 = vmatpush1.bf16.xpose.msra.mxu0 %v1233
        %1237 = vmatprep.subr.bf16.mxu0 0
        %1238 = vmatpush1.bf16.xpose.msra.mxu0 0
        %1239 = vmatprep.subr.bf16.mxu0 0
        %1240 = vmatpush1.bf16.xpose.msra.mxu0 0
        %1241 = vmatprep.subr.bf16.mxu0 0
        %1242 = vmatpush1.bf16.xpose.msra.mxu0 0
        %1243 = vmatprep.subr.bf16.mxu0 0
        %1244 = vmatpush1.bf16.xpose.msra.mxu0 0
        %1245 = vmatprep.subr.bf16.mxu0 0
        %1246 = vmatpush1.bf16.xpose.msra.mxu0 0
        %1247 = vmatprep.subr.bf16.mxu0 0
        %1248 = vmatpush1.bf16.xpose.msra.mxu0 0
        %1249 = vmatprep.subr.bf16.mxu0 0
        %1250 = vmatpush1.bf16.xpose.msra.mxu0 0
        %1251 = vmatprep.subr.bf16.mxu0 0
        %1252 = vmatpush1.bf16.xpose.msra.mxu0 0
        %1253 = vmatprep.subr.bf16.mxu0 0
        %1254 = vmatpush1.bf16.xpose.msra.mxu0 0
        %1255 = vmatprep.subr.bf16.mxu0 0
        %1256 = vmatpush1.bf16.xpose.msra.mxu0 0
        %1257 = vmatprep.subr.bf16.mxu0 0
        %1258 = vmatpush1.bf16.xpose.msra.mxu0 0
        %1259 = vmatprep.subr.bf16.mxu0 0
        %1260 = vmatpush1.bf16.xpose.msra.mxu0 0
        %1261 = vmatprep.subr.bf16.mxu0 0
        %1262 = vmatpush1.bf16.xpose.msra.mxu0 0
        %1263 = vmatprep.subr.bf16.mxu0 0
        %1264 = vmatpush1.bf16.xpose.msra.mxu0 0
        %1265 = vmatprep.subr.bf16.mxu0 0
        %1266 = vmatpush1.bf16.xpose.msra.mxu0 0
        %1267 = vmatprep.mubr.bf16.mxu0 0
        %1268 = vmatmul.mubr.bf16.gmra.mrb[0].mxu0 %v1230
        %v1269 = vpop.f32.mrb[0].mxu0
        %v1270 = vadd.f32 0.0, %v1269
        %v1271 = vpop.f32.mrb[0].mxu0
        %v1272 = vpop.f32.mrb[0].mxu0
        %v1273 = vpop.f32.mrb[0].mxu0
        %1274 = vdwg.mxu0
        %v1276 = vsel %vm952, %v895, 0
        %v1279 = vsel %vm952, %v923, 0
        %1281 = vmatprep.subr.bf16.mxu0 0
        %1282 = vmatpush1.bf16.xpose.msra.mxu0 %v1279
        %1283 = vmatprep.subr.bf16.mxu0 0
        %1284 = vmatpush1.bf16.xpose.msra.mxu0 0
        %1285 = vmatprep.subr.bf16.mxu0 0
        %1286 = vmatpush1.bf16.xpose.msra.mxu0 0
        %1287 = vmatprep.subr.bf16.mxu0 0
        %1288 = vmatpush1.bf16.xpose.msra.mxu0 0
        %1289 = vmatprep.subr.bf16.mxu0 0
        %1290 = vmatpush1.bf16.xpose.msra.mxu0 0
        %1291 = vmatprep.subr.bf16.mxu0 0
        %1292 = vmatpush1.bf16.xpose.msra.mxu0 0
        %1293 = vmatprep.subr.bf16.mxu0 0
        %1294 = vmatpush1.bf16.xpose.msra.mxu0 0
        %1295 = vmatprep.subr.bf16.mxu0 0
        %1296 = vmatpush1.bf16.xpose.msra.mxu0 0
        %1297 = vmatprep.subr.bf16.mxu0 0
        %1298 = vmatpush1.bf16.xpose.msra.mxu0 0
        %1299 = vmatprep.subr.bf16.mxu0 0
        %1300 = vmatpush1.bf16.xpose.msra.mxu0 0
        %1301 = vmatprep.subr.bf16.mxu0 0
        %1302 = vmatpush1.bf16.xpose.msra.mxu0 0
        %1303 = vmatprep.subr.bf16.mxu0 0
        %1304 = vmatpush1.bf16.xpose.msra.mxu0 0
        %1305 = vmatprep.subr.bf16.mxu0 0
        %1306 = vmatpush1.bf16.xpose.msra.mxu0 0
        %1307 = vmatprep.subr.bf16.mxu0 0
        %1308 = vmatpush1.bf16.xpose.msra.mxu0 0
        %1309 = vmatprep.subr.bf16.mxu0 0
        %1310 = vmatpush1.bf16.xpose.msra.mxu0 0
        %1311 = vmatprep.subr.bf16.mxu0 0
        %1312 = vmatpush1.bf16.xpose.msra.mxu0 0
        %1313 = vmatprep.mubr.bf16.mxu0 0
        %1314 = vmatmul.mubr.bf16.gmra.mrb[0].mxu0 %v1276
        %v1315 = vpop.f32.mrb[0].mxu0
        %v1316 = vadd.f32 0.0, %v1315
        %v1317 = vpop.f32.mrb[0].mxu0
        %v1318 = vpop.f32.mrb[0].mxu0
        %v1319 = vpop.f32.mrb[0].mxu0
        %1320 = vdwg.mxu0
        %v1321 = vld [vmem:[%s587] sm:$0x1]
        %v1322 = vld [vmem:[%s587 + $0x1] sm:$0x1]
        %vm1323 = vcmp.gt.f32.partialorder %v1321, 0.0
        %vm1324 = vcmp.gt.f32.partialorder %v1322, 0.0
        %v1325 = vsel %vm1323, 0.0, -1e+09
        %v1326 = vsel %vm1324, 0.0, -1e+09
        %v1329 = vlaneseq
        %v1330 = vshrl.u32 %v1329, 7
        %v1331 = vsub.s32 0, %v1330
        %v1332 = vrot.slane %v1325, %v1331
        %v1333 = vlaneseq
        %v1334 = vshrl.u32 %v1333, 7
        %v1335 = vsub.s32 0, %v1334
        %v1336 = vrot.slane %v1326, %v1335
        %v1339 = vadd.f32 %v994, %v1332
        %v1340 = vadd.f32 %v1040, %v1336
        %v1341 = vadd.f32 %v1086, %v1332
        %v1342 = vadd.f32 %v1132, %v1336
        %v1343 = vadd.f32 %v1178, %v1332
        %v1344 = vadd.f32 %v1224, %v1336
        %v1345 = vadd.f32 %v1270, %v1332
        %v1346 = vadd.f32 %v1316, %v1336
        %vm1347 = vcmask 64512
        %v1348 = vsel %vm1347, %v1339, -inf
        %1349 = vmax.xlane.f32.xlu0 %v1348
        %v1350 = vpop.xlane.xlu0 %1349
        %v1351 = vsel %vm1347, %v1340, -inf
        %1352 = vmax.xlane.f32.xlu0 %v1351
        %v1353 = vpop.xlane.xlu0 %1352
        %v1354 = vsel %vm1347, %v1341, -inf
        %1355 = vmax.xlane.f32.xlu0 %v1354
        %v1356 = vpop.xlane.xlu0 %1355
        %v1357 = vsel %vm1347, %v1342, -inf
        %1358 = vmax.xlane.f32.xlu0 %v1357
        %v1359 = vpop.xlane.xlu0 %1358
        %v1360 = vsel %vm1347, %v1343, -inf
        %1361 = vmax.xlane.f32.xlu0 %v1360
        %v1362 = vpop.xlane.xlu0 %1361
        %v1363 = vsel %vm1347, %v1344, -inf
        %1364 = vmax.xlane.f32.xlu0 %v1363
        %v1365 = vpop.xlane.xlu0 %1364
        %v1366 = vsel %vm1347, %v1345, -inf
        %1367 = vmax.xlane.f32.xlu0 %v1366
        %v1368 = vpop.xlane.xlu0 %1367
        %v1369 = vsel %vm1347, %v1346, -inf
        %1370 = vmax.xlane.f32.xlu0 %v1369
        %v1371 = vpop.xlane.xlu0 %1370
        %v1372 = vsub.f32 %v1339, %v1350
        %v1373 = vsub.f32 %v1340, %v1353
        %v1374 = vsub.f32 %v1341, %v1356
        %v1375 = vsub.f32 %v1342, %v1359
        %v1376 = vsub.f32 %v1343, %v1362
        %v1377 = vsub.f32 %v1344, %v1365
        %v1378 = vsub.f32 %v1345, %v1368
        %v1379 = vsub.f32 %v1346, %v1371
        %v1380 = vmul.f32 %v1372, 1.442695
        %v1381 = vpow.pop %v1380
        %v1382 = vmul.f32 %v1373, 1.442695
        %v1383 = vpow.pop %v1382
        %v1384 = vmul.f32 %v1374, 1.442695
        %v1385 = vpow.pop %v1384
        %v1386 = vmul.f32 %v1375, 1.442695
        %v1387 = vpow.pop %v1386
        %v1388 = vmul.f32 %v1376, 1.442695
        %v1389 = vpow.pop %v1388
        %v1390 = vmul.f32 %v1377, 1.442695
        %v1391 = vpow.pop %v1390
        %v1392 = vmul.f32 %v1378, 1.442695
        %v1393 = vpow.pop %v1392
        %v1394 = vmul.f32 %v1379, 1.442695
        %v1395 = vpow.pop %v1394
        %v1396 = vsel %vm1347, %v1381, 0.0
        %1397 = vadd.xlane.f32.xlu0 %v1396
        %v1398 = vpop.xlane.xlu0 %1397
        %v1399 = vsel %vm1347, %v1383, 0.0
        %1400 = vadd.xlane.f32.xlu0 %v1399
        %v1401 = vpop.xlane.xlu0 %1400
        %v1402 = vsel %vm1347, %v1385, 0.0
        %1403 = vadd.xlane.f32.xlu0 %v1402
        %v1404 = vpop.xlane.xlu0 %1403
        %v1405 = vsel %vm1347, %v1387, 0.0
        %1406 = vadd.xlane.f32.xlu0 %v1405
        %v1407 = vpop.xlane.xlu0 %1406
        %v1408 = vsel %vm1347, %v1389, 0.0
        %1409 = vadd.xlane.f32.xlu0 %v1408
        %v1410 = vpop.xlane.xlu0 %1409
        %v1411 = vsel %vm1347, %v1391, 0.0
        %1412 = vadd.xlane.f32.xlu0 %v1411
        %v1413 = vpop.xlane.xlu0 %1412
        %v1414 = vsel %vm1347, %v1393, 0.0
        %1415 = vadd.xlane.f32.xlu0 %v1414
        %v1416 = vpop.xlane.xlu0 %1415
        %v1417 = vsel %vm1347, %v1395, 0.0
        %1418 = vadd.xlane.f32.xlu0 %v1417
        %v1419 = vpop.xlane.xlu0 %1418
        %v1420 = vrcp.pop %v1398
        %v1421 = vrcp.pop %v1401
        %v1422 = vrcp.pop %v1404
        %v1423 = vrcp.pop %v1407
        %v1424 = vrcp.pop %v1410
        %v1425 = vrcp.pop %v1413
        %v1426 = vrcp.pop %v1416
        %v1427 = vrcp.pop %v1419
        %v1428 = vmul.f32 %v1381, %v1420
        %v1429 = vmul.f32 %v1383, %v1421
        %v1430 = vmul.f32 %v1385, %v1422
        %v1431 = vmul.f32 %v1387, %v1423
        %v1432 = vmul.f32 %v1389, %v1424
        %v1433 = vmul.f32 %v1391, %v1425
        %v1434 = vmul.f32 %v1393, %v1426
        %v1435 = vmul.f32 %v1395, %v1427
        %v1436 = vpack.c.bf16 %v1428, %v1428
        %v1437 = vpack.c.bf16 %v1429, %v1429
        %v1438 = vpack.c.bf16 %v1430, %v1430
        %v1439 = vpack.c.bf16 %v1431, %v1431
        %v1440 = vpack.c.bf16 %v1432, %v1432
        %v1441 = vpack.c.bf16 %v1433, %v1433
        %v1442 = vpack.c.bf16 %v1434, %v1434
        %v1443 = vpack.c.bf16 %v1435, %v1435
        %v1445 = vsel %vm1347, %v1436, 0
        %vm1447 = vcmask 1043456
        %v1449 = vsel %vm1447, %v944, 0
        %1451 = vmatprep.subr.bf16.mxu0 0
        %1452 = vmatpush1.bf16.msra.mxu0 %v1449
        %1453 = vmatprep.subr.bf16.mxu0 0
        %1454 = vmatpush1.bf16.msra.mxu0 0
        %1455 = vmatprep.subr.bf16.mxu0 0
        %1456 = vmatpush1.bf16.msra.mxu0 0
        %1457 = vmatprep.subr.bf16.mxu0 0
        %1458 = vmatpush1.bf16.msra.mxu0 0
        %1459 = vmatprep.subr.bf16.mxu0 0
        %1460 = vmatpush1.bf16.msra.mxu0 0
        %1461 = vmatprep.subr.bf16.mxu0 0
        %1462 = vmatpush1.bf16.msra.mxu0 0
        %1463 = vmatprep.subr.bf16.mxu0 0
        %1464 = vmatpush1.bf16.msra.mxu0 0
        %1465 = vmatprep.subr.bf16.mxu0 0
        %1466 = vmatpush1.bf16.msra.mxu0 0
        %1467 = vmatprep.subr.bf16.mxu0 0
        %1468 = vmatpush1.bf16.msra.mxu0 0
        %1469 = vmatprep.subr.bf16.mxu0 0
        %1470 = vmatpush1.bf16.msra.mxu0 0
        %1471 = vmatprep.subr.bf16.mxu0 0
        %1472 = vmatpush1.bf16.msra.mxu0 0
        %1473 = vmatprep.subr.bf16.mxu0 0
        %1474 = vmatpush1.bf16.msra.mxu0 0
        %1475 = vmatprep.subr.bf16.mxu0 0
        %1476 = vmatpush1.bf16.msra.mxu0 0
        %1477 = vmatprep.subr.bf16.mxu0 0
        %1478 = vmatpush1.bf16.msra.mxu0 0
        %1479 = vmatprep.subr.bf16.mxu0 0
        %1480 = vmatpush1.bf16.msra.mxu0 0
        %1481 = vmatprep.subr.bf16.mxu0 0
        %1482 = vmatpush1.bf16.msra.mxu0 0
        %1483 = vmatprep.mubr.bf16.mxu0 0
        %1484 = vmatmul.mubr.bf16.gmra.mrb[0].mxu0 %v1445
        %v1485 = vpop.f32.mrb[0].mxu0
        %v1486 = vadd.f32 0.0, %v1485
        %v1487 = vpop.f32.mrb[0].mxu0
        %v1488 = vpop.f32.mrb[0].mxu0
        %v1489 = vpop.f32.mrb[0].mxu0
        %1490 = vdwg.mxu0
        %v1492 = vsel %vm1347, %v1437, 0
        %v1495 = vsel %vm1447, %v945, 0
        %1497 = vmatprep.subr.bf16.mxu0 0
        %1498 = vmatpush1.bf16.msra.mxu0 %v1495
        %1499 = vmatprep.subr.bf16.mxu0 0
        %1500 = vmatpush1.bf16.msra.mxu0 0
        %1501 = vmatprep.subr.bf16.mxu0 0
        %1502 = vmatpush1.bf16.msra.mxu0 0
        %1503 = vmatprep.subr.bf16.mxu0 0
        %1504 = vmatpush1.bf16.msra.mxu0 0
        %1505 = vmatprep.subr.bf16.mxu0 0
        %1506 = vmatpush1.bf16.msra.mxu0 0
        %1507 = vmatprep.subr.bf16.mxu0 0
        %1508 = vmatpush1.bf16.msra.mxu0 0
        %1509 = vmatprep.subr.bf16.mxu0 0
        %1510 = vmatpush1.bf16.msra.mxu0 0
        %1511 = vmatprep.subr.bf16.mxu0 0
        %1512 = vmatpush1.bf16.msra.mxu0 0
        %1513 = vmatprep.subr.bf16.mxu0 0
        %1514 = vmatpush1.bf16.msra.mxu0 0
        %1515 = vmatprep.subr.bf16.mxu0 0
        %1516 = vmatpush1.bf16.msra.mxu0 0
        %1517 = vmatprep.subr.bf16.mxu0 0
        %1518 = vmatpush1.bf16.msra.mxu0 0
        %1519 = vmatprep.subr.bf16.mxu0 0
        %1520 = vmatpush1.bf16.msra.mxu0 0
        %1521 = vmatprep.subr.bf16.mxu0 0
        %1522 = vmatpush1.bf16.msra.mxu0 0
        %1523 = vmatprep.subr.bf16.mxu0 0
        %1524 = vmatpush1.bf16.msra.mxu0 0
        %1525 = vmatprep.subr.bf16.mxu0 0
        %1526 = vmatpush1.bf16.msra.mxu0 0
        %1527 = vmatprep.subr.bf16.mxu0 0
        %1528 = vmatpush1.bf16.msra.mxu0 0
        %1529 = vmatprep.mubr.bf16.mxu0 0
        %1530 = vmatmul.mubr.bf16.gmra.mrb[0].mxu0 %v1492
        %v1531 = vpop.f32.mrb[0].mxu0
        %v1532 = vadd.f32 0.0, %v1531
        %v1533 = vpop.f32.mrb[0].mxu0
        %v1534 = vpop.f32.mrb[0].mxu0
        %v1535 = vpop.f32.mrb[0].mxu0
        %1536 = vdwg.mxu0
        %v1538 = vsel %vm1347, %v1438, 0
        %v1541 = vsel %vm1447, %v946, 0
        %1543 = vmatprep.subr.bf16.mxu0 0
        %1544 = vmatpush1.bf16.msra.mxu0 %v1541
        %1545 = vmatprep.subr.bf16.mxu0 0
        %1546 = vmatpush1.bf16.msra.mxu0 0
        %1547 = vmatprep.subr.bf16.mxu0 0
        %1548 = vmatpush1.bf16.msra.mxu0 0
        %1549 = vmatprep.subr.bf16.mxu0 0
        %1550 = vmatpush1.bf16.msra.mxu0 0
        %1551 = vmatprep.subr.bf16.mxu0 0
        %1552 = vmatpush1.bf16.msra.mxu0 0
        %1553 = vmatprep.subr.bf16.mxu0 0
        %1554 = vmatpush1.bf16.msra.mxu0 0
        %1555 = vmatprep.subr.bf16.mxu0 0
        %1556 = vmatpush1.bf16.msra.mxu0 0
        %1557 = vmatprep.subr.bf16.mxu0 0
        %1558 = vmatpush1.bf16.msra.mxu0 0
        %1559 = vmatprep.subr.bf16.mxu0 0
        %1560 = vmatpush1.bf16.msra.mxu0 0
        %1561 = vmatprep.subr.bf16.mxu0 0
        %1562 = vmatpush1.bf16.msra.mxu0 0
        %1563 = vmatprep.subr.bf16.mxu0 0
        %1564 = vmatpush1.bf16.msra.mxu0 0
        %1565 = vmatprep.subr.bf16.mxu0 0
        %1566 = vmatpush1.bf16.msra.mxu0 0
        %1567 = vmatprep.subr.bf16.mxu0 0
        %1568 = vmatpush1.bf16.msra.mxu0 0
        %1569 = vmatprep.subr.bf16.mxu0 0
        %1570 = vmatpush1.bf16.msra.mxu0 0
        %1571 = vmatprep.subr.bf16.mxu0 0
        %1572 = vmatpush1.bf16.msra.mxu0 0
        %1573 = vmatprep.subr.bf16.mxu0 0
        %1574 = vmatpush1.bf16.msra.mxu0 0
        %1575 = vmatprep.mubr.bf16.mxu0 0
        %1576 = vmatmul.mubr.bf16.gmra.mrb[0].mxu0 %v1538
        %v1577 = vpop.f32.mrb[0].mxu0
        %v1578 = vadd.f32 0.0, %v1577
        %v1579 = vpop.f32.mrb[0].mxu0
        %v1580 = vpop.f32.mrb[0].mxu0
        %v1581 = vpop.f32.mrb[0].mxu0
        %1582 = vdwg.mxu0
        %v1584 = vsel %vm1347, %v1439, 0
        %v1587 = vsel %vm1447, %v947, 0
        %1589 = vmatprep.subr.bf16.mxu0 0
        %1590 = vmatpush1.bf16.msra.mxu0 %v1587
        %1591 = vmatprep.subr.bf16.mxu0 0
        %1592 = vmatpush1.bf16.msra.mxu0 0
        %1593 = vmatprep.subr.bf16.mxu0 0
        %1594 = vmatpush1.bf16.msra.mxu0 0
        %1595 = vmatprep.subr.bf16.mxu0 0
        %1596 = vmatpush1.bf16.msra.mxu0 0
        %1597 = vmatprep.subr.bf16.mxu0 0
        %1598 = vmatpush1.bf16.msra.mxu0 0
        %1599 = vmatprep.subr.bf16.mxu0 0
        %1600 = vmatpush1.bf16.msra.mxu0 0
        %1601 = vmatprep.subr.bf16.mxu0 0
        %1602 = vmatpush1.bf16.msra.mxu0 0
        %1603 = vmatprep.subr.bf16.mxu0 0
        %1604 = vmatpush1.bf16.msra.mxu0 0
        %1605 = vmatprep.subr.bf16.mxu0 0
        %1606 = vmatpush1.bf16.msra.mxu0 0
        %1607 = vmatprep.subr.bf16.mxu0 0
        %1608 = vmatpush1.bf16.msra.mxu0 0
        %1609 = vmatprep.subr.bf16.mxu0 0
        %1610 = vmatpush1.bf16.msra.mxu0 0
        %1611 = vmatprep.subr.bf16.mxu0 0
        %1612 = vmatpush1.bf16.msra.mxu0 0
        %1613 = vmatprep.subr.bf16.mxu0 0
        %1614 = vmatpush1.bf16.msra.mxu0 0
        %1615 = vmatprep.subr.bf16.mxu0 0
        %1616 = vmatpush1.bf16.msra.mxu0 0
        %1617 = vmatprep.subr.bf16.mxu0 0
        %1618 = vmatpush1.bf16.msra.mxu0 0
        %1619 = vmatprep.subr.bf16.mxu0 0
        %1620 = vmatpush1.bf16.msra.mxu0 0
        %1621 = vmatprep.mubr.bf16.mxu0 0
        %1622 = vmatmul.mubr.bf16.gmra.mrb[0].mxu0 %v1584
        %v1623 = vpop.f32.mrb[0].mxu0
        %v1624 = vadd.f32 0.0, %v1623
        %v1625 = vpop.f32.mrb[0].mxu0
        %v1626 = vpop.f32.mrb[0].mxu0
        %v1627 = vpop.f32.mrb[0].mxu0
        %1628 = vdwg.mxu0
        %v1630 = vsel %vm1347, %v1440, 0
        %v1633 = vsel %vm1447, %v948, 0
        %1635 = vmatprep.subr.bf16.mxu0 0
        %1636 = vmatpush1.bf16.msra.mxu0 %v1633
        %1637 = vmatprep.subr.bf16.mxu0 0
        %1638 = vmatpush1.bf16.msra.mxu0 0
        %1639 = vmatprep.subr.bf16.mxu0 0
        %1640 = vmatpush1.bf16.msra.mxu0 0
        %1641 = vmatprep.subr.bf16.mxu0 0
        %1642 = vmatpush1.bf16.msra.mxu0 0
        %1643 = vmatprep.subr.bf16.mxu0 0
        %1644 = vmatpush1.bf16.msra.mxu0 0
        %1645 = vmatprep.subr.bf16.mxu0 0
        %1646 = vmatpush1.bf16.msra.mxu0 0
        %1647 = vmatprep.subr.bf16.mxu0 0
        %1648 = vmatpush1.bf16.msra.mxu0 0
        %1649 = vmatprep.subr.bf16.mxu0 0
        %1650 = vmatpush1.bf16.msra.mxu0 0
        %1651 = vmatprep.subr.bf16.mxu0 0
        %1652 = vmatpush1.bf16.msra.mxu0 0
        %1653 = vmatprep.subr.bf16.mxu0 0
        %1654 = vmatpush1.bf16.msra.mxu0 0
        %1655 = vmatprep.subr.bf16.mxu0 0
        %1656 = vmatpush1.bf16.msra.mxu0 0
        %1657 = vmatprep.subr.bf16.mxu0 0
        %1658 = vmatpush1.bf16.msra.mxu0 0
        %1659 = vmatprep.subr.bf16.mxu0 0
        %1660 = vmatpush1.bf16.msra.mxu0 0
        %1661 = vmatprep.subr.bf16.mxu0 0
        %1662 = vmatpush1.bf16.msra.mxu0 0
        %1663 = vmatprep.subr.bf16.mxu0 0
        %1664 = vmatpush1.bf16.msra.mxu0 0
        %1665 = vmatprep.subr.bf16.mxu0 0
        %1666 = vmatpush1.bf16.msra.mxu0 0
        %1667 = vmatprep.mubr.bf16.mxu0 0
        %1668 = vmatmul.mubr.bf16.gmra.mrb[0].mxu0 %v1630
        %v1669 = vpop.f32.mrb[0].mxu0
        %v1670 = vadd.f32 0.0, %v1669
        %v1671 = vpop.f32.mrb[0].mxu0
        %v1672 = vpop.f32.mrb[0].mxu0
        %v1673 = vpop.f32.mrb[0].mxu0
        %1674 = vdwg.mxu0
        %v1676 = vsel %vm1347, %v1441, 0
        %v1679 = vsel %vm1447, %v949, 0
        %1681 = vmatprep.subr.bf16.mxu0 0
        %1682 = vmatpush1.bf16.msra.mxu0 %v1679
        %1683 = vmatprep.subr.bf16.mxu0 0
        %1684 = vmatpush1.bf16.msra.mxu0 0
        %1685 = vmatprep.subr.bf16.mxu0 0
        %1686 = vmatpush1.bf16.msra.mxu0 0
        %1687 = vmatprep.subr.bf16.mxu0 0
        %1688 = vmatpush1.bf16.msra.mxu0 0
        %1689 = vmatprep.subr.bf16.mxu0 0
        %1690 = vmatpush1.bf16.msra.mxu0 0
        %1691 = vmatprep.subr.bf16.mxu0 0
        %1692 = vmatpush1.bf16.msra.mxu0 0
        %1693 = vmatprep.subr.bf16.mxu0 0
        %1694 = vmatpush1.bf16.msra.mxu0 0
        %1695 = vmatprep.subr.bf16.mxu0 0
        %1696 = vmatpush1.bf16.msra.mxu0 0
        %1697 = vmatprep.subr.bf16.mxu0 0
        %1698 = vmatpush1.bf16.msra.mxu0 0
        %1699 = vmatprep.subr.bf16.mxu0 0
        %1700 = vmatpush1.bf16.msra.mxu0 0
        %1701 = vmatprep.subr.bf16.mxu0 0
        %1702 = vmatpush1.bf16.msra.mxu0 0
        %1703 = vmatprep.subr.bf16.mxu0 0
        %1704 = vmatpush1.bf16.msra.mxu0 0
        %1705 = vmatprep.subr.bf16.mxu0 0
        %1706 = vmatpush1.bf16.msra.mxu0 0
        %1707 = vmatprep.subr.bf16.mxu0 0
        %1708 = vmatpush1.bf16.msra.mxu0 0
        %1709 = vmatprep.subr.bf16.mxu0 0
        %1710 = vmatpush1.bf16.msra.mxu0 0
        %1711 = vmatprep.subr.bf16.mxu0 0
        %1712 = vmatpush1.bf16.msra.mxu0 0
        %1713 = vmatprep.mubr.bf16.mxu0 0
        %1714 = vmatmul.mubr.bf16.gmra.mrb[0].mxu0 %v1676
        %v1715 = vpop.f32.mrb[0].mxu0
        %v1716 = vadd.f32 0.0, %v1715
        %v1717 = vpop.f32.mrb[0].mxu0
        %v1718 = vpop.f32.mrb[0].mxu0
        %v1719 = vpop.f32.mrb[0].mxu0
        %1720 = vdwg.mxu0
        %v1722 = vsel %vm1347, %v1442, 0
        %v1725 = vsel %vm1447, %v950, 0
        %1727 = vmatprep.subr.bf16.mxu0 0
        %1728 = vmatpush1.bf16.msra.mxu0 %v1725
        %1729 = vmatprep.subr.bf16.mxu0 0
        %1730 = vmatpush1.bf16.msra.mxu0 0
        %1731 = vmatprep.subr.bf16.mxu0 0
        %1732 = vmatpush1.bf16.msra.mxu0 0
        %1733 = vmatprep.subr.bf16.mxu0 0
        %1734 = vmatpush1.bf16.msra.mxu0 0
        %1735 = vmatprep.subr.bf16.mxu0 0
        %1736 = vmatpush1.bf16.msra.mxu0 0
        %1737 = vmatprep.subr.bf16.mxu0 0
        %1738 = vmatpush1.bf16.msra.mxu0 0
        %1739 = vmatprep.subr.bf16.mxu0 0
        %1740 = vmatpush1.bf16.msra.mxu0 0
        %1741 = vmatprep.subr.bf16.mxu0 0
        %1742 = vmatpush1.bf16.msra.mxu0 0
        %1743 = vmatprep.subr.bf16.mxu0 0
        %1744 = vmatpush1.bf16.msra.mxu0 0
        %1745 = vmatprep.subr.bf16.mxu0 0
        %1746 = vmatpush1.bf16.msra.mxu0 0
        %1747 = vmatprep.subr.bf16.mxu0 0
        %1748 = vmatpush1.bf16.msra.mxu0 0
        %1749 = vmatprep.subr.bf16.mxu0 0
        %1750 = vmatpush1.bf16.msra.mxu0 0
        %1751 = vmatprep.subr.bf16.mxu0 0
        %1752 = vmatpush1.bf16.msra.mxu0 0
        %1753 = vmatprep.subr.bf16.mxu0 0
        %1754 = vmatpush1.bf16.msra.mxu0 0
        %1755 = vmatprep.subr.bf16.mxu0 0
        %1756 = vmatpush1.bf16.msra.mxu0 0
        %1757 = vmatprep.subr.bf16.mxu0 0
        %1758 = vmatpush1.bf16.msra.mxu0 0
        %1759 = vmatprep.mubr.bf16.mxu0 0
        %1760 = vmatmul.mubr.bf16.gmra.mrb[0].mxu0 %v1722
        %v1761 = vpop.f32.mrb[0].mxu0
        %v1762 = vadd.f32 0.0, %v1761
        %v1763 = vpop.f32.mrb[0].mxu0
        %v1764 = vpop.f32.mrb[0].mxu0
        %v1765 = vpop.f32.mrb[0].mxu0
        %1766 = vdwg.mxu0
        %v1768 = vsel %vm1347, %v1443, 0
        %v1771 = vsel %vm1447, %v951, 0
        %1773 = vmatprep.subr.bf16.mxu0 0
        %1774 = vmatpush1.bf16.msra.mxu0 %v1771
        %1775 = vmatprep.subr.bf16.mxu0 0
        %1776 = vmatpush1.bf16.msra.mxu0 0
        %1777 = vmatprep.subr.bf16.mxu0 0
        %1778 = vmatpush1.bf16.msra.mxu0 0
        %1779 = vmatprep.subr.bf16.mxu0 0
        %1780 = vmatpush1.bf16.msra.mxu0 0
        %1781 = vmatprep.subr.bf16.mxu0 0
        %1782 = vmatpush1.bf16.msra.mxu0 0
        %1783 = vmatprep.subr.bf16.mxu0 0
        %1784 = vmatpush1.bf16.msra.mxu0 0
        %1785 = vmatprep.subr.bf16.mxu0 0
        %1786 = vmatpush1.bf16.msra.mxu0 0
        %1787 = vmatprep.subr.bf16.mxu0 0
        %1788 = vmatpush1.bf16.msra.mxu0 0
        %1789 = vmatprep.subr.bf16.mxu0 0
        %1790 = vmatpush1.bf16.msra.mxu0 0
        %1791 = vmatprep.subr.bf16.mxu0 0
        %1792 = vmatpush1.bf16.msra.mxu0 0
        %1793 = vmatprep.subr.bf16.mxu0 0
        %1794 = vmatpush1.bf16.msra.mxu0 0
        %1795 = vmatprep.subr.bf16.mxu0 0
        %1796 = vmatpush1.bf16.msra.mxu0 0
        %1797 = vmatprep.subr.bf16.mxu0 0
        %1798 = vmatpush1.bf16.msra.mxu0 0
        %1799 = vmatprep.subr.bf16.mxu0 0
        %1800 = vmatpush1.bf16.msra.mxu0 0
        %1801 = vmatprep.subr.bf16.mxu0 0
        %1802 = vmatpush1.bf16.msra.mxu0 0
        %1803 = vmatprep.subr.bf16.mxu0 0
        %1804 = vmatpush1.bf16.msra.mxu0 0
        %1805 = vmatprep.mubr.bf16.mxu0 0
        %1806 = vmatmul.mubr.bf16.gmra.mrb[0].mxu0 %v1768
        %v1807 = vpop.f32.mrb[0].mxu0
        %v1808 = vadd.f32 0.0, %v1807
        %v1809 = vpop.f32.mrb[0].mxu0
        %v1810 = vpop.f32.mrb[0].mxu0
        %v1811 = vpop.f32.mrb[0].mxu0
        %1812 = vdwg.mxu0
        %v1813 = vpack.c.bf16 %v1532, %v1486
        %v1814 = vld [vmem:[#allocation5] sm:$0xf]
        %v1815 = vld [vmem:[#allocation5 + $0x4] sm:$0xf]
        %v1816 = vld [vmem:[#allocation5 + $0x8] sm:$0xf]
        %v1817 = vld [vmem:[#allocation5 + $0xc] sm:$0xf]
        %v1818 = vpack.c.bf16 %v1624, %v1578
        %s1819 = scalar_lea.vmem [#allocation5], 16
        %v1820 = vld [vmem:[%s1819] sm:$0xf]
        %v1821 = vld [vmem:[%s1819 + $0x4] sm:$0xf]
        %v1822 = vld [vmem:[%s1819 + $0x8] sm:$0xf]
        %v1823 = vld [vmem:[%s1819 + $0xc] sm:$0xf]
        %v1828 = vunpack.c.l.b16 %v1820
        %v1829 = vunpack.c.l.b16 %v1821
        %v1830 = vunpack.c.l.b16 %v1822
        %v1831 = vunpack.c.l.b16 %v1823
        %v1832 = vpack.c.b16 %v1829, %v1828
        %v1833 = vpack.c.b16 %v1831, %v1830
        %v1837 = vsel %vm952, %v1818, 0
        %1839 = vmatprep.subr.bf16.mxu0 0
        %1840 = vmatpush1.bf16.msra.mxu0 %v1832
        %1841 = vmatprep.subr.bf16.mxu0 0
        %1842 = vmatpush1.bf16.msra.mxu0 %v1833
        %1843 = vmatprep.subr.bf16.mxu0 0
        %1844 = vmatpush1.bf16.msra.mxu0 0
        %1845 = vmatprep.subr.bf16.mxu0 0
        %1846 = vmatpush1.bf16.msra.mxu0 0
        %1847 = vmatprep.subr.bf16.mxu0 0
        %1848 = vmatpush1.bf16.msra.mxu0 0
        %1849 = vmatprep.subr.bf16.mxu0 0
        %1850 = vmatpush1.bf16.msra.mxu0 0
        %1851 = vmatprep.subr.bf16.mxu0 0
        %1852 = vmatpush1.bf16.msra.mxu0 0
        %1853 = vmatprep.subr.bf16.mxu0 0
        %1854 = vmatpush1.bf16.msra.mxu0 0
        %1855 = vmatprep.subr.bf16.mxu0 0
        %1856 = vmatpush1.bf16.msra.mxu0 0
        %1857 = vmatprep.subr.bf16.mxu0 0
        %1858 = vmatpush1.bf16.msra.mxu0 0
        %1859 = vmatprep.subr.bf16.mxu0 0
        %1860 = vmatpush1.bf16.msra.mxu0 0
        %1861 = vmatprep.subr.bf16.mxu0 0
        %1862 = vmatpush1.bf16.msra.mxu0 0
        %1863 = vmatprep.subr.bf16.mxu0 0
        %1864 = vmatpush1.bf16.msra.mxu0 0
        %1865 = vmatprep.subr.bf16.mxu0 0
        %1866 = vmatpush1.bf16.msra.mxu0 0
        %1867 = vmatprep.subr.bf16.mxu0 0
        %1868 = vmatpush1.bf16.msra.mxu0 0
        %1869 = vmatprep.subr.bf16.mxu0 0
        %1870 = vmatpush1.bf16.msra.mxu0 0
        %1871 = vmatprep.mubr.bf16.mxu0 0
        %1872 = vmatmul.mubr.bf16.gmra.mrb[0].mxu0 %v1837
        %v1873 = vpop.f32.mrb[0].mxu0
        %v1874 = vadd.f32 0.0, %v1873
        %v1875 = vpop.f32.mrb[0].mxu0
        %v1876 = vpop.f32.mrb[0].mxu0
        %v1877 = vadd.f32 0.0, %v1876
        %v1878 = vpop.f32.mrb[0].mxu0
        %1879 = vdwg.mxu0
        %v1884 = vunpack.c.l.b16 %v1814
        %v1885 = vunpack.c.l.b16 %v1815
        %v1886 = vunpack.c.l.b16 %v1816
        %v1887 = vunpack.c.l.b16 %v1817
        %v1888 = vpack.c.b16 %v1885, %v1884
        %v1889 = vpack.c.b16 %v1887, %v1886
        %v1893 = vsel %vm952, %v1813, 0
        %1895 = vmatprep.subr.bf16.mxu0 0
        %1896 = vmatpush1.bf16.msra.mxu0 %v1888
        %1897 = vmatprep.subr.bf16.mxu0 0
        %1898 = vmatpush1.bf16.msra.mxu0 %v1889
        %1899 = vmatprep.subr.bf16.mxu0 0
        %1900 = vmatpush1.bf16.msra.mxu0 0
        %1901 = vmatprep.subr.bf16.mxu0 0
        %1902 = vmatpush1.bf16.msra.mxu0 0
        %1903 = vmatprep.subr.bf16.mxu0 0
        %1904 = vmatpush1.bf16.msra.mxu0 0
        %1905 = vmatprep.subr.bf16.mxu0 0
        %1906 = vmatpush1.bf16.msra.mxu0 0
        %1907 = vmatprep.subr.bf16.mxu0 0
        %1908 = vmatpush1.bf16.msra.mxu0 0
        %1909 = vmatprep.subr.bf16.mxu0 0
        %1910 = vmatpush1.bf16.msra.mxu0 0
        %1911 = vmatprep.subr.bf16.mxu0 0
        %1912 = vmatpush1.bf16.msra.mxu0 0
        %1913 = vmatprep.subr.bf16.mxu0 0
        %1914 = vmatpush1.bf16.msra.mxu0 0
        %1915 = vmatprep.subr.bf16.mxu0 0
        %1916 = vmatpush1.bf16.msra.mxu0 0
        %1917 = vmatprep.subr.bf16.mxu0 0
        %1918 = vmatpush1.bf16.msra.mxu0 0
        %1919 = vmatprep.subr.bf16.mxu0 0
        %1920 = vmatpush1.bf16.msra.mxu0 0
        %1921 = vmatprep.subr.bf16.mxu0 0
        %1922 = vmatpush1.bf16.msra.mxu0 0
        %1923 = vmatprep.subr.bf16.mxu0 0
        %1924 = vmatpush1.bf16.msra.mxu0 0
        %1925 = vmatprep.subr.bf16.mxu0 0
        %1926 = vmatpush1.bf16.msra.mxu0 0
        %1927 = vmatprep.mubr.bf16.mxu0 0
        %1928 = vmatmul.mubr.bf16.gmra.mrb[0].mxu0 %v1893
        %v1929 = vpop.f32.mrb[0].mxu0
        %v1930 = vadd.f32 %v1874, %v1929
        %v1931 = vpop.f32.mrb[0].mxu0
        %v1932 = vpop.f32.mrb[0].mxu0
        %v1933 = vadd.f32 %v1877, %v1932
        %v1934 = vpop.f32.mrb[0].mxu0
        %1935 = vdwg.mxu0
        %v1936 = vpack.c.bf16 %v1716, %v1670
        %s1937 = scalar_lea.vmem [#allocation5], 32
        %v1938 = vld [vmem:[%s1937] sm:$0xf]
        %v1939 = vld [vmem:[%s1937 + $0x4] sm:$0xf]
        %v1940 = vld [vmem:[%s1937 + $0x8] sm:$0xf]
        %v1941 = vld [vmem:[%s1937 + $0xc] sm:$0xf]
        %v1946 = vunpack.c.l.b16 %v1938
        %v1947 = vunpack.c.l.b16 %v1939
        %v1948 = vunpack.c.l.b16 %v1940
        %v1949 = vunpack.c.l.b16 %v1941
        %v1950 = vpack.c.b16 %v1947, %v1946
        %v1951 = vpack.c.b16 %v1949, %v1948
        %v1955 = vsel %vm952, %v1936, 0
        %1957 = vmatprep.subr.bf16.mxu0 0
        %1958 = vmatpush1.bf16.msra.mxu0 %v1950
        %1959 = vmatprep.subr.bf16.mxu0 0
        %1960 = vmatpush1.bf16.msra.mxu0 %v1951
        %1961 = vmatprep.subr.bf16.mxu0 0
        %1962 = vmatpush1.bf16.msra.mxu0 0
        %1963 = vmatprep.subr.bf16.mxu0 0
        %1964 = vmatpush1.bf16.msra.mxu0 0
        %1965 = vmatprep.subr.bf16.mxu0 0
        %1966 = vmatpush1.bf16.msra.mxu0 0
        %1967 = vmatprep.subr.bf16.mxu0 0
        %1968 = vmatpush1.bf16.msra.mxu0 0
        %1969 = vmatprep.subr.bf16.mxu0 0
        %1970 = vmatpush1.bf16.msra.mxu0 0
        %1971 = vmatprep.subr.bf16.mxu0 0
        %1972 = vmatpush1.bf16.msra.mxu0 0
        %1973 = vmatprep.subr.bf16.mxu0 0
        %1974 = vmatpush1.bf16.msra.mxu0 0
        %1975 = vmatprep.subr.bf16.mxu0 0
        %1976 = vmatpush1.bf16.msra.mxu0 0
        %1977 = vmatprep.subr.bf16.mxu0 0
        %1978 = vmatpush1.bf16.msra.mxu0 0
        %1979 = vmatprep.subr.bf16.mxu0 0
        %1980 = vmatpush1.bf16.msra.mxu0 0
        %1981 = vmatprep.subr.bf16.mxu0 0
        %1982 = vmatpush1.bf16.msra.mxu0 0
        %1983 = vmatprep.subr.bf16.mxu0 0
        %1984 = vmatpush1.bf16.msra.mxu0 0
        %1985 = vmatprep.subr.bf16.mxu0 0
        %1986 = vmatpush1.bf16.msra.mxu0 0
        %1987 = vmatprep.subr.bf16.mxu0 0
        %1988 = vmatpush1.bf16.msra.mxu0 0
        %1989 = vmatprep.mubr.bf16.mxu0 0
        %1990 = vmatmul.mubr.bf16.gmra.mrb[0].mxu0 %v1955
        %v1991 = vpop.f32.mrb[0].mxu0
        %v1992 = vadd.f32 0.0, %v1991
        %v1993 = vpop.f32.mrb[0].mxu0
        %v1994 = vpop.f32.mrb[0].mxu0
        %v1995 = vadd.f32 0.0, %v1994
        %v1996 = vpop.f32.mrb[0].mxu0
        %1997 = vdwg.mxu0
        %v1998 = vadd.f32 %v1930, %v1992
        %v1999 = vadd.f32 %v1933, %v1995
        %v2000 = vpack.c.bf16 %v1808, %v1762
        %s2001 = scalar_lea.vmem [#allocation5], 48
        %v2002 = vld [vmem:[%s2001] sm:$0xf]
        %v2003 = vld [vmem:[%s2001 + $0x4] sm:$0xf]
        %v2004 = vld [vmem:[%s2001 + $0x8] sm:$0xf]
        %v2005 = vld [vmem:[%s2001 + $0xc] sm:$0xf]
        %v2010 = vunpack.c.l.b16 %v2002
        %v2011 = vunpack.c.l.b16 %v2003
        %v2012 = vunpack.c.l.b16 %v2004
        %v2013 = vunpack.c.l.b16 %v2005
        %v2014 = vpack.c.b16 %v2011, %v2010
        %v2015 = vpack.c.b16 %v2013, %v2012
        %v2019 = vsel %vm952, %v2000, 0
        %2021 = vmatprep.subr.bf16.mxu0 0
        %2022 = vmatpush1.bf16.msra.mxu0 %v2014
        %2023 = vmatprep.subr.bf16.mxu0 0
        %2024 = vmatpush1.bf16.msra.mxu0 %v2015
        %2025 = vmatprep.subr.bf16.mxu0 0
        %2026 = vmatpush1.bf16.msra.mxu0 0
        %2027 = vmatprep.subr.bf16.mxu0 0
        %2028 = vmatpush1.bf16.msra.mxu0 0
        %2029 = vmatprep.subr.bf16.mxu0 0
        %2030 = vmatpush1.bf16.msra.mxu0 0
        %2031 = vmatprep.subr.bf16.mxu0 0
        %2032 = vmatpush1.bf16.msra.mxu0 0
        %2033 = vmatprep.subr.bf16.mxu0 0
        %2034 = vmatpush1.bf16.msra.mxu0 0
        %2035 = vmatprep.subr.bf16.mxu0 0
        %2036 = vmatpush1.bf16.msra.mxu0 0
        %2037 = vmatprep.subr.bf16.mxu0 0
        %2038 = vmatpush1.bf16.msra.mxu0 0
        %2039 = vmatprep.subr.bf16.mxu0 0
        %2040 = vmatpush1.bf16.msra.mxu0 0
        %2041 = vmatprep.subr.bf16.mxu0 0
        %2042 = vmatpush1.bf16.msra.mxu0 0
        %2043 = vmatprep.subr.bf16.mxu0 0
        %2044 = vmatpush1.bf16.msra.mxu0 0
        %2045 = vmatprep.subr.bf16.mxu0 0
        %2046 = vmatpush1.bf16.msra.mxu0 0
        %2047 = vmatprep.subr.bf16.mxu0 0
        %2048 = vmatpush1.bf16.msra.mxu0 0
        %2049 = vmatprep.subr.bf16.mxu0 0
        %2050 = vmatpush1.bf16.msra.mxu0 0
        %2051 = vmatprep.subr.bf16.mxu0 0
        %2052 = vmatpush1.bf16.msra.mxu0 0
        %2053 = vmatprep.mubr.bf16.mxu0 0
        %2054 = vmatmul.mubr.bf16.gmra.mrb[0].mxu0 %v2019
        %v2055 = vpop.f32.mrb[0].mxu0
        %v2056 = vadd.f32 0.0, %v2055
        %v2057 = vpop.f32.mrb[0].mxu0
        %v2058 = vpop.f32.mrb[0].mxu0
        %v2059 = vadd.f32 0.0, %v2058
        %v2060 = vpop.f32.mrb[0].mxu0
        %2061 = vdwg.mxu0
        %v2062 = vadd.f32 %v1998, %v2056
        %v2063 = vadd.f32 %v1999, %v2059
        %v2064 = vld [vmem:[%s6] sm:$0x1]
        %v2066 = vlaneseq
        %v2067 = vshrl.u32 %v2066, 7
        %v2068 = vsub.s32 0, %v2067
        %v2069 = vrot.slane %v2064, %v2068
        %v2071 = vadd.f32 %v2062, %v2069
        %v2072 = vadd.f32 %v2063, %v2069
        %v2073 = vadd.f32 %v599, %v2071
        %v2074 = vadd.f32 %v600, %v2072
        %2075 = vadd.xlane.f32.xlu0 %v2073
        %v2076 = vpop.xlane.xlu0 %2075
        %2077 = vadd.xlane.f32.xlu0 %v2074
        %v2078 = vpop.xlane.xlu0 %2077
        %v2079 = vrcp.pop 128.0
        %v2080 = vmul.f32 %v2076, %v2079
        %v2081 = vmul.f32 %v2078, %v2079
        %v2082 = vsub.f32 %v2073, %v2080
        %v2083 = vsub.f32 %v2074, %v2081
        %v2084 = vmul.f32 %v2082, %v2082
        %v2085 = vmul.f32 %v2083, %v2083
        %2086 = vadd.xlane.f32.xlu0 %v2084
        %v2087 = vpop.xlane.xlu0 %2086
        %2088 = vadd.xlane.f32.xlu0 %v2085
        %v2089 = vpop.xlane.xlu0 %2088
        %v2090 = vmul.f32 %v2087, %v2079
        %v2091 = vmul.f32 %v2089, %v2079
        %v2092 = vadd.f32 %v2090, 1e-05
        %v2093 = vadd.f32 %v2091, 1e-05
        %v2094 = vrsqrt.pop %v2092
        %v2095 = vrsqrt.pop %v2093
        %v2096 = vmul.f32 %v2082, %v2094
        %v2097 = vmul.f32 %v2083, %v2095
        %v2098 = vld [vmem:[%s11] sm:$0x1]
        %v2100 = vlaneseq
        %v2101 = vshrl.u32 %v2100, 7
        %v2102 = vsub.s32 0, %v2101
        %v2103 = vrot.slane %v2098, %v2102
        %v2105 = vmul.f32 %v2096, %v2103
        %v2106 = vmul.f32 %v2097, %v2103
        %v2107 = vld [vmem:[%s12] sm:$0x1]
        %v2109 = vlaneseq
        %v2110 = vshrl.u32 %v2109, 7
        %v2111 = vsub.s32 0, %v2110
        %v2112 = vrot.slane %v2107, %v2111
        %v2114 = vadd.f32 %v2105, %v2112
        %v2115 = vadd.f32 %v2106, %v2112
        %v2116 = vpack.c.bf16 %v2115, %v2114
        %v2117 = vld [vmem:[#allocation7] sm:$0xff]
        %v2118 = vld [vmem:[#allocation7 + $0x8] sm:$0xff]
        %v2119 = vld [vmem:[#allocation7 + $0x10] sm:$0xff]
        %v2120 = vld [vmem:[#allocation7 + $0x18] sm:$0xff]
        %v2121 = vld [vmem:[#allocation7 + $0x20] sm:$0xff]
        %v2122 = vld [vmem:[#allocation7 + $0x28] sm:$0xff]
        %v2123 = vld [vmem:[#allocation7 + $0x30] sm:$0xff]
        %v2124 = vld [vmem:[#allocation7 + $0x38] sm:$0xff]
        %v2125 = vld [vmem:[#allocation7 + $0x40] sm:$0xff]
        %v2126 = vld [vmem:[#allocation7 + $0x48] sm:$0xff]
        %v2127 = vld [vmem:[#allocation7 + $0x50] sm:$0xff]
        %v2128 = vld [vmem:[#allocation7 + $0x58] sm:$0xff]
        %v2129 = vld [vmem:[#allocation7 + $0x60] sm:$0xff]
        %v2130 = vld [vmem:[#allocation7 + $0x68] sm:$0xff]
        %v2131 = vld [vmem:[#allocation7 + $0x70] sm:$0xff]
        %v2132 = vld [vmem:[#allocation7 + $0x78] sm:$0xff]
        %v2133 = vld [vmem:[%s8] sm:$0x3]
        %v2135 = vlaneseq
        %v2136 = vshrl.u32 %v2135, 7
        %v2137 = vsub.s32 0, %v2136
        %v2138 = vrot.slane %v2133, %v2137
        %v2139 = vlaneseq
        %v2140 = vshrl.u32 %v2139, 7
        %v2141 = vsub.s32 1, %v2140
        %v2142 = vrot.slane %v2133, %v2141
        %v2161 = vunpack.c.l.b16 %v2117
        %v2162 = vunpack.c.h.b16 %v2117
        %v2163 = vunpack.c.l.b16 %v2118
        %v2164 = vunpack.c.h.b16 %v2118
        %v2165 = vunpack.c.l.b16 %v2119
        %v2166 = vunpack.c.h.b16 %v2119
        %v2167 = vunpack.c.l.b16 %v2120
        %v2168 = vunpack.c.h.b16 %v2120
        %v2169 = vunpack.c.l.b16 %v2121
        %v2170 = vunpack.c.h.b16 %v2121
        %v2171 = vunpack.c.l.b16 %v2122
        %v2172 = vunpack.c.h.b16 %v2122
        %v2173 = vunpack.c.l.b16 %v2123
        %v2174 = vunpack.c.h.b16 %v2123
        %v2175 = vunpack.c.l.b16 %v2124
        %v2176 = vunpack.c.h.b16 %v2124
        %v2177 = vunpack.c.l.b16 %v2125
        %v2178 = vunpack.c.h.b16 %v2125
        %v2179 = vunpack.c.l.b16 %v2126
        %v2180 = vunpack.c.h.b16 %v2126
        %v2181 = vunpack.c.l.b16 %v2127
        %v2182 = vunpack.c.h.b16 %v2127
        %v2183 = vunpack.c.l.b16 %v2128
        %v2184 = vunpack.c.h.b16 %v2128
        %v2185 = vunpack.c.l.b16 %v2129
        %v2186 = vunpack.c.h.b16 %v2129
        %v2187 = vunpack.c.l.b16 %v2130
        %v2188 = vunpack.c.h.b16 %v2130
        %v2189 = vunpack.c.l.b16 %v2131
        %v2190 = vunpack.c.h.b16 %v2131
        %v2191 = vunpack.c.l.b16 %v2132
        %v2192 = vunpack.c.h.b16 %v2132
        %v2193 = vpack.c.b16 %v2163, %v2161
        %v2194 = vpack.c.b16 %v2164, %v2162
        %v2195 = vpack.c.b16 %v2167, %v2165
        %v2196 = vpack.c.b16 %v2168, %v2166
        %v2197 = vpack.c.b16 %v2171, %v2169
        %v2198 = vpack.c.b16 %v2172, %v2170
        %v2199 = vpack.c.b16 %v2175, %v2173
        %v2200 = vpack.c.b16 %v2176, %v2174
        %v2201 = vpack.c.b16 %v2179, %v2177
        %v2202 = vpack.c.b16 %v2180, %v2178
        %v2203 = vpack.c.b16 %v2183, %v2181
        %v2204 = vpack.c.b16 %v2184, %v2182
        %v2205 = vpack.c.b16 %v2187, %v2185
        %v2206 = vpack.c.b16 %v2188, %v2186
        %v2207 = vpack.c.b16 %v2191, %v2189
        %v2208 = vpack.c.b16 %v2192, %v2190
        %2225 = vmatprep.subr.bf16.mxu0 %v2194
        %2226 = vmatpush1.bf16.msra.mxu0 %v2193
        %2227 = vmatprep.subr.bf16.mxu0 %v2196
        %2228 = vmatpush1.bf16.msra.mxu0 %v2195
        %2229 = vmatprep.subr.bf16.mxu0 %v2198
        %2230 = vmatpush1.bf16.msra.mxu0 %v2197
        %2231 = vmatprep.subr.bf16.mxu0 %v2200
        %2232 = vmatpush1.bf16.msra.mxu0 %v2199
        %2233 = vmatprep.subr.bf16.mxu0 %v2202
        %2234 = vmatpush1.bf16.msra.mxu0 %v2201
        %2235 = vmatprep.subr.bf16.mxu0 %v2204
        %2236 = vmatpush1.bf16.msra.mxu0 %v2203
        %2237 = vmatprep.subr.bf16.mxu0 %v2206
        %2238 = vmatpush1.bf16.msra.mxu0 %v2205
        %2239 = vmatprep.subr.bf16.mxu0 %v2208
        %2240 = vmatpush1.bf16.msra.mxu0 %v2207
        %2241 = vmatprep.subr.bf16.mxu0 0
        %2242 = vmatpush1.bf16.msra.mxu0 0
        %2243 = vmatprep.subr.bf16.mxu0 0
        %2244 = vmatpush1.bf16.msra.mxu0 0
        %2245 = vmatprep.subr.bf16.mxu0 0
        %2246 = vmatpush1.bf16.msra.mxu0 0
        %2247 = vmatprep.subr.bf16.mxu0 0
        %2248 = vmatpush1.bf16.msra.mxu0 0
        %2249 = vmatprep.subr.bf16.mxu0 0
        %2250 = vmatpush1.bf16.msra.mxu0 0
        %2251 = vmatprep.subr.bf16.mxu0 0
        %2252 = vmatpush1.bf16.msra.mxu0 0
        %2253 = vmatprep.subr.bf16.mxu0 0
        %2254 = vmatpush1.bf16.msra.mxu0 0
        %2255 = vmatprep.subr.bf16.mxu0 0
        %2256 = vmatpush1.bf16.msra.mxu0 0
        %2257 = vmatprep.mubr.bf16.mxu0 0
        %2258 = vmatmul.mubr.bf16.gmra.mrb[0].mxu0 %v2116
        %v2259 = vpop.f32.mrb[0].mxu0
        %v2260 = vadd.f32 %v2138, %v2259
        %v2261 = vpop.f32.mrb[0].mxu0
        %v2262 = vadd.f32 %v2142, %v2261
        %v2263 = vpop.f32.mrb[0].mxu0
        %v2264 = vadd.f32 %v2138, %v2263
        %v2265 = vpop.f32.mrb[0].mxu0
        %v2266 = vadd.f32 %v2142, %v2265
        %2267 = vdwg.mxu0
        %v2268 = vmul.f32 %v2260, 0.5
        %v2269 = vmul.f32 %v2262, 0.5
        %v2270 = vmul.f32 %v2264, 0.5
        %v2271 = vmul.f32 %v2266, 0.5
        %v2272 = vmul.f32 %v2260, 0.70710677
        %v2273 = vmul.f32 %v2262, 0.70710677
        %v2274 = vmul.f32 %v2264, 0.70710677
        %v2275 = vmul.f32 %v2266, 0.70710677
        %v2276 = verf.f32.pop %v2272
        %v2277 = verf.f32.pop %v2273
        %v2278 = verf.f32.pop %v2274
        %v2279 = verf.f32.pop %v2275
        %v2280 = vadd.f32 %v2276, 1.0
        %v2281 = vadd.f32 %v2277, 1.0
        %v2282 = vadd.f32 %v2278, 1.0
        %v2283 = vadd.f32 %v2279, 1.0
        %v2284 = vmul.f32 %v2268, %v2280
        %v2285 = vmul.f32 %v2269, %v2281
        %v2286 = vmul.f32 %v2270, %v2282
        %v2287 = vmul.f32 %v2271, %v2283
        %v2288 = vpack.c.bf16 %v2286, %v2284
        %v2289 = vpack.c.bf16 %v2287, %v2285
        %v2290 = vld [vmem:[#allocation8] sm:$0xf]
        %v2291 = vld [vmem:[#allocation8 + $0x4] sm:$0xf]
        %v2292 = vld [vmem:[#allocation8 + $0x8] sm:$0xf]
        %v2293 = vld [vmem:[#allocation8 + $0xc] sm:$0xf]
        %v2294 = vld [vmem:[#allocation8 + $0x10] sm:$0xf]
        %v2295 = vld [vmem:[#allocation8 + $0x14] sm:$0xf]
        %v2296 = vld [vmem:[#allocation8 + $0x18] sm:$0xf]
        %v2297 = vld [vmem:[#allocation8 + $0x1c] sm:$0xf]
        %v2298 = vld [vmem:[#allocation8 + $0x20] sm:$0xf]
        %v2299 = vld [vmem:[#allocation8 + $0x24] sm:$0xf]
        %v2300 = vld [vmem:[#allocation8 + $0x28] sm:$0xf]
        %v2301 = vld [vmem:[#allocation8 + $0x2c] sm:$0xf]
        %v2302 = vld [vmem:[#allocation8 + $0x30] sm:$0xf]
        %v2303 = vld [vmem:[#allocation8 + $0x34] sm:$0xf]
        %v2304 = vld [vmem:[#allocation8 + $0x38] sm:$0xf]
        %v2305 = vld [vmem:[#allocation8 + $0x3c] sm:$0xf]
        %v2306 = vld [vmem:[#allocation8 + $0x40] sm:$0xf]
        %v2307 = vld [vmem:[#allocation8 + $0x44] sm:$0xf]
        %v2308 = vld [vmem:[#allocation8 + $0x48] sm:$0xf]
        %v2309 = vld [vmem:[#allocation8 + $0x4c] sm:$0xf]
        %v2310 = vld [vmem:[#allocation8 + $0x50] sm:$0xf]
        %v2311 = vld [vmem:[#allocation8 + $0x54] sm:$0xf]
        %v2312 = vld [vmem:[#allocation8 + $0x58] sm:$0xf]
        %v2313 = vld [vmem:[#allocation8 + $0x5c] sm:$0xf]
        %v2314 = vld [vmem:[#allocation8 + $0x60] sm:$0xf]
        %v2315 = vld [vmem:[#allocation8 + $0x64] sm:$0xf]
        %v2316 = vld [vmem:[#allocation8 + $0x68] sm:$0xf]
        %v2317 = vld [vmem:[#allocation8 + $0x6c] sm:$0xf]
        %v2318 = vld [vmem:[#allocation8 + $0x70] sm:$0xf]
        %v2319 = vld [vmem:[#allocation8 + $0x74] sm:$0xf]
        %v2320 = vld [vmem:[#allocation8 + $0x78] sm:$0xf]
        %v2321 = vld [vmem:[#allocation8 + $0x7c] sm:$0xf]
        %v2322 = vld [vmem:[%s10] sm:$0x1]
        %v2324 = vlaneseq
        %v2325 = vshrl.u32 %v2324, 7
        %v2326 = vsub.s32 0, %v2325
        %v2327 = vrot.slane %v2322, %v2326
        %v2361 = vunpack.c.l.b16 %v2290
        %v2362 = vunpack.c.l.b16 %v2291
        %v2363 = vunpack.c.l.b16 %v2292
        %v2364 = vunpack.c.l.b16 %v2293
        %v2365 = vunpack.c.l.b16 %v2294
        %v2366 = vunpack.c.l.b16 %v2295
        %v2367 = vunpack.c.l.b16 %v2296
        %v2368 = vunpack.c.l.b16 %v2297
        %v2369 = vunpack.c.l.b16 %v2298
        %v2370 = vunpack.c.l.b16 %v2299
        %v2371 = vunpack.c.l.b16 %v2300
        %v2372 = vunpack.c.l.b16 %v2301
        %v2373 = vunpack.c.l.b16 %v2302
        %v2374 = vunpack.c.l.b16 %v2303
        %v2375 = vunpack.c.l.b16 %v2304
        %v2376 = vunpack.c.l.b16 %v2305
        %v2377 = vunpack.c.l.b16 %v2306
        %v2378 = vunpack.c.l.b16 %v2307
        %v2379 = vunpack.c.l.b16 %v2308
        %v2380 = vunpack.c.l.b16 %v2309
        %v2381 = vunpack.c.l.b16 %v2310
        %v2382 = vunpack.c.l.b16 %v2311
        %v2383 = vunpack.c.l.b16 %v2312
        %v2384 = vunpack.c.l.b16 %v2313
        %v2385 = vunpack.c.l.b16 %v2314
        %v2386 = vunpack.c.l.b16 %v2315
        %v2387 = vunpack.c.l.b16 %v2316
        %v2388 = vunpack.c.l.b16 %v2317
        %v2389 = vunpack.c.l.b16 %v2318
        %v2390 = vunpack.c.l.b16 %v2319
        %v2391 = vunpack.c.l.b16 %v2320
        %v2392 = vunpack.c.l.b16 %v2321
        %v2393 = vpack.c.b16 %v2362, %v2361
        %v2394 = vpack.c.b16 %v2364, %v2363
        %v2395 = vpack.c.b16 %v2366, %v2365
        %v2396 = vpack.c.b16 %v2368, %v2367
        %v2397 = vpack.c.b16 %v2370, %v2369
        %v2398 = vpack.c.b16 %v2372, %v2371
        %v2399 = vpack.c.b16 %v2374, %v2373
        %v2400 = vpack.c.b16 %v2376, %v2375
        %v2401 = vpack.c.b16 %v2378, %v2377
        %v2402 = vpack.c.b16 %v2380, %v2379
        %v2403 = vpack.c.b16 %v2382, %v2381
        %v2404 = vpack.c.b16 %v2384, %v2383
        %v2405 = vpack.c.b16 %v2386, %v2385
        %v2406 = vpack.c.b16 %v2388, %v2387
        %v2407 = vpack.c.b16 %v2390, %v2389
        %v2408 = vpack.c.b16 %v2392, %v2391
        %2425 = vmatprep.subr.bf16.mxu0 0
        %2426 = vmatpush1.bf16.msra.mxu0 %v2393
        %2427 = vmatprep.subr.bf16.mxu0 0
        %2428 = vmatpush1.bf16.msra.mxu0 %v2394
        %2429 = vmatprep.subr.bf16.mxu0 0
        %2430 = vmatpush1.bf16.msra.mxu0 %v2395
        %2431 = vmatprep.subr.bf16.mxu0 0
        %2432 = vmatpush1.bf16.msra.mxu0 %v2396
        %2433 = vmatprep.subr.bf16.mxu0 0
        %2434 = vmatpush1.bf16.msra.mxu0 %v2397
        %2435 = vmatprep.subr.bf16.mxu0 0
        %2436 = vmatpush1.bf16.msra.mxu0 %v2398
        %2437 = vmatprep.subr.bf16.mxu0 0
        %2438 = vmatpush1.bf16.msra.mxu0 %v2399
        %2439 = vmatprep.subr.bf16.mxu0 0
        %2440 = vmatpush1.bf16.msra.mxu0 %v2400
        %2441 = vmatprep.subr.bf16.mxu0 0
        %2442 = vmatpush1.bf16.msra.mxu0 %v2401
        %2443 = vmatprep.subr.bf16.mxu0 0
        %2444 = vmatpush1.bf16.msra.mxu0 %v2402
        %2445 = vmatprep.subr.bf16.mxu0 0
        %2446 = vmatpush1.bf16.msra.mxu0 %v2403
        %2447 = vmatprep.subr.bf16.mxu0 0
        %2448 = vmatpush1.bf16.msra.mxu0 %v2404
        %2449 = vmatprep.subr.bf16.mxu0 0
        %2450 = vmatpush1.bf16.msra.mxu0 %v2405
        %2451 = vmatprep.subr.bf16.mxu0 0
        %2452 = vmatpush1.bf16.msra.mxu0 %v2406
        %2453 = vmatprep.subr.bf16.mxu0 0
        %2454 = vmatpush1.bf16.msra.mxu0 %v2407
        %2455 = vmatprep.subr.bf16.mxu0 0
        %2456 = vmatpush1.bf16.msra.mxu0 %v2408
        %2457 = vmatprep.mubr.bf16.mxu0 %v2289
        %2458 = vmatmul.mubr.bf16.gmra.mrb[0].mxu0 %v2288
        %v2459 = vpop.f32.mrb[0].mxu0
        %v2460 = vadd.f32 %v2327, %v2459
        %v2461 = vpop.f32.mrb[0].mxu0
        %v2462 = vpop.f32.mrb[0].mxu0
        %v2463 = vadd.f32 %v2327, %v2462
        %v2464 = vpop.f32.mrb[0].mxu0
        %2465 = vdwg.mxu0
        %v2466 = vadd.f32 %v2114, %v2460
        %v2467 = vadd.f32 %v2115, %v2463
        %2468 = vadd.xlane.f32.xlu0 %v2466
        %v2469 = vpop.xlane.xlu0 %2468
        %2470 = vadd.xlane.f32.xlu0 %v2467
        %v2471 = vpop.xlane.xlu0 %2470
        %v2472 = vmul.f32 %v2469, %v2079
        %v2473 = vmul.f32 %v2471, %v2079
        %v2474 = vsub.f32 %v2466, %v2472
        %v2475 = vsub.f32 %v2467, %v2473
        %v2476 = vmul.f32 %v2474, %v2474
        %v2477 = vmul.f32 %v2475, %v2475
        %2478 = vadd.xlane.f32.xlu0 %v2476
        %v2479 = vpop.xlane.xlu0 %2478
        %2480 = vadd.xlane.f32.xlu0 %v2477
        %v2481 = vpop.xlane.xlu0 %2480
        %v2482 = vmul.f32 %v2479, %v2079
        %v2483 = vmul.f32 %v2481, %v2079
        %v2484 = vadd.f32 %v2482, 1e-05
        %v2485 = vadd.f32 %v2483, 1e-05
        %v2486 = vrsqrt.pop %v2484
        %v2487 = vrsqrt.pop %v2485
        %v2488 = vmul.f32 %v2474, %v2486
        %v2489 = vmul.f32 %v2475, %v2487
        %v2490 = vld [vmem:[%s13] sm:$0x1]
        %v2492 = vlaneseq
        %v2493 = vshrl.u32 %v2492, 7
        %v2494 = vsub.s32 0, %v2493
        %v2495 = vrot.slane %v2490, %v2494
        %v2497 = vmul.f32 %v2488, %v2495
        %v2498 = vmul.f32 %v2489, %v2495
        %v2499 = vld [vmem:[%s14] sm:$0x1]
        %v2501 = vlaneseq
        %v2502 = vshrl.u32 %v2501, 7
        %v2503 = vsub.s32 0, %v2502
        %v2504 = vrot.slane %v2499, %v2503
        %v2506 = vadd.f32 %v2497, %v2504
        %v2507 = vadd.f32 %v2498, %v2504
        %v2508 = vpack.c.bf16 %v2506, %v2506
        %v2509 = vpack.c.bf16 %v2507, %v2507
        %2510 = vst [vmem:[%s577] sm:$0xf] %v2508
        %2511 = vst [vmem:[%s577 + $0x4] sm:$0xf] %v2509
        %s2512 = sand.u32 %s370, 1
        %s2513 = scalar_lea.sflag [#allocation4], %s2512
        %s2514 = sand.u32 %s370, 1
        %s2515 = smul.addr %s2514, 8
        %s2516 = scalar_lea.vmem [#allocation10], %s2515
        // Predicated region
        $region97: #{tpu_custom_call.1} parent=79 // pred_check
          %p2517 = pneg %p380
        $region98: #{tpu_custom_call.1} parent=79 // pred_check_branch
          %2519 = sbr.rel (%p2517) target = $region100
        $region99: #{tpu_custom_call.1} parent=79 // pred_region
          %s2520 = smul.u32 2, %s32
          %s2522 = ssub.s32 128, 128
          %2523 = vsyncadd %s2513, %s2522
          %s2524 = smul.addr %s2520, 64
          %s2525 = scalar_lea.hbm %s15, %s2524
          %s2526 = sshll.u32 %s2516, 4
          %s2527 = int_to_ptr.vmem [resolvable:$true] %s2526
          %2532 = dma.vmem_to_hbm [thread:$0]  %s2527, 128, %s2525, %s2513, 64, 64, 4
        $region100: #{tpu_custom_call.1} parent=79 // pred_fallthru
          _
      $region80: #{tpu_custom_call.1} parent=5 // pred_fallthru
        _
      %p2533 = scmp.le.s32.totalorder 2, %s27
      // Predicated region
      $region101: #{tpu_custom_call.1} parent=5 // pred_check
        %p2534 = pneg %p2533
      $region102: #{tpu_custom_call.1} parent=5 // pred_check_branch
        %2536 = sbr.rel (%p2534) target = $region104
      $region103: #{tpu_custom_call.1} parent=5 // pred_region
        %s2537 = ssub.s32 %s27, 2
        // Predicated region
        $region105: #{tpu_custom_call.1} parent=103 // pred_check
          %p2538 = pneg %p386
        $region106: #{tpu_custom_call.1} parent=103 // pred_check_branch
          %2540 = sbr.rel (%p2538) target = $region108
        $region107: #{tpu_custom_call.1} parent=103 // pred_region
          %s2541 = sand.u32 %s371, 1
          %s2542 = scalar_lea.sflag [#allocation4], %s2541
          %s2543 = sand.u32 %s371, 1
          %s2544 = smul.addr %s2543, 8
          %s2545 = scalar_lea.vmem [#allocation10], %s2544
          %2546 = dma.done %s2542, 128
        $region108: #{tpu_custom_call.1} parent=103 // pred_fallthru
          _
      $region104: #{tpu_custom_call.1} parent=5 // pred_fallthru
        _
    $region6: #{tpu_custom_call.1} parent=1 // loop_footer
      %s31 = sadd.s32 1, %s27
    $region7: #{tpu_custom_call.1} parent=1 // loop_footer_branch
      %26 = sbr.rel target = $region3
    $region8: #{tpu_custom_call.1} parent=1 // loop_exit
      _
    %2547 = vsyncpa [#allocation3], 1
    %s2548 = scalar_lea.sflag [#allocation3], 1
    %2549 = vsyncpa %s2548, 1
    %2550 = vsyncpa [#allocation6], 1
    %2551 = vsyncpa [#allocation9], 1
    %2552 = vsyncpa [#allocation4], 1
    %s2553 = scalar_lea.sflag [#allocation4], 1
    %2554 = vsyncpa %s2553, 1

</llo_original>
